<compile_context>
chip_gen: v6e
topology: v6e:2x2x1
jax: 0.10.0
libtpu: 0.0.40
codegen_flags: <defaults>
</compile_context>

<pallas_src>
import functools

import jax
import jax.numpy as jnp
from jax.experimental import pallas as pl
from jax.experimental.pallas import tpu as pltpu

# ---------------- static configuration (mirrors the PyTorch `args`) ----------------
B = 2                # batch size
H, W = 32, 4         # input spatial size forced by the net: 8*(H-12)*(W-3) = 160
L = 8                # latent_dim
Q = 32               # q_z_output_dim
KF = 3               # convFlow_kernel_size
NUM_FLOWS = 4        # cnn_layers of CNN_Flow
BN_EPS = 1e-5

# Dilation schedule of one Dilation_Block: 2**i while 2**i <= dim
DILATIONS = []
_i = 0
while 2 ** _i <= L:
    DILATIONS.append(2 ** _i)
    _i += 1
N_FLOW_LAYERS = NUM_FLOWS * len(DILATIONS)          # 16

H1 = H - 2           # 30 after Conv2d(1,32,(3,4))
H2 = H1 - 4          # 26 after Conv2d(32,16,(5,1))
H3 = H2 - 6          # 20 after Conv2d(16,8,(7,1))
FLAT = 8 * H3        # 160
D1 = H3 + 6          # 26 after ConvTranspose2d(8,16,(7,1))
D2 = D1 + 4          # 30 after ConvTranspose2d(16,32,(5,1))
D3 = D2 + 2          # 32 after ConvTranspose2d(32,1,(3,4))

# activation frame widths (lanes) inside the kernel
P1_W = 36            # conv1-patch / a1 width (>= H1 + 4 conv2 taps)
A2_W = 32            # a2 width              (>= H2 + 6 conv3 taps)
A3_W = 24            # a3 width              (>= H3)
ZF_W = 128           # flow frame width (one full vreg of lanes)
ZOFF = 32            # latent window [ZOFF, ZOFF+L) inside the flow frame

# conv1 patch tile layout (kernel input 0): rows 0-23 im2col patches (row = p*B+b),
# rows 24-25 = [y | eps] per sample, row 26 = ones (conv1 bias row), rows 27-31 zero.
P1_ROWS = 32
EY_ROW = 24
ONE_ROW = 26

# ---- single packed parameter blob (kernel input 1): (PB_ROWS, PB_W) f32 ----
# K-stacked (taps along contraction) conv / deconv weights, each with an 8-wide bias
# block appended; all row offsets are multiples of 8.
K1 = P1_ROWS                   # 32   conv1 contraction (patches + ey rows + bias rows)
K2 = 5 * B * 32 + 8            # 328  conv2 (5 taps)
K3 = 7 * B * 16 + 8            # 232  conv3 (7 taps)
KD1 = 7 * B * 8 + 8            # 120  deconv1 (7 taps)
KD2 = 5 * B * 16 + 8           # 168  deconv2 (5 taps)
KD3 = 3 * B * 32 + 8           # 200  deconv3 (3 taps)

W1_OFF = 0                     # (64,  K1)
W2_OFF = W1_OFF + B * 32       # (32,  K2)
W3_OFF = W2_OFF + B * 16       # (16,  K3)
D1_OFF = W3_OFF + B * 8        # (32,  KD1)
D2_OFF = D1_OFF + B * 16       # (64,  KD2)
D3_OFF = D2_OFF + B * 32       # (8,   KD3)
WD1_OFF = D3_OFF + 4 * B       # (160, Q)    dense1  (mult_bn1 + dnn_bn1 folded)
WQMV_OFF = WD1_OFF + FLAT      # (Q,  2L)    [q_z_mean | q_z_logvar]
WD3_OFF = WQMV_OFF + Q         # (L,   Q)    dense3  (dnn_bn3 folded)
WD4_OFF = WD3_OFF + L          # (Q, 160)    dense4  (dnn_bn4 folded, 161st col dropped)
MISC_OFF = WD4_OFF + Q         # (8, 160)    dense bias rows [c1 | wy | bqmv | c3 | c4]
FLOW_OFF = MISC_OFF + 8        # (128, ZF_W) per layer: [w0 w1 w2 bias lmbd_mask 0 0 0]
PB_ROWS = FLOW_OFF + 8 * N_FLOW_LAYERS     # 584
PB_W = K2                                   # 328 (widest fused contraction)

assert all(o % 8 == 0 for o in (W1_OFF, W2_OFF, W3_OFF, D1_OFF, D2_OFF, D3_OFF,
                                WD1_OFF, WQMV_OFF, WD3_OFF, WD4_OFF, MISC_OFF, FLOW_OFF))


def _vae_kernel(p1_ref, pb_ref, out_ref):
    dot = functools.partial(jnp.dot, preferred_element_type=jnp.float32)
    f32 = jnp.float32

    # 8-row [ones; zeros] block appended to every fused RHS: folds the per-row
    # (BN-folded) bias into the matmul through the matching bias column of the LHS.
    ones_blk = jnp.concatenate(
        [jnp.ones((1, A2_W), f32), jnp.zeros((7, A2_W), f32)], axis=0)

    # -------------------- encoder q_z_nn (rows = channel*B + b) --------------------
    # Conv2d(1,32,(3,4)) + BN + ReLU + bias: one matmul against wrapper-built patches.
    a1 = jnp.maximum(dot(pb_ref[W1_OFF:W1_OFF + B * 32, 0:K1], p1_ref[...]), 0.0)   # (64,36)

    # Conv2d(32,16,(5,1)) + BN + ReLU: all 5 taps K-stacked into ONE matmul.
    rhs = jnp.concatenate([a1[:, k:k + A2_W] for k in range(5)]
                          + [ones_blk[:, 0:A2_W]], axis=0)                          # (328,32)
    a2 = jnp.maximum(dot(pb_ref[W2_OFF:W2_OFF + B * 16, 0:K2], rhs), 0.0)           # (32,32)

    # Conv2d(16,8,(7,1)) + BN + ReLU: 7 taps K-stacked.
    rhs = jnp.concatenate([a2[:, k:k + A3_W] for k in range(7)]
                          + [ones_blk[:, 0:A3_W]], axis=0)                          # (232,24)
    a3 = jnp.maximum(dot(pb_ref[W3_OFF:W3_OFF + B * 8, 0:K3], rhs), 0.0)            # (16,24)

    # NCHW channel-major flatten for both samples at once -> (B, 160)
    flat = jnp.concatenate([a3[B * c:B * (c + 1), 0:H3] for c in range(8)], axis=1)

    ey = p1_ref[EY_ROW:EY_ROW + B, 0:1 + L]                                         # (B, 9)
    yv = ey[:, 0:1]
    eps = ey[:, 1:1 + L]

    misc = pb_ref[MISC_OFF:MISC_OFF + 8, 0:FLAT]                                    # (8,160)

    # mult_bn1 + dense1 + dnn_bn1 + relu (all folded into one affine matmul)
    h1 = jnp.maximum(dot(flat, pb_ref[WD1_OFF:WD1_OFF + FLAT, 0:Q])
                     + yv * misc[1:2, 0:Q] + misc[0:1, 0:Q], 0.0)                   # (B, Q)

    mulv = dot(h1, pb_ref[WQMV_OFF:WQMV_OFF + Q, 0:2 * L]) + misc[2:3, 0:2 * L]     # (B, 2L)
    mu = mulv[:, 0:L]
    lv = mulv[:, L:2 * L]

    # -------------------- reparameterize --------------------
    z0 = mu + eps * jnp.exp(0.5 * lv)                                               # (B, L)

    # -------------------- CNN_Flow (VPU/XLU only, reversal folded away) --------------------
    zfr = jnp.concatenate([jnp.zeros((B, ZOFF), f32), z0,
                           jnp.zeros((B, ZF_W - ZOFF - L), f32)], axis=1)           # (B, 128)
    layer = 0
    for blk in range(NUM_FLOWS):
        rev = (blk % 2) == 1          # odd blocks run in reversed coordinates
        for dil in DILATIONS:
            r0 = FLOW_OFF + 8 * layer
            fp = pb_ref[r0:r0 + 8, 0:ZF_W]            # rows: [w0 w1 w2 bias lmbd_mask ...]
            c = fp[3:4, :] + fp[0:1, :] * zfr
            for j in range(1, KF):
                # want c[:, n] = zfr[:, n +/- j*dil]; roll uses jnp.roll semantics.
                shift = (j * dil if rev else -j * dil) % ZF_W
                c = c + fp[j:j + 1, :] * pltpu.roll(zfr, shift=shift, axis=1)
            act = jnp.where(c >= 0.0, c, 0.01 * c)    # leaky_relu(0.01)
            zfr = zfr + fp[4:5, :] * act              # lmbd row is zero outside the window
            layer += 1
    zk = zfr[:, ZOFF:ZOFF + L]                                                      # (B, L)

    # -------------------- decoder --------------------
    h3 = jnp.maximum(dot(zk, pb_ref[WD3_OFF:WD3_OFF + L, 0:Q]) + misc[3:4, 0:Q], 0.0)
    h4 = jnp.maximum(dot(h3, pb_ref[WD4_OFF:WD4_OFF + Q, 0:FLAT])
                     + misc[4:5, 0:FLAT], 0.0)                                      # (B, 160)
    d0 = jnp.concatenate([h4[:, H3 * c:H3 * (c + 1)] for c in range(8)], axis=0)    # (16, 20)

    # ConvTranspose2d(8,16,(7,1)) + BN + ReLU  (padded conv, flipped taps, K-stacked)
    zpad6 = jnp.zeros((B * 8, 6), f32)
    pd1 = jnp.concatenate([zpad6, d0, zpad6], axis=1)                               # (16, 32)
    rhs = jnp.concatenate([pd1[:, j:j + D1] for j in range(7)]
                          + [ones_blk[:, 0:D1]], axis=0)                            # (120, 26)
    e1 = jnp.maximum(dot(pb_ref[D1_OFF:D1_OFF + B * 16, 0:KD1], rhs), 0.0)          # (32, 26)

    # ConvTranspose2d(16,32,(5,1)) + BN + ReLU
    zpad4 = jnp.zeros((B * 16, 4), f32)
    pd2 = jnp.concatenate([zpad4, e1, zpad4], axis=1)                               # (32, 34)
    rhs = jnp.concatenate([pd2[:, j:j + D2] for j in range(5)]
                          + [ones_blk[:, 0:D2]], axis=0)                            # (168, 30)
    e2 = jnp.maximum(dot(pb_ref[D2_OFF:D2_OFF + B * 32, 0:KD2], rhs), 0.0)          # (64, 30)

    # ConvTranspose2d(32,1,(3,4))   (W axis expands 1 -> 4; output rows = wo*B + b)
    zpad2 = jnp.zeros((B * 32, 2), f32)
    pd3 = jnp.concatenate([zpad2, e2, zpad2], axis=1)                               # (64, 34)
    rhs = jnp.concatenate([pd3[:, j:j + D3] for j in range(3)]
                          + [ones_blk[:, 0:D3]], axis=0)                            # (200, 32)
    xout = dot(pb_ref[D3_OFF:D3_OFF + 4 * B, 0:KD3], rhs)                           # (8, 32)

    # -------------------- single lane-dense (8,128) output --------------------
    stats = jnp.concatenate([mu, lv, z0, zk], axis=1)                               # (B, 4L)
    stats_blk = jnp.concatenate([stats, jnp.zeros((4 * B - B, 4 * L), f32)], axis=0)
    out_ref[...] = jnp.concatenate(
        [xout, stats_blk, jnp.zeros((4 * B, 128 - H - 4 * L), f32)], axis=1)        # (8, 128)


def _fold_bn(bn, bias=None):
    """Fold eval-mode BatchNorm (+ optional preceding bias) into scale/shift."""
    s = bn["gamma"] / jnp.sqrt(bn["var"] + BN_EPS)
    b0 = 0.0 if bias is None else bias
    t = bn["beta"] + s * (b0 - bn["mean"])
    return s, t


def pack_params(p):
    """Fold all BatchNorms and pack every parameter into ONE VMEM blob (run once)."""
    f32 = jnp.float32
    eye_b = jnp.eye(B, dtype=f32)
    kron = lambda m: jnp.kron(m, eye_b)      # channel-major batch interleave (rows = c*B + b)
    repc = lambda t: jnp.repeat(t, B)        # matching per-row bias expansion

    pb = jnp.zeros((PB_ROWS, PB_W), f32)

    def put(r0, c0, blk):
        return pb.at[r0:r0 + blk.shape[0], c0:c0 + blk.shape[1]].set(blk)

    # conv1: taps in cols 0:24, folded bias in the column matching the ones row of p1.
    s1, t1 = _fold_bn(p["bn_c1"], p["c1_b"])
    pb = put(W1_OFF, 0, kron(s1[:, None] * p["c1_w"].reshape(32, 12)))              # (64, 24)
    pb = pb.at[W1_OFF:W1_OFF + B * 32, ONE_ROW].set(repc(t1))

    # conv2 / conv3: taps K-stacked along the contraction, bias in the trailing 8-col block.
    s2, t2 = _fold_bn(p["bn_c2"], p["c2_b"])
    for k in range(5):
        pb = put(W2_OFF, B * 32 * k, kron(s2[:, None] * p["c2_w"][:, :, k, 0]))     # (32, 64)
    pb = pb.at[W2_OFF:W2_OFF + B * 16, 5 * B * 32].set(repc(t2))

    s3, t3 = _fold_bn(p["bn_c3"], p["c3_b"])
    for k in range(7):
        pb = put(W3_OFF, B * 16 * k, kron(s3[:, None] * p["c3_w"][:, :, k, 0]))     # (16, 32)
    pb = pb.at[W3_OFF:W3_OFF + B * 8, 7 * B * 16].set(repc(t3))

    # transposed convolutions (flipped taps, BN folded), same K-stacking.
    sd1, td1 = _fold_bn(p["bn_d1"], p["dc1_b"])
    for j in range(7):
        pb = put(D1_OFF, B * 8 * j, kron(sd1[:, None] * p["dc1_w"][:, :, 6 - j, 0].T))   # (32,16)
    pb = pb.at[D1_OFF:D1_OFF + B * 16, 7 * B * 8].set(repc(td1))

    sd2, td2 = _fold_bn(p["bn_d2"], p["dc2_b"])
    for j in range(5):
        pb = put(D2_OFF, B * 16 * j, kron(sd2[:, None] * p["dc2_w"][:, :, 4 - j, 0].T))  # (64,32)
    pb = pb.at[D2_OFF:D2_OFF + B * 32, 5 * B * 16].set(repc(td2))

    for j in range(3):
        pb = put(D3_OFF, B * 32 * j, kron(p["dc3_w"][:, 0, 2 - j, :].T))                 # (8, 64)
    pb = pb.at[D3_OFF:D3_OFF + 4 * B, 3 * B * 32].set(jnp.broadcast_to(p["dc3_b"], (4 * B,)))

    # dense1 (mult_bn1 + dnn_bn1 folded, PyTorch flatten order preserved)
    mbs, mbt = _fold_bn(p["mult_bn1"])
    sq, tq = _fold_bn(p["dnn_bn1"])
    a = p["d1_w"]                                                    # (Q, 161)
    wfull = (a * mbs[None, :]).T * sq[None, :]                       # (161, Q)
    c1eff = sq * (a @ mbt + p["d1_b"]) + tq                          # (Q,)
    pb = put(WD1_OFF, 0, wfull[:FLAT])

    wqmv = jnp.concatenate([p["qzm_w"].T, p["qzv_w"].T], axis=1)     # (Q, 2L)
    bqmv = jnp.concatenate([p["qzm_b"], p["qzv_b"]])                 # (2L,)
    pb = put(WQMV_OFF, 0, wqmv)

    s3d, c3eff = _fold_bn(p["dnn_bn3"], p["d3_b"])
    pb = put(WD3_OFF, 0, p["d3_w"].T * s3d[None, :])                 # (L, Q)

    s4d, t4 = _fold_bn(p["dnn_bn4"], p["d4_b"])
    pb = put(WD4_OFF, 0, p["d4_w"][:FLAT].T * s4d[None, :FLAT])      # (Q, 160) last col dropped

    # dense-stage bias / shift rows
    pb = pb.at[MISC_OFF + 0, 0:Q].set(c1eff)
    pb = pb.at[MISC_OFF + 1, 0:Q].set(wfull[FLAT])                   # y column of dense1
    pb = pb.at[MISC_OFF + 2, 0:2 * L].set(bqmv)
    pb = pb.at[MISC_OFF + 3, 0:Q].set(c3eff)
    pb = pb.at[MISC_OFF + 4, 0:FLAT].set(t4[:FLAT])

    # CNN_Flow: per layer an 8-row block [w0 w1 w2 bias lmbd_mask 0 0 0]; tap weights
    # and bias are pre-broadcast over the 128-lane frame, lmbd is zero outside the
    # active window and row-flipped for odd (reversed-coordinate) blocks.
    nd = len(DILATIONS)
    for layer in range(N_FLOW_LAYERS):
        r0 = FLOW_OFF + 8 * layer
        for j in range(KF):
            pb = pb.at[r0 + j, 0:ZF_W].set(jnp.full((ZF_W,), p["flow_w"][layer, j], f32))
        pb = pb.at[r0 + 3, 0:ZF_W].set(jnp.full((ZF_W,), p["flow_b"][layer, 0], f32))
        lrow = p["flow_lmbd"][layer]
        if (layer // nd) % 2 == 1:
            lrow = lrow[::-1]
        pb = pb.at[r0 + 4, ZOFF:ZOFF + L].set(lrow)
    return pb


@jax.jit
def conv_flow_vae_forward(x, y, eps, pb):
    """x: (B,1,32,4) NCHW, y: (B,1), eps: (B,L) std-normal noise, pb: pack_params(...)."""
    # conv1 im2col patches depend only on x -> built in XLA; rows = (kh*4+kw)*B + b.
    x_ = x[:, 0]                                                            # (B, 32, 4)
    patches = jnp.stack([x_[:, kh:kh + H1, kw] for kh in range(3) for kw in range(4)],
                        axis=0)                                             # (12, B, 30)
    p1 = jnp.pad(patches.reshape(12 * B, H1), ((0, 0), (0, P1_W - H1)))     # (24, 36)
    ey = jnp.pad(jnp.concatenate([y, eps], axis=1),
                 ((0, 0), (0, P1_W - (1 + L))))                             # (B, 36)
    ones_row = jnp.pad(jnp.ones((1, H1), jnp.float32), ((0, 0), (0, P1_W - H1)))
    p1_ext = jnp.concatenate(
        [p1, ey, ones_row,
         jnp.zeros((P1_ROWS - 12 * B - B - 1, P1_W), jnp.float32)], axis=0)  # (32, 36)

    vmem = pl.BlockSpec(memory_space=pltpu.MemorySpace.VMEM)
    out = pl.pallas_call(
        _vae_kernel,
        out_shape=jax.ShapeDtypeStruct((4 * B, 128), jnp.float32),
        in_specs=[vmem, vmem],
        out_specs=vmem,
    )(p1_ext, pb)

    # lanes 0:32 = decoded image (rows wo*B + b); rows 0:B lanes 32:64 = [mu|logvar|z0|zk]
    xdec_raw = out[:, 0:H]                                                   # (8, 32)
    stats = out[0:B, H:H + 4 * L]                                            # (B, 32)
    x_decoded = jnp.transpose(xdec_raw.reshape(4, B, H), (1, 2, 0))[:, None, :, :]  # (B,1,32,4)
    mu, lv = stats[:, 0:L], stats[:, L:2 * L]
    z0, zk = stats[:, 2 * L:3 * L], stats[:, 3 * L:4 * L]
    log_det_j = 0  # ConvFlowVAE.forward returns self.log_det_j which stays 0
    return x_decoded, mu, lv, log_det_j, z0, zk


def init_params(key):
    keys = iter(jax.random.split(key, 80))

    def nrm(shape, scale=0.1):
        return scale * jax.random.normal(next(keys), shape, dtype=jnp.float32)

    def bn(n):
        return dict(gamma=1.0 + nrm((n,)), beta=nrm((n,)), mean=nrm((n,)),
                    var=0.9 + 0.2 * jax.random.uniform(next(keys), (n,), dtype=jnp.float32))

    return dict(
        c1_w=nrm((32, 1, 3, 4)), c1_b=nrm((32,)), bn_c1=bn(32),
        c2_w=nrm((16, 32, 5, 1)), c2_b=nrm((16,)), bn_c2=bn(16),
        c3_w=nrm((8, 16, 7, 1)), c3_b=nrm((8,)), bn_c3=bn(8),
        mult_bn1=bn(161),
        d1_w=nrm((Q, 161)), d1_b=nrm((Q,)), dnn_bn1=bn(Q),
        qzm_w=nrm((L, Q)), qzm_b=nrm((L,)),
        qzv_w=nrm((L, Q)), qzv_b=nrm((L,)),
        flow_w=nrm((N_FLOW_LAYERS, KF)), flow_b=nrm((N_FLOW_LAYERS, 1)),
        flow_lmbd=nrm((N_FLOW_LAYERS, L)),
        d3_w=nrm((Q, L)), d3_b=nrm((Q,)), dnn_bn3=bn(Q),
        d4_w=nrm((161, Q)), d4_b=nrm((161,)), dnn_bn4=bn(161),
        dc1_w=nrm((8, 16, 7, 1)), dc1_b=nrm((16,)), bn_d1=bn(16),
        dc2_w=nrm((16, 32, 5, 1)), dc2_b=nrm((32,)), bn_d2=bn(32),
        dc3_w=nrm((32, 1, 3, 4)), dc3_b=nrm((1,)),
    )


if __name__ == "__main__":
    key = jax.random.PRNGKey(0)
    kx, ky, ke, kp = jax.random.split(key, 4)
    x = jax.random.normal(kx, (B, 1, H, W), dtype=jnp.float32)
    y = jax.random.normal(ky, (B, 1), dtype=jnp.float32)
    eps = jax.random.normal(ke, (B, L), dtype=jnp.float32)   # deterministic stand-in for randn_like
    params = init_params(kp)
    packed = pack_params(params)                              # one-time host-side packing/folding

    x_dec, z_mu, z_var, ldj, z_0, z_k = conv_flow_vae_forward(x, y, eps, packed)
    jax.block_until_ready((x_dec, z_mu, z_var, z_0, z_k))

    assert x_dec.shape == (B, 1, H, W)
    assert z_mu.shape == (B, L) and z_var.shape == (B, L)
    assert z_0.shape == (B, L) and z_k.shape == (B, L)
    assert all(bool(jnp.isfinite(a).all()) for a in (x_dec, z_mu, z_var, z_0, z_k))
    print("KERNEL_OK")
</pallas_src>

<mosaic_0001>
module attributes {stable_mosaic.version = 11 : i64} {
  func.func @_vae_kernel(%arg0: memref<32x36xf32, #tpu.memory_space<vmem>>, %arg1: memref<584x328xf32, #tpu.memory_space<vmem>>, %arg2: memref<8x128xf32, #tpu.memory_space<vmem>>) attributes {dimension_semantics = [], scalar_prefetch = 0 : i64, scratch_operands = 0 : i64, tpu.core_type = #tpu.core_type<tc>} {
    %cst = arith.constant 1.000000e+00 : f32
    %0 = vector.broadcast %cst : f32 to vector<1x32xf32>
    %cst_0 = arith.constant 0.000000e+00 : f32
    %1 = vector.broadcast %cst_0 : f32 to vector<7x32xf32>
    %2 = tpu.concatenate %0, %1 in 0 : vector<1x32xf32>, vector<7x32xf32> -> vector<8x32xf32>
    %c0 = arith.constant 0 : index
    %c0_1 = arith.constant 0 : index
    %3 = vector.load %arg1[%c0, %c0_1] : memref<584x328xf32, #tpu.memory_space<vmem>>, vector<64x32xf32>
    %c0_2 = arith.constant 0 : index
    %c0_3 = arith.constant 0 : index
    %4 = vector.load %arg0[%c0_2, %c0_3] : memref<32x36xf32, #tpu.memory_space<vmem>>, vector<32x36xf32>
    %cst_4 = arith.constant dense<0.000000e+00> : vector<64x36xf32>
    %5 = tpu.matmul %3, %4, %cst_4 {dimension_numbers = #tpu.dot_dimension_numbers<[1], [0], [0], [1], [0, 0, 1, 1], [], []>} : vector<64x32xf32>, vector<32x36xf32>, vector<64x36xf32> -> vector<64x36xf32>
    %cst_5 = arith.constant 0.000000e+00 : f32
    %6 = vector.broadcast %cst_5 : f32 to vector<64x36xf32>
    %7 = arith.maximumf %5, %6 : vector<64x36xf32>
    %8 = vector.extract_strided_slice %7 {offsets = [0, 0], sizes = [64, 32], strides = [1, 1]} : vector<64x36xf32> to vector<64x32xf32>
    %9 = vector.extract_strided_slice %7 {offsets = [0, 1], sizes = [64, 32], strides = [1, 1]} : vector<64x36xf32> to vector<64x32xf32>
    %10 = vector.extract_strided_slice %7 {offsets = [0, 2], sizes = [64, 32], strides = [1, 1]} : vector<64x36xf32> to vector<64x32xf32>
    %11 = vector.extract_strided_slice %7 {offsets = [0, 3], sizes = [64, 32], strides = [1, 1]} : vector<64x36xf32> to vector<64x32xf32>
    %12 = vector.extract_strided_slice %7 {offsets = [0, 4], sizes = [64, 32], strides = [1, 1]} : vector<64x36xf32> to vector<64x32xf32>
    %13 = tpu.concatenate %8, %9, %10, %11, %12, %2 in 0 : vector<64x32xf32>, vector<64x32xf32>, vector<64x32xf32>, vector<64x32xf32>, vector<64x32xf32>, vector<8x32xf32> -> vector<328x32xf32>
    %c64 = arith.constant 64 : index
    %c0_6 = arith.constant 0 : index
    %14 = vector.load %arg1[%c64, %c0_6] : memref<584x328xf32, #tpu.memory_space<vmem>>, vector<32x328xf32>
    %cst_7 = arith.constant dense<0.000000e+00> : vector<32x32xf32>
    %15 = tpu.matmul %14, %13, %cst_7 {dimension_numbers = #tpu.dot_dimension_numbers<[1], [0], [0], [1], [0, 0, 1, 1], [], []>} : vector<32x328xf32>, vector<328x32xf32>, vector<32x32xf32> -> vector<32x32xf32>
    %cst_8 = arith.constant 0.000000e+00 : f32
    %16 = vector.broadcast %cst_8 : f32 to vector<32x32xf32>
    %17 = arith.maximumf %15, %16 : vector<32x32xf32>
    %18 = vector.extract_strided_slice %17 {offsets = [0, 0], sizes = [32, 24], strides = [1, 1]} : vector<32x32xf32> to vector<32x24xf32>
    %19 = vector.extract_strided_slice %17 {offsets = [0, 1], sizes = [32, 24], strides = [1, 1]} : vector<32x32xf32> to vector<32x24xf32>
    %20 = vector.extract_strided_slice %17 {offsets = [0, 2], sizes = [32, 24], strides = [1, 1]} : vector<32x32xf32> to vector<32x24xf32>
    %21 = vector.extract_strided_slice %17 {offsets = [0, 3], sizes = [32, 24], strides = [1, 1]} : vector<32x32xf32> to vector<32x24xf32>
    %22 = vector.extract_strided_slice %17 {offsets = [0, 4], sizes = [32, 24], strides = [1, 1]} : vector<32x32xf32> to vector<32x24xf32>
    %23 = vector.extract_strided_slice %17 {offsets = [0, 5], sizes = [32, 24], strides = [1, 1]} : vector<32x32xf32> to vector<32x24xf32>
    %24 = vector.extract_strided_slice %17 {offsets = [0, 6], sizes = [32, 24], strides = [1, 1]} : vector<32x32xf32> to vector<32x24xf32>
    %25 = vector.extract_strided_slice %2 {offsets = [0, 0], sizes = [8, 24], strides = [1, 1]} : vector<8x32xf32> to vector<8x24xf32>
    %26 = tpu.concatenate %18, %19, %20, %21, %22, %23, %24, %25 in 0 : vector<32x24xf32>, vector<32x24xf32>, vector<32x24xf32>, vector<32x24xf32>, vector<32x24xf32>, vector<32x24xf32>, vector<32x24xf32>, vector<8x24xf32> -> vector<232x24xf32>
    %c96 = arith.constant 96 : index
    %c0_9 = arith.constant 0 : index
    %27 = vector.load %arg1[%c96, %c0_9] : memref<584x328xf32, #tpu.memory_space<vmem>>, vector<16x232xf32>
    %cst_10 = arith.constant dense<0.000000e+00> : vector<16x24xf32>
    %28 = tpu.matmul %27, %26, %cst_10 {dimension_numbers = #tpu.dot_dimension_numbers<[1], [0], [0], [1], [0, 0, 1, 1], [], []>} : vector<16x232xf32>, vector<232x24xf32>, vector<16x24xf32> -> vector<16x24xf32>
    %cst_11 = arith.constant 0.000000e+00 : f32
    %29 = vector.broadcast %cst_11 : f32 to vector<16x24xf32>
    %30 = arith.maximumf %28, %29 : vector<16x24xf32>
    %31 = vector.extract_strided_slice %30 {offsets = [0, 0], sizes = [2, 20], strides = [1, 1]} : vector<16x24xf32> to vector<2x20xf32>
    %32 = vector.extract_strided_slice %30 {offsets = [2, 0], sizes = [2, 20], strides = [1, 1]} : vector<16x24xf32> to vector<2x20xf32>
    %33 = vector.extract_strided_slice %30 {offsets = [4, 0], sizes = [2, 20], strides = [1, 1]} : vector<16x24xf32> to vector<2x20xf32>
    %34 = vector.extract_strided_slice %30 {offsets = [6, 0], sizes = [2, 20], strides = [1, 1]} : vector<16x24xf32> to vector<2x20xf32>
    %35 = vector.extract_strided_slice %30 {offsets = [8, 0], sizes = [2, 20], strides = [1, 1]} : vector<16x24xf32> to vector<2x20xf32>
    %36 = vector.extract_strided_slice %30 {offsets = [10, 0], sizes = [2, 20], strides = [1, 1]} : vector<16x24xf32> to vector<2x20xf32>
    %37 = vector.extract_strided_slice %30 {offsets = [12, 0], sizes = [2, 20], strides = [1, 1]} : vector<16x24xf32> to vector<2x20xf32>
    %38 = vector.extract_strided_slice %30 {offsets = [14, 0], sizes = [2, 20], strides = [1, 1]} : vector<16x24xf32> to vector<2x20xf32>
    %39 = tpu.concatenate %31, %32, %33, %34, %35, %36, %37, %38 in 1 : vector<2x20xf32>, vector<2x20xf32>, vector<2x20xf32>, vector<2x20xf32>, vector<2x20xf32>, vector<2x20xf32>, vector<2x20xf32>, vector<2x20xf32> -> vector<2x160xf32>
    %c24 = arith.constant 24 : index
    %c0_12 = arith.constant 0 : index
    %40 = vector.load %arg0[%c24, %c0_12] : memref<32x36xf32, #tpu.memory_space<vmem>>, vector<2x9xf32>
    %41 = vector.extract_strided_slice %40 {offsets = [0, 0], sizes = [2, 1], strides = [1, 1]} : vector<2x9xf32> to vector<2x1xf32>
    %42 = vector.extract_strided_slice %40 {offsets = [0, 1], sizes = [2, 8], strides = [1, 1]} : vector<2x9xf32> to vector<2x8xf32>
    %c448 = arith.constant 448 : index
    %c0_13 = arith.constant 0 : index
    %43 = vector.load %arg1[%c448, %c0_13] : memref<584x328xf32, #tpu.memory_space<vmem>>, vector<8x160xf32>
    %c216 = arith.constant 216 : index
    %c0_14 = arith.constant 0 : index
    %44 = vector.load %arg1[%c216, %c0_14] : memref<584x328xf32, #tpu.memory_space<vmem>>, vector<160x32xf32>
    %cst_15 = arith.constant dense<0.000000e+00> : vector<2x32xf32>
    %45 = tpu.matmul %39, %44, %cst_15 {dimension_numbers = #tpu.dot_dimension_numbers<[1], [0], [0], [1], [0, 0, 1, 1], [], []>} : vector<2x160xf32>, vector<160x32xf32>, vector<2x32xf32> -> vector<2x32xf32>
    %46 = vector.extract_strided_slice %43 {offsets = [1, 0], sizes = [1, 32], strides = [1, 1]} : vector<8x160xf32> to vector<1x32xf32>
    %47 = vector.broadcast %41 : vector<2x1xf32> to vector<2x32xf32>
    %48 = vector.broadcast %46 : vector<1x32xf32> to vector<2x32xf32>
    %49 = arith.mulf %47, %48 : vector<2x32xf32>
    %50 = arith.addf %45, %49 : vector<2x32xf32>
    %51 = vector.extract_strided_slice %43 {offsets = [0, 0], sizes = [1, 32], strides = [1, 1]} : vector<8x160xf32> to vector<1x32xf32>
    %52 = vector.broadcast %51 : vector<1x32xf32> to vector<2x32xf32>
    %53 = arith.addf %50, %52 : vector<2x32xf32>
    %cst_16 = arith.constant 0.000000e+00 : f32
    %54 = vector.broadcast %cst_16 : f32 to vector<2x32xf32>
    %55 = arith.maximumf %53, %54 : vector<2x32xf32>
    %c376 = arith.constant 376 : index
    %c0_17 = arith.constant 0 : index
    %56 = vector.load %arg1[%c376, %c0_17] : memref<584x328xf32, #tpu.memory_space<vmem>>, vector<32x16xf32>
    %cst_18 = arith.constant dense<0.000000e+00> : vector<2x16xf32>
    %57 = tpu.matmul %55, %56, %cst_18 {dimension_numbers = #tpu.dot_dimension_numbers<[1], [0], [0], [1], [0, 0, 1, 1], [], []>} : vector<2x32xf32>, vector<32x16xf32>, vector<2x16xf32> -> vector<2x16xf32>
    %58 = vector.extract_strided_slice %43 {offsets = [2, 0], sizes = [1, 16], strides = [1, 1]} : vector<8x160xf32> to vector<1x16xf32>
    %59 = vector.broadcast %58 : vector<1x16xf32> to vector<2x16xf32>
    %60 = arith.addf %57, %59 : vector<2x16xf32>
    %61 = vector.extract_strided_slice %60 {offsets = [0, 0], sizes = [2, 8], strides = [1, 1]} : vector<2x16xf32> to vector<2x8xf32>
    %62 = vector.extract_strided_slice %60 {offsets = [0, 8], sizes = [2, 8], strides = [1, 1]} : vector<2x16xf32> to vector<2x8xf32>
    %cst_19 = arith.constant 5.000000e-01 : f32
    %63 = vector.broadcast %cst_19 : f32 to vector<2x8xf32>
    %64 = arith.mulf %63, %62 : vector<2x8xf32>
    %65 = math.exp %64 : vector<2x8xf32>
    %66 = arith.mulf %42, %65 : vector<2x8xf32>
    %67 = arith.addf %61, %66 : vector<2x8xf32>
    %cst_20 = arith.constant 0.000000e+00 : f32
    %68 = vector.broadcast %cst_20 : f32 to vector<2x32xf32>
    %cst_21 = arith.constant 0.000000e+00 : f32
    %69 = vector.broadcast %cst_21 : f32 to vector<2x88xf32>
    %70 = tpu.concatenate %68, %67, %69 in 1 : vector<2x32xf32>, vector<2x8xf32>, vector<2x88xf32> -> vector<2x128xf32>
    %c456 = arith.constant 456 : index
    %c0_22 = arith.constant 0 : index
    %71 = vector.load %arg1[%c456, %c0_22] : memref<584x328xf32, #tpu.memory_space<vmem>>, vector<8x128xf32>
    %72 = vector.extract_strided_slice %71 {offsets = [3, 0], sizes = [1, 128], strides = [1, 1]} : vector<8x128xf32> to vector<1x128xf32>
    %73 = vector.extract_strided_slice %71 {offsets = [0, 0], sizes = [1, 128], strides = [1, 1]} : vector<8x128xf32> to vector<1x128xf32>
    %74 = vector.broadcast %73 : vector<1x128xf32> to vector<2x128xf32>
    %75 = arith.mulf %74, %70 : vector<2x128xf32>
    %76 = vector.broadcast %72 : vector<1x128xf32> to vector<2x128xf32>
    %77 = arith.addf %76, %75 : vector<2x128xf32>
    %78 = vector.extract_strided_slice %71 {offsets = [1, 0], sizes = [1, 128], strides = [1, 1]} : vector<8x128xf32> to vector<1x128xf32>
    %c127_i32 = arith.constant 127 : i32
    %79 = tpu.dynamic_rotate %70 by %c127_i32 dim 1 : vector<2x128xf32>, i32 -> vector<2x128xf32>
    %80 = vector.broadcast %78 : vector<1x128xf32> to vector<2x128xf32>
    %81 = arith.mulf %80, %79 : vector<2x128xf32>
    %82 = arith.addf %77, %81 : vector<2x128xf32>
    %83 = vector.extract_strided_slice %71 {offsets = [2, 0], sizes = [1, 128], strides = [1, 1]} : vector<8x128xf32> to vector<1x128xf32>
    %c126_i32 = arith.constant 126 : i32
    %84 = tpu.dynamic_rotate %70 by %c126_i32 dim 1 : vector<2x128xf32>, i32 -> vector<2x128xf32>
    %85 = vector.broadcast %83 : vector<1x128xf32> to vector<2x128xf32>
    %86 = arith.mulf %85, %84 : vector<2x128xf32>
    %87 = arith.addf %82, %86 : vector<2x128xf32>
    %cst_23 = arith.constant 0.000000e+00 : f32
    %88 = vector.broadcast %cst_23 : f32 to vector<2x128xf32>
    %89 = arith.cmpf oge, %87, %88 : vector<2x128xf32>
    %cst_24 = arith.constant 0.00999999977 : f32
    %90 = vector.broadcast %cst_24 : f32 to vector<2x128xf32>
    %91 = arith.mulf %90, %87 : vector<2x128xf32>
    %92 = arith.select %89, %87, %91 : vector<2x128xi1>, vector<2x128xf32>
    %93 = vector.extract_strided_slice %71 {offsets = [4, 0], sizes = [1, 128], strides = [1, 1]} : vector<8x128xf32> to vector<1x128xf32>
    %94 = vector.broadcast %93 : vector<1x128xf32> to vector<2x128xf32>
    %95 = arith.mulf %94, %92 : vector<2x128xf32>
    %96 = arith.addf %70, %95 : vector<2x128xf32>
    %c464 = arith.constant 464 : index
    %c0_25 = arith.constant 0 : index
    %97 = vector.load %arg1[%c464, %c0_25] : memref<584x328xf32, #tpu.memory_space<vmem>>, vector<8x128xf32>
    %98 = vector.extract_strided_slice %97 {offsets = [3, 0], sizes = [1, 128], strides = [1, 1]} : vector<8x128xf32> to vector<1x128xf32>
    %99 = vector.extract_strided_slice %97 {offsets = [0, 0], sizes = [1, 128], strides = [1, 1]} : vector<8x128xf32> to vector<1x128xf32>
    %100 = vector.broadcast %99 : vector<1x128xf32> to vector<2x128xf32>
    %101 = arith.mulf %100, %96 : vector<2x128xf32>
    %102 = vector.broadcast %98 : vector<1x128xf32> to vector<2x128xf32>
    %103 = arith.addf %102, %101 : vector<2x128xf32>
    %104 = vector.extract_strided_slice %97 {offsets = [1, 0], sizes = [1, 128], strides = [1, 1]} : vector<8x128xf32> to vector<1x128xf32>
    %c126_i32_26 = arith.constant 126 : i32
    %105 = tpu.dynamic_rotate %96 by %c126_i32_26 dim 1 : vector<2x128xf32>, i32 -> vector<2x128xf32>
    %106 = vector.broadcast %104 : vector<1x128xf32> to vector<2x128xf32>
    %107 = arith.mulf %106, %105 : vector<2x128xf32>
    %108 = arith.addf %103, %107 : vector<2x128xf32>
    %109 = vector.extract_strided_slice %97 {offsets = [2, 0], sizes = [1, 128], strides = [1, 1]} : vector<8x128xf32> to vector<1x128xf32>
    %c124_i32 = arith.constant 124 : i32
    %110 = tpu.dynamic_rotate %96 by %c124_i32 dim 1 : vector<2x128xf32>, i32 -> vector<2x128xf32>
    %111 = vector.broadcast %109 : vector<1x128xf32> to vector<2x128xf32>
    %112 = arith.mulf %111, %110 : vector<2x128xf32>
    %113 = arith.addf %108, %112 : vector<2x128xf32>
    %cst_27 = arith.constant 0.000000e+00 : f32
    %114 = vector.broadcast %cst_27 : f32 to vector<2x128xf32>
    %115 = arith.cmpf oge, %113, %114 : vector<2x128xf32>
    %cst_28 = arith.constant 0.00999999977 : f32
    %116 = vector.broadcast %cst_28 : f32 to vector<2x128xf32>
    %117 = arith.mulf %116, %113 : vector<2x128xf32>
    %118 = arith.select %115, %113, %117 : vector<2x128xi1>, vector<2x128xf32>
    %119 = vector.extract_strided_slice %97 {offsets = [4, 0], sizes = [1, 128], strides = [1, 1]} : vector<8x128xf32> to vector<1x128xf32>
    %120 = vector.broadcast %119 : vector<1x128xf32> to vector<2x128xf32>
    %121 = arith.mulf %120, %118 : vector<2x128xf32>
    %122 = arith.addf %96, %121 : vector<2x128xf32>
    %c472 = arith.constant 472 : index
    %c0_29 = arith.constant 0 : index
    %123 = vector.load %arg1[%c472, %c0_29] : memref<584x328xf32, #tpu.memory_space<vmem>>, vector<8x128xf32>
    %124 = vector.extract_strided_slice %123 {offsets = [3, 0], sizes = [1, 128], strides = [1, 1]} : vector<8x128xf32> to vector<1x128xf32>
    %125 = vector.extract_strided_slice %123 {offsets = [0, 0], sizes = [1, 128], strides = [1, 1]} : vector<8x128xf32> to vector<1x128xf32>
    %126 = vector.broadcast %125 : vector<1x128xf32> to vector<2x128xf32>
    %127 = arith.mulf %126, %122 : vector<2x128xf32>
    %128 = vector.broadcast %124 : vector<1x128xf32> to vector<2x128xf32>
    %129 = arith.addf %128, %127 : vector<2x128xf32>
    %130 = vector.extract_strided_slice %123 {offsets = [1, 0], sizes = [1, 128], strides = [1, 1]} : vector<8x128xf32> to vector<1x128xf32>
    %c124_i32_30 = arith.constant 124 : i32
    %131 = tpu.dynamic_rotate %122 by %c124_i32_30 dim 1 : vector<2x128xf32>, i32 -> vector<2x128xf32>
    %132 = vector.broadcast %130 : vector<1x128xf32> to vector<2x128xf32>
    %133 = arith.mulf %132, %131 : vector<2x128xf32>
    %134 = arith.addf %129, %133 : vector<2x128xf32>
    %135 = vector.extract_strided_slice %123 {offsets = [2, 0], sizes = [1, 128], strides = [1, 1]} : vector<8x128xf32> to vector<1x128xf32>
    %c120_i32 = arith.constant 120 : i32
    %136 = tpu.dynamic_rotate %122 by %c120_i32 dim 1 : vector<2x128xf32>, i32 -> vector<2x128xf32>
    %137 = vector.broadcast %135 : vector<1x128xf32> to vector<2x128xf32>
    %138 = arith.mulf %137, %136 : vector<2x128xf32>
    %139 = arith.addf %134, %138 : vector<2x128xf32>
    %cst_31 = arith.constant 0.000000e+00 : f32
    %140 = vector.broadcast %cst_31 : f32 to vector<2x128xf32>
    %141 = arith.cmpf oge, %139, %140 : vector<2x128xf32>
    %cst_32 = arith.constant 0.00999999977 : f32
    %142 = vector.broadcast %cst_32 : f32 to vector<2x128xf32>
    %143 = arith.mulf %142, %139 : vector<2x128xf32>
    %144 = arith.select %141, %139, %143 : vector<2x128xi1>, vector<2x128xf32>
    %145 = vector.extract_strided_slice %123 {offsets = [4, 0], sizes = [1, 128], strides = [1, 1]} : vector<8x128xf32> to vector<1x128xf32>
    %146 = vector.broadcast %145 : vector<1x128xf32> to vector<2x128xf32>
    %147 = arith.mulf %146, %144 : vector<2x128xf32>
    %148 = arith.addf %122, %147 : vector<2x128xf32>
    %c480 = arith.constant 480 : index
    %c0_33 = arith.constant 0 : index
    %149 = vector.load %arg1[%c480, %c0_33] : memref<584x328xf32, #tpu.memory_space<vmem>>, vector<8x128xf32>
    %150 = vector.extract_strided_slice %149 {offsets = [3, 0], sizes = [1, 128], strides = [1, 1]} : vector<8x128xf32> to vector<1x128xf32>
    %151 = vector.extract_strided_slice %149 {offsets = [0, 0], sizes = [1, 128], strides = [1, 1]} : vector<8x128xf32> to vector<1x128xf32>
    %152 = vector.broadcast %151 : vector<1x128xf32> to vector<2x128xf32>
    %153 = arith.mulf %152, %148 : vector<2x128xf32>
    %154 = vector.broadcast %150 : vector<1x128xf32> to vector<2x128xf32>
    %155 = arith.addf %154, %153 : vector<2x128xf32>
    %156 = vector.extract_strided_slice %149 {offsets = [1, 0], sizes = [1, 128], strides = [1, 1]} : vector<8x128xf32> to vector<1x128xf32>
    %c120_i32_34 = arith.constant 120 : i32
    %157 = tpu.dynamic_rotate %148 by %c120_i32_34 dim 1 : vector<2x128xf32>, i32 -> vector<2x128xf32>
    %158 = vector.broadcast %156 : vector<1x128xf32> to vector<2x128xf32>
    %159 = arith.mulf %158, %157 : vector<2x128xf32>
    %160 = arith.addf %155, %159 : vector<2x128xf32>
    %161 = vector.extract_strided_slice %149 {offsets = [2, 0], sizes = [1, 128], strides = [1, 1]} : vector<8x128xf32> to vector<1x128xf32>
    %c112_i32 = arith.constant 112 : i32
    %162 = tpu.dynamic_rotate %148 by %c112_i32 dim 1 : vector<2x128xf32>, i32 -> vector<2x128xf32>
    %163 = vector.broadcast %161 : vector<1x128xf32> to vector<2x128xf32>
    %164 = arith.mulf %163, %162 : vector<2x128xf32>
    %165 = arith.addf %160, %164 : vector<2x128xf32>
    %cst_35 = arith.constant 0.000000e+00 : f32
    %166 = vector.broadcast %cst_35 : f32 to vector<2x128xf32>
    %167 = arith.cmpf oge, %165, %166 : vector<2x128xf32>
    %cst_36 = arith.constant 0.00999999977 : f32
    %168 = vector.broadcast %cst_36 : f32 to vector<2x128xf32>
    %169 = arith.mulf %168, %165 : vector<2x128xf32>
    %170 = arith.select %167, %165, %169 : vector<2x128xi1>, vector<2x128xf32>
    %171 = vector.extract_strided_slice %149 {offsets = [4, 0], sizes = [1, 128], strides = [1, 1]} : vector<8x128xf32> to vector<1x128xf32>
    %172 = vector.broadcast %171 : vector<1x128xf32> to vector<2x128xf32>
    %173 = arith.mulf %172, %170 : vector<2x128xf32>
    %174 = arith.addf %148, %173 : vector<2x128xf32>
    %c488 = arith.constant 488 : index
    %c0_37 = arith.constant 0 : index
    %175 = vector.load %arg1[%c488, %c0_37] : memref<584x328xf32, #tpu.memory_space<vmem>>, vector<8x128xf32>
    %176 = vector.extract_strided_slice %175 {offsets = [3, 0], sizes = [1, 128], strides = [1, 1]} : vector<8x128xf32> to vector<1x128xf32>
    %177 = vector.extract_strided_slice %175 {offsets = [0, 0], sizes = [1, 128], strides = [1, 1]} : vector<8x128xf32> to vector<1x128xf32>
    %178 = vector.broadcast %177 : vector<1x128xf32> to vector<2x128xf32>
    %179 = arith.mulf %178, %174 : vector<2x128xf32>
    %180 = vector.broadcast %176 : vector<1x128xf32> to vector<2x128xf32>
    %181 = arith.addf %180, %179 : vector<2x128xf32>
    %182 = vector.extract_strided_slice %175 {offsets = [1, 0], sizes = [1, 128], strides = [1, 1]} : vector<8x128xf32> to vector<1x128xf32>
    %c1_i32 = arith.constant 1 : i32
    %183 = tpu.dynamic_rotate %174 by %c1_i32 dim 1 : vector<2x128xf32>, i32 -> vector<2x128xf32>
    %184 = vector.broadcast %182 : vector<1x128xf32> to vector<2x128xf32>
    %185 = arith.mulf %184, %183 : vector<2x128xf32>
    %186 = arith.addf %181, %185 : vector<2x128xf32>
    %187 = vector.extract_strided_slice %175 {offsets = [2, 0], sizes = [1, 128], strides = [1, 1]} : vector<8x128xf32> to vector<1x128xf32>
    %c2_i32 = arith.constant 2 : i32
    %188 = tpu.dynamic_rotate %174 by %c2_i32 dim 1 : vector<2x128xf32>, i32 -> vector<2x128xf32>
    %189 = vector.broadcast %187 : vector<1x128xf32> to vector<2x128xf32>
    %190 = arith.mulf %189, %188 : vector<2x128xf32>
    %191 = arith.addf %186, %190 : vector<2x128xf32>
    %cst_38 = arith.constant 0.000000e+00 : f32
    %192 = vector.broadcast %cst_38 : f32 to vector<2x128xf32>
    %193 = arith.cmpf oge, %191, %192 : vector<2x128xf32>
    %cst_39 = arith.constant 0.00999999977 : f32
    %194 = vector.broadcast %cst_39 : f32 to vector<2x128xf32>
    %195 = arith.mulf %194, %191 : vector<2x128xf32>
    %196 = arith.select %193, %191, %195 : vector<2x128xi1>, vector<2x128xf32>
    %197 = vector.extract_strided_slice %175 {offsets = [4, 0], sizes = [1, 128], strides = [1, 1]} : vector<8x128xf32> to vector<1x128xf32>
    %198 = vector.broadcast %197 : vector<1x128xf32> to vector<2x128xf32>
    %199 = arith.mulf %198, %196 : vector<2x128xf32>
    %200 = arith.addf %174, %199 : vector<2x128xf32>
    %c496 = arith.constant 496 : index
    %c0_40 = arith.constant 0 : index
    %201 = vector.load %arg1[%c496, %c0_40] : memref<584x328xf32, #tpu.memory_space<vmem>>, vector<8x128xf32>
    %202 = vector.extract_strided_slice %201 {offsets = [3, 0], sizes = [1, 128], strides = [1, 1]} : vector<8x128xf32> to vector<1x128xf32>
    %203 = vector.extract_strided_slice %201 {offsets = [0, 0], sizes = [1, 128], strides = [1, 1]} : vector<8x128xf32> to vector<1x128xf32>
    %204 = vector.broadcast %203 : vector<1x128xf32> to vector<2x128xf32>
    %205 = arith.mulf %204, %200 : vector<2x128xf32>
    %206 = vector.broadcast %202 : vector<1x128xf32> to vector<2x128xf32>
    %207 = arith.addf %206, %205 : vector<2x128xf32>
    %208 = vector.extract_strided_slice %201 {offsets = [1, 0], sizes = [1, 128], strides = [1, 1]} : vector<8x128xf32> to vector<1x128xf32>
    %c2_i32_41 = arith.constant 2 : i32
    %209 = tpu.dynamic_rotate %200 by %c2_i32_41 dim 1 : vector<2x128xf32>, i32 -> vector<2x128xf32>
    %210 = vector.broadcast %208 : vector<1x128xf32> to vector<2x128xf32>
    %211 = arith.mulf %210, %209 : vector<2x128xf32>
    %212 = arith.addf %207, %211 : vector<2x128xf32>
    %213 = vector.extract_strided_slice %201 {offsets = [2, 0], sizes = [1, 128], strides = [1, 1]} : vector<8x128xf32> to vector<1x128xf32>
    %c4_i32 = arith.constant 4 : i32
    %214 = tpu.dynamic_rotate %200 by %c4_i32 dim 1 : vector<2x128xf32>, i32 -> vector<2x128xf32>
    %215 = vector.broadcast %213 : vector<1x128xf32> to vector<2x128xf32>
    %216 = arith.mulf %215, %214 : vector<2x128xf32>
    %217 = arith.addf %212, %216 : vector<2x128xf32>
    %cst_42 = arith.constant 0.000000e+00 : f32
    %218 = vector.broadcast %cst_42 : f32 to vector<2x128xf32>
    %219 = arith.cmpf oge, %217, %218 : vector<2x128xf32>
    %cst_43 = arith.constant 0.00999999977 : f32
    %220 = vector.broadcast %cst_43 : f32 to vector<2x128xf32>
    %221 = arith.mulf %220, %217 : vector<2x128xf32>
    %222 = arith.select %219, %217, %221 : vector<2x128xi1>, vector<2x128xf32>
    %223 = vector.extract_strided_slice %201 {offsets = [4, 0], sizes = [1, 128], strides = [1, 1]} : vector<8x128xf32> to vector<1x128xf32>
    %224 = vector.broadcast %223 : vector<1x128xf32> to vector<2x128xf32>
    %225 = arith.mulf %224, %222 : vector<2x128xf32>
    %226 = arith.addf %200, %225 : vector<2x128xf32>
    %c504 = arith.constant 504 : index
    %c0_44 = arith.constant 0 : index
    %227 = vector.load %arg1[%c504, %c0_44] : memref<584x328xf32, #tpu.memory_space<vmem>>, vector<8x128xf32>
    %228 = vector.extract_strided_slice %227 {offsets = [3, 0], sizes = [1, 128], strides = [1, 1]} : vector<8x128xf32> to vector<1x128xf32>
    %229 = vector.extract_strided_slice %227 {offsets = [0, 0], sizes = [1, 128], strides = [1, 1]} : vector<8x128xf32> to vector<1x128xf32>
    %230 = vector.broadcast %229 : vector<1x128xf32> to vector<2x128xf32>
    %231 = arith.mulf %230, %226 : vector<2x128xf32>
    %232 = vector.broadcast %228 : vector<1x128xf32> to vector<2x128xf32>
    %233 = arith.addf %232, %231 : vector<2x128xf32>
    %234 = vector.extract_strided_slice %227 {offsets = [1, 0], sizes = [1, 128], strides = [1, 1]} : vector<8x128xf32> to vector<1x128xf32>
    %c4_i32_45 = arith.constant 4 : i32
    %235 = tpu.dynamic_rotate %226 by %c4_i32_45 dim 1 : vector<2x128xf32>, i32 -> vector<2x128xf32>
    %236 = vector.broadcast %234 : vector<1x128xf32> to vector<2x128xf32>
    %237 = arith.mulf %236, %235 : vector<2x128xf32>
    %238 = arith.addf %233, %237 : vector<2x128xf32>
    %239 = vector.extract_strided_slice %227 {offsets = [2, 0], sizes = [1, 128], strides = [1, 1]} : vector<8x128xf32> to vector<1x128xf32>
    %c8_i32 = arith.constant 8 : i32
    %240 = tpu.dynamic_rotate %226 by %c8_i32 dim 1 : vector<2x128xf32>, i32 -> vector<2x128xf32>
    %241 = vector.broadcast %239 : vector<1x128xf32> to vector<2x128xf32>
    %242 = arith.mulf %241, %240 : vector<2x128xf32>
    %243 = arith.addf %238, %242 : vector<2x128xf32>
    %cst_46 = arith.constant 0.000000e+00 : f32
    %244 = vector.broadcast %cst_46 : f32 to vector<2x128xf32>
    %245 = arith.cmpf oge, %243, %244 : vector<2x128xf32>
    %cst_47 = arith.constant 0.00999999977 : f32
    %246 = vector.broadcast %cst_47 : f32 to vector<2x128xf32>
    %247 = arith.mulf %246, %243 : vector<2x128xf32>
    %248 = arith.select %245, %243, %247 : vector<2x128xi1>, vector<2x128xf32>
    %249 = vector.extract_strided_slice %227 {offsets = [4, 0], sizes = [1, 128], strides = [1, 1]} : vector<8x128xf32> to vector<1x128xf32>
    %250 = vector.broadcast %249 : vector<1x128xf32> to vector<2x128xf32>
    %251 = arith.mulf %250, %248 : vector<2x128xf32>
    %252 = arith.addf %226, %251 : vector<2x128xf32>
    %c512 = arith.constant 512 : index
    %c0_48 = arith.constant 0 : index
    %253 = vector.load %arg1[%c512, %c0_48] : memref<584x328xf32, #tpu.memory_space<vmem>>, vector<8x128xf32>
    %254 = vector.extract_strided_slice %253 {offsets = [3, 0], sizes = [1, 128], strides = [1, 1]} : vector<8x128xf32> to vector<1x128xf32>
    %255 = vector.extract_strided_slice %253 {offsets = [0, 0], sizes = [1, 128], strides = [1, 1]} : vector<8x128xf32> to vector<1x128xf32>
    %256 = vector.broadcast %255 : vector<1x128xf32> to vector<2x128xf32>
    %257 = arith.mulf %256, %252 : vector<2x128xf32>
    %258 = vector.broadcast %254 : vector<1x128xf32> to vector<2x128xf32>
    %259 = arith.addf %258, %257 : vector<2x128xf32>
    %260 = vector.extract_strided_slice %253 {offsets = [1, 0], sizes = [1, 128], strides = [1, 1]} : vector<8x128xf32> to vector<1x128xf32>
    %c8_i32_49 = arith.constant 8 : i32
    %261 = tpu.dynamic_rotate %252 by %c8_i32_49 dim 1 : vector<2x128xf32>, i32 -> vector<2x128xf32>
    %262 = vector.broadcast %260 : vector<1x128xf32> to vector<2x128xf32>
    %263 = arith.mulf %262, %261 : vector<2x128xf32>
    %264 = arith.addf %259, %263 : vector<2x128xf32>
    %265 = vector.extract_strided_slice %253 {offsets = [2, 0], sizes = [1, 128], strides = [1, 1]} : vector<8x128xf32> to vector<1x128xf32>
    %c16_i32 = arith.constant 16 : i32
    %266 = tpu.dynamic_rotate %252 by %c16_i32 dim 1 : vector<2x128xf32>, i32 -> vector<2x128xf32>
    %267 = vector.broadcast %265 : vector<1x128xf32> to vector<2x128xf32>
    %268 = arith.mulf %267, %266 : vector<2x128xf32>
    %269 = arith.addf %264, %268 : vector<2x128xf32>
    %cst_50 = arith.constant 0.000000e+00 : f32
    %270 = vector.broadcast %cst_50 : f32 to vector<2x128xf32>
    %271 = arith.cmpf oge, %269, %270 : vector<2x128xf32>
    %cst_51 = arith.constant 0.00999999977 : f32
    %272 = vector.broadcast %cst_51 : f32 to vector<2x128xf32>
    %273 = arith.mulf %272, %269 : vector<2x128xf32>
    %274 = arith.select %271, %269, %273 : vector<2x128xi1>, vector<2x128xf32>
    %275 = vector.extract_strided_slice %253 {offsets = [4, 0], sizes = [1, 128], strides = [1, 1]} : vector<8x128xf32> to vector<1x128xf32>
    %276 = vector.broadcast %275 : vector<1x128xf32> to vector<2x128xf32>
    %277 = arith.mulf %276, %274 : vector<2x128xf32>
    %278 = arith.addf %252, %277 : vector<2x128xf32>
    %c520 = arith.constant 520 : index
    %c0_52 = arith.constant 0 : index
    %279 = vector.load %arg1[%c520, %c0_52] : memref<584x328xf32, #tpu.memory_space<vmem>>, vector<8x128xf32>
    %280 = vector.extract_strided_slice %279 {offsets = [3, 0], sizes = [1, 128], strides = [1, 1]} : vector<8x128xf32> to vector<1x128xf32>
    %281 = vector.extract_strided_slice %279 {offsets = [0, 0], sizes = [1, 128], strides = [1, 1]} : vector<8x128xf32> to vector<1x128xf32>
    %282 = vector.broadcast %281 : vector<1x128xf32> to vector<2x128xf32>
    %283 = arith.mulf %282, %278 : vector<2x128xf32>
    %284 = vector.broadcast %280 : vector<1x128xf32> to vector<2x128xf32>
    %285 = arith.addf %284, %283 : vector<2x128xf32>
    %286 = vector.extract_strided_slice %279 {offsets = [1, 0], sizes = [1, 128], strides = [1, 1]} : vector<8x128xf32> to vector<1x128xf32>
    %c127_i32_53 = arith.constant 127 : i32
    %287 = tpu.dynamic_rotate %278 by %c127_i32_53 dim 1 : vector<2x128xf32>, i32 -> vector<2x128xf32>
    %288 = vector.broadcast %286 : vector<1x128xf32> to vector<2x128xf32>
    %289 = arith.mulf %288, %287 : vector<2x128xf32>
    %290 = arith.addf %285, %289 : vector<2x128xf32>
    %291 = vector.extract_strided_slice %279 {offsets = [2, 0], sizes = [1, 128], strides = [1, 1]} : vector<8x128xf32> to vector<1x128xf32>
    %c126_i32_54 = arith.constant 126 : i32
    %292 = tpu.dynamic_rotate %278 by %c126_i32_54 dim 1 : vector<2x128xf32>, i32 -> vector<2x128xf32>
    %293 = vector.broadcast %291 : vector<1x128xf32> to vector<2x128xf32>
    %294 = arith.mulf %293, %292 : vector<2x128xf32>
    %295 = arith.addf %290, %294 : vector<2x128xf32>
    %cst_55 = arith.constant 0.000000e+00 : f32
    %296 = vector.broadcast %cst_55 : f32 to vector<2x128xf32>
    %297 = arith.cmpf oge, %295, %296 : vector<2x128xf32>
    %cst_56 = arith.constant 0.00999999977 : f32
    %298 = vector.broadcast %cst_56 : f32 to vector<2x128xf32>
    %299 = arith.mulf %298, %295 : vector<2x128xf32>
    %300 = arith.select %297, %295, %299 : vector<2x128xi1>, vector<2x128xf32>
    %301 = vector.extract_strided_slice %279 {offsets = [4, 0], sizes = [1, 128], strides = [1, 1]} : vector<8x128xf32> to vector<1x128xf32>
    %302 = vector.broadcast %301 : vector<1x128xf32> to vector<2x128xf32>
    %303 = arith.mulf %302, %300 : vector<2x128xf32>
    %304 = arith.addf %278, %303 : vector<2x128xf32>
    %c528 = arith.constant 528 : index
    %c0_57 = arith.constant 0 : index
    %305 = vector.load %arg1[%c528, %c0_57] : memref<584x328xf32, #tpu.memory_space<vmem>>, vector<8x128xf32>
    %306 = vector.extract_strided_slice %305 {offsets = [3, 0], sizes = [1, 128], strides = [1, 1]} : vector<8x128xf32> to vector<1x128xf32>
    %307 = vector.extract_strided_slice %305 {offsets = [0, 0], sizes = [1, 128], strides = [1, 1]} : vector<8x128xf32> to vector<1x128xf32>
    %308 = vector.broadcast %307 : vector<1x128xf32> to vector<2x128xf32>
    %309 = arith.mulf %308, %304 : vector<2x128xf32>
    %310 = vector.broadcast %306 : vector<1x128xf32> to vector<2x128xf32>
    %311 = arith.addf %310, %309 : vector<2x128xf32>
    %312 = vector.extract_strided_slice %305 {offsets = [1, 0], sizes = [1, 128], strides = [1, 1]} : vector<8x128xf32> to vector<1x128xf32>
    %c126_i32_58 = arith.constant 126 : i32
    %313 = tpu.dynamic_rotate %304 by %c126_i32_58 dim 1 : vector<2x128xf32>, i32 -> vector<2x128xf32>
    %314 = vector.broadcast %312 : vector<1x128xf32> to vector<2x128xf32>
    %315 = arith.mulf %314, %313 : vector<2x128xf32>
    %316 = arith.addf %311, %315 : vector<2x128xf32>
    %317 = vector.extract_strided_slice %305 {offsets = [2, 0], sizes = [1, 128], strides = [1, 1]} : vector<8x128xf32> to vector<1x128xf32>
    %c124_i32_59 = arith.constant 124 : i32
    %318 = tpu.dynamic_rotate %304 by %c124_i32_59 dim 1 : vector<2x128xf32>, i32 -> vector<2x128xf32>
    %319 = vector.broadcast %317 : vector<1x128xf32> to vector<2x128xf32>
    %320 = arith.mulf %319, %318 : vector<2x128xf32>
    %321 = arith.addf %316, %320 : vector<2x128xf32>
    %cst_60 = arith.constant 0.000000e+00 : f32
    %322 = vector.broadcast %cst_60 : f32 to vector<2x128xf32>
    %323 = arith.cmpf oge, %321, %322 : vector<2x128xf32>
    %cst_61 = arith.constant 0.00999999977 : f32
    %324 = vector.broadcast %cst_61 : f32 to vector<2x128xf32>
    %325 = arith.mulf %324, %321 : vector<2x128xf32>
    %326 = arith.select %323, %321, %325 : vector<2x128xi1>, vector<2x128xf32>
    %327 = vector.extract_strided_slice %305 {offsets = [4, 0], sizes = [1, 128], strides = [1, 1]} : vector<8x128xf32> to vector<1x128xf32>
    %328 = vector.broadcast %327 : vector<1x128xf32> to vector<2x128xf32>
    %329 = arith.mulf %328, %326 : vector<2x128xf32>
    %330 = arith.addf %304, %329 : vector<2x128xf32>
    %c536 = arith.constant 536 : index
    %c0_62 = arith.constant 0 : index
    %331 = vector.load %arg1[%c536, %c0_62] : memref<584x328xf32, #tpu.memory_space<vmem>>, vector<8x128xf32>
    %332 = vector.extract_strided_slice %331 {offsets = [3, 0], sizes = [1, 128], strides = [1, 1]} : vector<8x128xf32> to vector<1x128xf32>
    %333 = vector.extract_strided_slice %331 {offsets = [0, 0], sizes = [1, 128], strides = [1, 1]} : vector<8x128xf32> to vector<1x128xf32>
    %334 = vector.broadcast %333 : vector<1x128xf32> to vector<2x128xf32>
    %335 = arith.mulf %334, %330 : vector<2x128xf32>
    %336 = vector.broadcast %332 : vector<1x128xf32> to vector<2x128xf32>
    %337 = arith.addf %336, %335 : vector<2x128xf32>
    %338 = vector.extract_strided_slice %331 {offsets = [1, 0], sizes = [1, 128], strides = [1, 1]} : vector<8x128xf32> to vector<1x128xf32>
    %c124_i32_63 = arith.constant 124 : i32
    %339 = tpu.dynamic_rotate %330 by %c124_i32_63 dim 1 : vector<2x128xf32>, i32 -> vector<2x128xf32>
    %340 = vector.broadcast %338 : vector<1x128xf32> to vector<2x128xf32>
    %341 = arith.mulf %340, %339 : vector<2x128xf32>
    %342 = arith.addf %337, %341 : vector<2x128xf32>
    %343 = vector.extract_strided_slice %331 {offsets = [2, 0], sizes = [1, 128], strides = [1, 1]} : vector<8x128xf32> to vector<1x128xf32>
    %c120_i32_64 = arith.constant 120 : i32
    %344 = tpu.dynamic_rotate %330 by %c120_i32_64 dim 1 : vector<2x128xf32>, i32 -> vector<2x128xf32>
    %345 = vector.broadcast %343 : vector<1x128xf32> to vector<2x128xf32>
    %346 = arith.mulf %345, %344 : vector<2x128xf32>
    %347 = arith.addf %342, %346 : vector<2x128xf32>
    %cst_65 = arith.constant 0.000000e+00 : f32
    %348 = vector.broadcast %cst_65 : f32 to vector<2x128xf32>
    %349 = arith.cmpf oge, %347, %348 : vector<2x128xf32>
    %cst_66 = arith.constant 0.00999999977 : f32
    %350 = vector.broadcast %cst_66 : f32 to vector<2x128xf32>
    %351 = arith.mulf %350, %347 : vector<2x128xf32>
    %352 = arith.select %349, %347, %351 : vector<2x128xi1>, vector<2x128xf32>
    %353 = vector.extract_strided_slice %331 {offsets = [4, 0], sizes = [1, 128], strides = [1, 1]} : vector<8x128xf32> to vector<1x128xf32>
    %354 = vector.broadcast %353 : vector<1x128xf32> to vector<2x128xf32>
    %355 = arith.mulf %354, %352 : vector<2x128xf32>
    %356 = arith.addf %330, %355 : vector<2x128xf32>
    %c544 = arith.constant 544 : index
    %c0_67 = arith.constant 0 : index
    %357 = vector.load %arg1[%c544, %c0_67] : memref<584x328xf32, #tpu.memory_space<vmem>>, vector<8x128xf32>
    %358 = vector.extract_strided_slice %357 {offsets = [3, 0], sizes = [1, 128], strides = [1, 1]} : vector<8x128xf32> to vector<1x128xf32>
    %359 = vector.extract_strided_slice %357 {offsets = [0, 0], sizes = [1, 128], strides = [1, 1]} : vector<8x128xf32> to vector<1x128xf32>
    %360 = vector.broadcast %359 : vector<1x128xf32> to vector<2x128xf32>
    %361 = arith.mulf %360, %356 : vector<2x128xf32>
    %362 = vector.broadcast %358 : vector<1x128xf32> to vector<2x128xf32>
    %363 = arith.addf %362, %361 : vector<2x128xf32>
    %364 = vector.extract_strided_slice %357 {offsets = [1, 0], sizes = [1, 128], strides = [1, 1]} : vector<8x128xf32> to vector<1x128xf32>
    %c120_i32_68 = arith.constant 120 : i32
    %365 = tpu.dynamic_rotate %356 by %c120_i32_68 dim 1 : vector<2x128xf32>, i32 -> vector<2x128xf32>
    %366 = vector.broadcast %364 : vector<1x128xf32> to vector<2x128xf32>
    %367 = arith.mulf %366, %365 : vector<2x128xf32>
    %368 = arith.addf %363, %367 : vector<2x128xf32>
    %369 = vector.extract_strided_slice %357 {offsets = [2, 0], sizes = [1, 128], strides = [1, 1]} : vector<8x128xf32> to vector<1x128xf32>
    %c112_i32_69 = arith.constant 112 : i32
    %370 = tpu.dynamic_rotate %356 by %c112_i32_69 dim 1 : vector<2x128xf32>, i32 -> vector<2x128xf32>
    %371 = vector.broadcast %369 : vector<1x128xf32> to vector<2x128xf32>
    %372 = arith.mulf %371, %370 : vector<2x128xf32>
    %373 = arith.addf %368, %372 : vector<2x128xf32>
    %cst_70 = arith.constant 0.000000e+00 : f32
    %374 = vector.broadcast %cst_70 : f32 to vector<2x128xf32>
    %375 = arith.cmpf oge, %373, %374 : vector<2x128xf32>
    %cst_71 = arith.constant 0.00999999977 : f32
    %376 = vector.broadcast %cst_71 : f32 to vector<2x128xf32>
    %377 = arith.mulf %376, %373 : vector<2x128xf32>
    %378 = arith.select %375, %373, %377 : vector<2x128xi1>, vector<2x128xf32>
    %379 = vector.extract_strided_slice %357 {offsets = [4, 0], sizes = [1, 128], strides = [1, 1]} : vector<8x128xf32> to vector<1x128xf32>
    %380 = vector.broadcast %379 : vector<1x128xf32> to vector<2x128xf32>
    %381 = arith.mulf %380, %378 : vector<2x128xf32>
    %382 = arith.addf %356, %381 : vector<2x128xf32>
    %c552 = arith.constant 552 : index
    %c0_72 = arith.constant 0 : index
    %383 = vector.load %arg1[%c552, %c0_72] : memref<584x328xf32, #tpu.memory_space<vmem>>, vector<8x128xf32>
    %384 = vector.extract_strided_slice %383 {offsets = [3, 0], sizes = [1, 128], strides = [1, 1]} : vector<8x128xf32> to vector<1x128xf32>
    %385 = vector.extract_strided_slice %383 {offsets = [0, 0], sizes = [1, 128], strides = [1, 1]} : vector<8x128xf32> to vector<1x128xf32>
    %386 = vector.broadcast %385 : vector<1x128xf32> to vector<2x128xf32>
    %387 = arith.mulf %386, %382 : vector<2x128xf32>
    %388 = vector.broadcast %384 : vector<1x128xf32> to vector<2x128xf32>
    %389 = arith.addf %388, %387 : vector<2x128xf32>
    %390 = vector.extract_strided_slice %383 {offsets = [1, 0], sizes = [1, 128], strides = [1, 1]} : vector<8x128xf32> to vector<1x128xf32>
    %c1_i32_73 = arith.constant 1 : i32
    %391 = tpu.dynamic_rotate %382 by %c1_i32_73 dim 1 : vector<2x128xf32>, i32 -> vector<2x128xf32>
    %392 = vector.broadcast %390 : vector<1x128xf32> to vector<2x128xf32>
    %393 = arith.mulf %392, %391 : vector<2x128xf32>
    %394 = arith.addf %389, %393 : vector<2x128xf32>
    %395 = vector.extract_strided_slice %383 {offsets = [2, 0], sizes = [1, 128], strides = [1, 1]} : vector<8x128xf32> to vector<1x128xf32>
    %c2_i32_74 = arith.constant 2 : i32
    %396 = tpu.dynamic_rotate %382 by %c2_i32_74 dim 1 : vector<2x128xf32>, i32 -> vector<2x128xf32>
    %397 = vector.broadcast %395 : vector<1x128xf32> to vector<2x128xf32>
    %398 = arith.mulf %397, %396 : vector<2x128xf32>
    %399 = arith.addf %394, %398 : vector<2x128xf32>
    %cst_75 = arith.constant 0.000000e+00 : f32
    %400 = vector.broadcast %cst_75 : f32 to vector<2x128xf32>
    %401 = arith.cmpf oge, %399, %400 : vector<2x128xf32>
    %cst_76 = arith.constant 0.00999999977 : f32
    %402 = vector.broadcast %cst_76 : f32 to vector<2x128xf32>
    %403 = arith.mulf %402, %399 : vector<2x128xf32>
    %404 = arith.select %401, %399, %403 : vector<2x128xi1>, vector<2x128xf32>
    %405 = vector.extract_strided_slice %383 {offsets = [4, 0], sizes = [1, 128], strides = [1, 1]} : vector<8x128xf32> to vector<1x128xf32>
    %406 = vector.broadcast %405 : vector<1x128xf32> to vector<2x128xf32>
    %407 = arith.mulf %406, %404 : vector<2x128xf32>
    %408 = arith.addf %382, %407 : vector<2x128xf32>
    %c560 = arith.constant 560 : index
    %c0_77 = arith.constant 0 : index
    %409 = vector.load %arg1[%c560, %c0_77] : memref<584x328xf32, #tpu.memory_space<vmem>>, vector<8x128xf32>
    %410 = vector.extract_strided_slice %409 {offsets = [3, 0], sizes = [1, 128], strides = [1, 1]} : vector<8x128xf32> to vector<1x128xf32>
    %411 = vector.extract_strided_slice %409 {offsets = [0, 0], sizes = [1, 128], strides = [1, 1]} : vector<8x128xf32> to vector<1x128xf32>
    %412 = vector.broadcast %411 : vector<1x128xf32> to vector<2x128xf32>
    %413 = arith.mulf %412, %408 : vector<2x128xf32>
    %414 = vector.broadcast %410 : vector<1x128xf32> to vector<2x128xf32>
    %415 = arith.addf %414, %413 : vector<2x128xf32>
    %416 = vector.extract_strided_slice %409 {offsets = [1, 0], sizes = [1, 128], strides = [1, 1]} : vector<8x128xf32> to vector<1x128xf32>
    %c2_i32_78 = arith.constant 2 : i32
    %417 = tpu.dynamic_rotate %408 by %c2_i32_78 dim 1 : vector<2x128xf32>, i32 -> vector<2x128xf32>
    %418 = vector.broadcast %416 : vector<1x128xf32> to vector<2x128xf32>
    %419 = arith.mulf %418, %417 : vector<2x128xf32>
    %420 = arith.addf %415, %419 : vector<2x128xf32>
    %421 = vector.extract_strided_slice %409 {offsets = [2, 0], sizes = [1, 128], strides = [1, 1]} : vector<8x128xf32> to vector<1x128xf32>
    %c4_i32_79 = arith.constant 4 : i32
    %422 = tpu.dynamic_rotate %408 by %c4_i32_79 dim 1 : vector<2x128xf32>, i32 -> vector<2x128xf32>
    %423 = vector.broadcast %421 : vector<1x128xf32> to vector<2x128xf32>
    %424 = arith.mulf %423, %422 : vector<2x128xf32>
    %425 = arith.addf %420, %424 : vector<2x128xf32>
    %cst_80 = arith.constant 0.000000e+00 : f32
    %426 = vector.broadcast %cst_80 : f32 to vector<2x128xf32>
    %427 = arith.cmpf oge, %425, %426 : vector<2x128xf32>
    %cst_81 = arith.constant 0.00999999977 : f32
    %428 = vector.broadcast %cst_81 : f32 to vector<2x128xf32>
    %429 = arith.mulf %428, %425 : vector<2x128xf32>
    %430 = arith.select %427, %425, %429 : vector<2x128xi1>, vector<2x128xf32>
    %431 = vector.extract_strided_slice %409 {offsets = [4, 0], sizes = [1, 128], strides = [1, 1]} : vector<8x128xf32> to vector<1x128xf32>
    %432 = vector.broadcast %431 : vector<1x128xf32> to vector<2x128xf32>
    %433 = arith.mulf %432, %430 : vector<2x128xf32>
    %434 = arith.addf %408, %433 : vector<2x128xf32>
    %c568 = arith.constant 568 : index
    %c0_82 = arith.constant 0 : index
    %435 = vector.load %arg1[%c568, %c0_82] : memref<584x328xf32, #tpu.memory_space<vmem>>, vector<8x128xf32>
    %436 = vector.extract_strided_slice %435 {offsets = [3, 0], sizes = [1, 128], strides = [1, 1]} : vector<8x128xf32> to vector<1x128xf32>
    %437 = vector.extract_strided_slice %435 {offsets = [0, 0], sizes = [1, 128], strides = [1, 1]} : vector<8x128xf32> to vector<1x128xf32>
    %438 = vector.broadcast %437 : vector<1x128xf32> to vector<2x128xf32>
    %439 = arith.mulf %438, %434 : vector<2x128xf32>
    %440 = vector.broadcast %436 : vector<1x128xf32> to vector<2x128xf32>
    %441 = arith.addf %440, %439 : vector<2x128xf32>
    %442 = vector.extract_strided_slice %435 {offsets = [1, 0], sizes = [1, 128], strides = [1, 1]} : vector<8x128xf32> to vector<1x128xf32>
    %c4_i32_83 = arith.constant 4 : i32
    %443 = tpu.dynamic_rotate %434 by %c4_i32_83 dim 1 : vector<2x128xf32>, i32 -> vector<2x128xf32>
    %444 = vector.broadcast %442 : vector<1x128xf32> to vector<2x128xf32>
    %445 = arith.mulf %444, %443 : vector<2x128xf32>
    %446 = arith.addf %441, %445 : vector<2x128xf32>
    %447 = vector.extract_strided_slice %435 {offsets = [2, 0], sizes = [1, 128], strides = [1, 1]} : vector<8x128xf32> to vector<1x128xf32>
    %c8_i32_84 = arith.constant 8 : i32
    %448 = tpu.dynamic_rotate %434 by %c8_i32_84 dim 1 : vector<2x128xf32>, i32 -> vector<2x128xf32>
    %449 = vector.broadcast %447 : vector<1x128xf32> to vector<2x128xf32>
    %450 = arith.mulf %449, %448 : vector<2x128xf32>
    %451 = arith.addf %446, %450 : vector<2x128xf32>
    %cst_85 = arith.constant 0.000000e+00 : f32
    %452 = vector.broadcast %cst_85 : f32 to vector<2x128xf32>
    %453 = arith.cmpf oge, %451, %452 : vector<2x128xf32>
    %cst_86 = arith.constant 0.00999999977 : f32
    %454 = vector.broadcast %cst_86 : f32 to vector<2x128xf32>
    %455 = arith.mulf %454, %451 : vector<2x128xf32>
    %456 = arith.select %453, %451, %455 : vector<2x128xi1>, vector<2x128xf32>
    %457 = vector.extract_strided_slice %435 {offsets = [4, 0], sizes = [1, 128], strides = [1, 1]} : vector<8x128xf32> to vector<1x128xf32>
    %458 = vector.broadcast %457 : vector<1x128xf32> to vector<2x128xf32>
    %459 = arith.mulf %458, %456 : vector<2x128xf32>
    %460 = arith.addf %434, %459 : vector<2x128xf32>
    %c576 = arith.constant 576 : index
    %c0_87 = arith.constant 0 : index
    %461 = vector.load %arg1[%c576, %c0_87] : memref<584x328xf32, #tpu.memory_space<vmem>>, vector<8x128xf32>
    %462 = vector.extract_strided_slice %461 {offsets = [3, 0], sizes = [1, 128], strides = [1, 1]} : vector<8x128xf32> to vector<1x128xf32>
    %463 = vector.extract_strided_slice %461 {offsets = [0, 0], sizes = [1, 128], strides = [1, 1]} : vector<8x128xf32> to vector<1x128xf32>
    %464 = vector.broadcast %463 : vector<1x128xf32> to vector<2x128xf32>
    %465 = arith.mulf %464, %460 : vector<2x128xf32>
    %466 = vector.broadcast %462 : vector<1x128xf32> to vector<2x128xf32>
    %467 = arith.addf %466, %465 : vector<2x128xf32>
    %468 = vector.extract_strided_slice %461 {offsets = [1, 0], sizes = [1, 128], strides = [1, 1]} : vector<8x128xf32> to vector<1x128xf32>
    %c8_i32_88 = arith.constant 8 : i32
    %469 = tpu.dynamic_rotate %460 by %c8_i32_88 dim 1 : vector<2x128xf32>, i32 -> vector<2x128xf32>
    %470 = vector.broadcast %468 : vector<1x128xf32> to vector<2x128xf32>
    %471 = arith.mulf %470, %469 : vector<2x128xf32>
    %472 = arith.addf %467, %471 : vector<2x128xf32>
    %473 = vector.extract_strided_slice %461 {offsets = [2, 0], sizes = [1, 128], strides = [1, 1]} : vector<8x128xf32> to vector<1x128xf32>
    %c16_i32_89 = arith.constant 16 : i32
    %474 = tpu.dynamic_rotate %460 by %c16_i32_89 dim 1 : vector<2x128xf32>, i32 -> vector<2x128xf32>
    %475 = vector.broadcast %473 : vector<1x128xf32> to vector<2x128xf32>
    %476 = arith.mulf %475, %474 : vector<2x128xf32>
    %477 = arith.addf %472, %476 : vector<2x128xf32>
    %cst_90 = arith.constant 0.000000e+00 : f32
    %478 = vector.broadcast %cst_90 : f32 to vector<2x128xf32>
    %479 = arith.cmpf oge, %477, %478 : vector<2x128xf32>
    %cst_91 = arith.constant 0.00999999977 : f32
    %480 = vector.broadcast %cst_91 : f32 to vector<2x128xf32>
    %481 = arith.mulf %480, %477 : vector<2x128xf32>
    %482 = arith.select %479, %477, %481 : vector<2x128xi1>, vector<2x128xf32>
    %483 = vector.extract_strided_slice %461 {offsets = [4, 0], sizes = [1, 128], strides = [1, 1]} : vector<8x128xf32> to vector<1x128xf32>
    %484 = vector.broadcast %483 : vector<1x128xf32> to vector<2x128xf32>
    %485 = arith.mulf %484, %482 : vector<2x128xf32>
    %486 = arith.addf %460, %485 : vector<2x128xf32>
    %487 = vector.extract_strided_slice %486 {offsets = [0, 32], sizes = [2, 8], strides = [1, 1]} : vector<2x128xf32> to vector<2x8xf32>
    %c408 = arith.constant 408 : index
    %c0_92 = arith.constant 0 : index
    %488 = vector.load %arg1[%c408, %c0_92] : memref<584x328xf32, #tpu.memory_space<vmem>>, vector<8x32xf32>
    %cst_93 = arith.constant dense<0.000000e+00> : vector<2x32xf32>
    %489 = tpu.matmul %487, %488, %cst_93 {dimension_numbers = #tpu.dot_dimension_numbers<[1], [0], [0], [1], [0, 0, 1, 1], [], []>} : vector<2x8xf32>, vector<8x32xf32>, vector<2x32xf32> -> vector<2x32xf32>
    %490 = vector.extract_strided_slice %43 {offsets = [3, 0], sizes = [1, 32], strides = [1, 1]} : vector<8x160xf32> to vector<1x32xf32>
    %491 = vector.broadcast %490 : vector<1x32xf32> to vector<2x32xf32>
    %492 = arith.addf %489, %491 : vector<2x32xf32>
    %cst_94 = arith.constant 0.000000e+00 : f32
    %493 = vector.broadcast %cst_94 : f32 to vector<2x32xf32>
    %494 = arith.maximumf %492, %493 : vector<2x32xf32>
    %c416 = arith.constant 416 : index
    %c0_95 = arith.constant 0 : index
    %495 = vector.load %arg1[%c416, %c0_95] : memref<584x328xf32, #tpu.memory_space<vmem>>, vector<32x160xf32>
    %cst_96 = arith.constant dense<0.000000e+00> : vector<2x160xf32>
    %496 = tpu.matmul %494, %495, %cst_96 {dimension_numbers = #tpu.dot_dimension_numbers<[1], [0], [0], [1], [0, 0, 1, 1], [], []>} : vector<2x32xf32>, vector<32x160xf32>, vector<2x160xf32> -> vector<2x160xf32>
    %497 = vector.extract_strided_slice %43 {offsets = [4, 0], sizes = [1, 160], strides = [1, 1]} : vector<8x160xf32> to vector<1x160xf32>
    %498 = vector.broadcast %497 : vector<1x160xf32> to vector<2x160xf32>
    %499 = arith.addf %496, %498 : vector<2x160xf32>
    %cst_97 = arith.constant 0.000000e+00 : f32
    %500 = vector.broadcast %cst_97 : f32 to vector<2x160xf32>
    %501 = arith.maximumf %499, %500 : vector<2x160xf32>
    %502 = vector.extract_strided_slice %501 {offsets = [0, 0], sizes = [2, 20], strides = [1, 1]} : vector<2x160xf32> to vector<2x20xf32>
    %503 = vector.extract_strided_slice %501 {offsets = [0, 20], sizes = [2, 20], strides = [1, 1]} : vector<2x160xf32> to vector<2x20xf32>
    %504 = vector.extract_strided_slice %501 {offsets = [0, 40], sizes = [2, 20], strides = [1, 1]} : vector<2x160xf32> to vector<2x20xf32>
    %505 = vector.extract_strided_slice %501 {offsets = [0, 60], sizes = [2, 20], strides = [1, 1]} : vector<2x160xf32> to vector<2x20xf32>
    %506 = vector.extract_strided_slice %501 {offsets = [0, 80], sizes = [2, 20], strides = [1, 1]} : vector<2x160xf32> to vector<2x20xf32>
    %507 = vector.extract_strided_slice %501 {offsets = [0, 100], sizes = [2, 20], strides = [1, 1]} : vector<2x160xf32> to vector<2x20xf32>
    %508 = vector.extract_strided_slice %501 {offsets = [0, 120], sizes = [2, 20], strides = [1, 1]} : vector<2x160xf32> to vector<2x20xf32>
    %509 = vector.extract_strided_slice %501 {offsets = [0, 140], sizes = [2, 20], strides = [1, 1]} : vector<2x160xf32> to vector<2x20xf32>
    %510 = tpu.concatenate %502, %503, %504, %505, %506, %507, %508, %509 in 0 : vector<2x20xf32>, vector<2x20xf32>, vector<2x20xf32>, vector<2x20xf32>, vector<2x20xf32>, vector<2x20xf32>, vector<2x20xf32>, vector<2x20xf32> -> vector<16x20xf32>
    %cst_98 = arith.constant 0.000000e+00 : f32
    %511 = vector.broadcast %cst_98 : f32 to vector<16x6xf32>
    %512 = tpu.concatenate %511, %510, %511 in 1 : vector<16x6xf32>, vector<16x20xf32>, vector<16x6xf32> -> vector<16x32xf32>
    %513 = vector.extract_strided_slice %512 {offsets = [0, 0], sizes = [16, 26], strides = [1, 1]} : vector<16x32xf32> to vector<16x26xf32>
    %514 = vector.extract_strided_slice %512 {offsets = [0, 1], sizes = [16, 26], strides = [1, 1]} : vector<16x32xf32> to vector<16x26xf32>
    %515 = vector.extract_strided_slice %512 {offsets = [0, 2], sizes = [16, 26], strides = [1, 1]} : vector<16x32xf32> to vector<16x26xf32>
    %516 = vector.extract_strided_slice %512 {offsets = [0, 3], sizes = [16, 26], strides = [1, 1]} : vector<16x32xf32> to vector<16x26xf32>
    %517 = vector.extract_strided_slice %512 {offsets = [0, 4], sizes = [16, 26], strides = [1, 1]} : vector<16x32xf32> to vector<16x26xf32>
    %518 = vector.extract_strided_slice %512 {offsets = [0, 5], sizes = [16, 26], strides = [1, 1]} : vector<16x32xf32> to vector<16x26xf32>
    %519 = vector.extract_strided_slice %512 {offsets = [0, 6], sizes = [16, 26], strides = [1, 1]} : vector<16x32xf32> to vector<16x26xf32>
    %520 = vector.extract_strided_slice %2 {offsets = [0, 0], sizes = [8, 26], strides = [1, 1]} : vector<8x32xf32> to vector<8x26xf32>
    %521 = tpu.concatenate %513, %514, %515, %516, %517, %518, %519, %520 in 0 : vector<16x26xf32>, vector<16x26xf32>, vector<16x26xf32>, vector<16x26xf32>, vector<16x26xf32>, vector<16x26xf32>, vector<16x26xf32>, vector<8x26xf32> -> vector<120x26xf32>
    %c112 = arith.constant 112 : index
    %c0_99 = arith.constant 0 : index
    %522 = vector.load %arg1[%c112, %c0_99] : memref<584x328xf32, #tpu.memory_space<vmem>>, vector<32x120xf32>
    %cst_100 = arith.constant dense<0.000000e+00> : vector<32x26xf32>
    %523 = tpu.matmul %522, %521, %cst_100 {dimension_numbers = #tpu.dot_dimension_numbers<[1], [0], [0], [1], [0, 0, 1, 1], [], []>} : vector<32x120xf32>, vector<120x26xf32>, vector<32x26xf32> -> vector<32x26xf32>
    %cst_101 = arith.constant 0.000000e+00 : f32
    %524 = vector.broadcast %cst_101 : f32 to vector<32x26xf32>
    %525 = arith.maximumf %523, %524 : vector<32x26xf32>
    %cst_102 = arith.constant 0.000000e+00 : f32
    %526 = vector.broadcast %cst_102 : f32 to vector<32x4xf32>
    %527 = tpu.concatenate %526, %525, %526 in 1 : vector<32x4xf32>, vector<32x26xf32>, vector<32x4xf32> -> vector<32x34xf32>
    %528 = vector.extract_strided_slice %527 {offsets = [0, 0], sizes = [32, 30], strides = [1, 1]} : vector<32x34xf32> to vector<32x30xf32>
    %529 = vector.extract_strided_slice %527 {offsets = [0, 1], sizes = [32, 30], strides = [1, 1]} : vector<32x34xf32> to vector<32x30xf32>
    %530 = vector.extract_strided_slice %527 {offsets = [0, 2], sizes = [32, 30], strides = [1, 1]} : vector<32x34xf32> to vector<32x30xf32>
    %531 = vector.extract_strided_slice %527 {offsets = [0, 3], sizes = [32, 30], strides = [1, 1]} : vector<32x34xf32> to vector<32x30xf32>
    %532 = vector.extract_strided_slice %527 {offsets = [0, 4], sizes = [32, 30], strides = [1, 1]} : vector<32x34xf32> to vector<32x30xf32>
    %533 = vector.extract_strided_slice %2 {offsets = [0, 0], sizes = [8, 30], strides = [1, 1]} : vector<8x32xf32> to vector<8x30xf32>
    %534 = tpu.concatenate %528, %529, %530, %531, %532, %533 in 0 : vector<32x30xf32>, vector<32x30xf32>, vector<32x30xf32>, vector<32x30xf32>, vector<32x30xf32>, vector<8x30xf32> -> vector<168x30xf32>
    %c144 = arith.constant 144 : index
    %c0_103 = arith.constant 0 : index
    %535 = vector.load %arg1[%c144, %c0_103] : memref<584x328xf32, #tpu.memory_space<vmem>>, vector<64x168xf32>
    %cst_104 = arith.constant dense<0.000000e+00> : vector<64x30xf32>
    %536 = tpu.matmul %535, %534, %cst_104 {dimension_numbers = #tpu.dot_dimension_numbers<[1], [0], [0], [1], [0, 0, 1, 1], [], []>} : vector<64x168xf32>, vector<168x30xf32>, vector<64x30xf32> -> vector<64x30xf32>
    %cst_105 = arith.constant 0.000000e+00 : f32
    %537 = vector.broadcast %cst_105 : f32 to vector<64x30xf32>
    %538 = arith.maximumf %536, %537 : vector<64x30xf32>
    %cst_106 = arith.constant 0.000000e+00 : f32
    %539 = vector.broadcast %cst_106 : f32 to vector<64x2xf32>
    %540 = tpu.concatenate %539, %538, %539 in 1 : vector<64x2xf32>, vector<64x30xf32>, vector<64x2xf32> -> vector<64x34xf32>
    %541 = vector.extract_strided_slice %540 {offsets = [0, 0], sizes = [64, 32], strides = [1, 1]} : vector<64x34xf32> to vector<64x32xf32>
    %542 = vector.extract_strided_slice %540 {offsets = [0, 1], sizes = [64, 32], strides = [1, 1]} : vector<64x34xf32> to vector<64x32xf32>
    %543 = vector.extract_strided_slice %540 {offsets = [0, 2], sizes = [64, 32], strides = [1, 1]} : vector<64x34xf32> to vector<64x32xf32>
    %544 = tpu.concatenate %541, %542, %543, %2 in 0 : vector<64x32xf32>, vector<64x32xf32>, vector<64x32xf32>, vector<8x32xf32> -> vector<200x32xf32>
    %c208 = arith.constant 208 : index
    %c0_107 = arith.constant 0 : index
    %545 = vector.load %arg1[%c208, %c0_107] : memref<584x328xf32, #tpu.memory_space<vmem>>, vector<8x200xf32>
    %cst_108 = arith.constant dense<0.000000e+00> : vector<8x32xf32>
    %546 = tpu.matmul %545, %544, %cst_108 {dimension_numbers = #tpu.dot_dimension_numbers<[1], [0], [0], [1], [0, 0, 1, 1], [], []>} : vector<8x200xf32>, vector<200x32xf32>, vector<8x32xf32> -> vector<8x32xf32>
    %547 = tpu.concatenate %61, %62, %67, %487 in 1 : vector<2x8xf32>, vector<2x8xf32>, vector<2x8xf32>, vector<2x8xf32> -> vector<2x32xf32>
    %cst_109 = arith.constant 0.000000e+00 : f32
    %548 = vector.broadcast %cst_109 : f32 to vector<6x32xf32>
    %549 = tpu.concatenate %547, %548 in 0 : vector<2x32xf32>, vector<6x32xf32> -> vector<8x32xf32>
    %cst_110 = arith.constant 0.000000e+00 : f32
    %550 = vector.broadcast %cst_110 : f32 to vector<8x64xf32>
    %551 = tpu.concatenate %546, %549, %550 in 1 : vector<8x32xf32>, vector<8x32xf32>, vector<8x64xf32> -> vector<8x128xf32>
    %c0_111 = arith.constant 0 : index
    %c0_112 = arith.constant 0 : index
    %552 = vector.load %arg2[%c0_111, %c0_112] : memref<8x128xf32, #tpu.memory_space<vmem>>, vector<8x128xf32>
    tpu.vector_store %arg2[%c0_111, %c0_112], %551 {strides = array<i32>} : memref<8x128xf32, #tpu.memory_space<vmem>>, vector<8x128xf32>,
    return
  }
}

</mosaic_0001>

<llo_original>
// kernel: conv_flow_vae_forward.1
$region0: #{conv_flow_vae_forward.1}
  #allocation0 [shape = 'u32[]', space=smem, size = 0x4, offset = 0x4, fixed_abs, tag = 'smem constant byte address 0x4 - core index']
  #allocation1 [shape = 'u32[144,128]{1,0:T(1,128)}', space=vmem, size = 0x12000, scoped, tag = 'internal scratch']
  %s0 = inlined_call_operand.vmem [shape: f32[32,36], index: 0, kind: input, shape index: {}]
  %s1 = inlined_call_operand.vmem [shape: f32[584,328], index: 1, kind: input, shape index: {}]
  %s2 = inlined_call_operand.vmem [shape: f32[8,128], index: 2, kind: output, shape index: {}]
  %s3 = sld [smem:[#allocation0]]
  $region18: #{conv_flow_vae_forward.1} parent=0
    _
  %s5 = ssub.s32 1, %s3
  %s6 = scalar_select 0, %s5, %s3
  // Predicated region
  $region2: #{conv_flow_vae_forward.1} parent=0 // pred_check
    _
  $region3: #{conv_flow_vae_forward.1} parent=0 // pred_check_branch
    %8 = sbr.rel (0) target = $region5
  $region4: #{conv_flow_vae_forward.1} parent=0 // pred_region
    _
  $region5: #{conv_flow_vae_forward.1} parent=0 // pred_fallthru
    _
  // Predicated region
  $region6: #{conv_flow_vae_forward.1} parent=0 // pred_check
    _
  $region7: #{conv_flow_vae_forward.1} parent=0 // pred_check_branch
    %10 = sbr.rel (0) target = $region9
  $region8: #{conv_flow_vae_forward.1} parent=0 // pred_region
    _
  $region9: #{conv_flow_vae_forward.1} parent=0 // pred_fallthru
    _
  %vm11 = vcmask 1040384
  %v12 = vsel %vm11, 1.0, 0.0
  %v13 = vld [vmem:[%s1] sm:$0xff]
  %v14 = vld [vmem:[%s1 + $0x18] sm:$0xff]
  %v15 = vld [vmem:[%s1 + $0x30] sm:$0xff]
  %v16 = vld [vmem:[%s1 + $0x48] sm:$0xff]
  %v17 = vld [vmem:[%s1 + $0x60] sm:$0xff]
  %v18 = vld [vmem:[%s1 + $0x78] sm:$0xff]
  %v19 = vld [vmem:[%s1 + $0x90] sm:$0xff]
  %v20 = vld [vmem:[%s1 + $0xa8] sm:$0xff]
  %v21 = vld [vmem:[%s0] sm:$0xff]
  %v22 = vld [vmem:[%s0 + $0x8] sm:$0xff]
  %v23 = vld [vmem:[%s0 + $0x10] sm:$0xff]
  %v24 = vld [vmem:[%s0 + $0x18] sm:$0xff]
  %vm25 = vcmask 261120
  %v27 = vsel %vm25, %v13, 0
  %v30 = vsel %vm25, %v14, 0
  %v33 = vsel %vm25, %v15, 0
  %v36 = vsel %vm25, %v16, 0
  %v39 = vsel %vm25, %v17, 0
  %v42 = vsel %vm25, %v18, 0
  %v45 = vsel %vm25, %v19, 0
  %v48 = vsel %vm25, %v20, 0
  %50 = vmatprep.subr.mxu0 0.0
  %51 = vmatpush1.msra.mxu0 0.0
  %52 = vmatprep.subr.mxu0 0.0
  %53 = vmatpush1.msra.mxu0 0.0
  %54 = vmatprep.subr.mxu0 0.0
  %55 = vmatpush1.msra.mxu0 0.0
  %56 = vmatprep.subr.mxu0 0.0
  %57 = vmatpush1.msra.mxu0 0.0
  %58 = vmatprep.subr.mxu0 0.0
  %59 = vmatpush1.msra.mxu0 0.0
  %60 = vmatprep.subr.mxu0 0.0
  %61 = vmatpush1.msra.mxu0 0.0
  %62 = vmatprep.subr.mxu0 0.0
  %63 = vmatpush1.msra.mxu0 0.0
  %64 = vmatprep.subr.mxu0 0.0
  %65 = vmatpush1.msra.mxu0 0.0
  %66 = vmatprep.subr.mxu0 0.0
  %67 = vmatpush1.msra.mxu0 0.0
  %68 = vmatprep.subr.mxu0 0.0
  %69 = vmatpush1.msra.mxu0 0.0
  %70 = vmatprep.subr.mxu0 0.0
  %71 = vmatpush1.msra.mxu0 0.0
  %72 = vmatprep.subr.mxu0 0.0
  %73 = vmatpush1.msra.mxu0 0.0
  %74 = vmatprep.subr.mxu0 0.0
  %75 = vmatpush1.msra.mxu0 %v24
  %76 = vmatprep.subr.mxu0 0.0
  %77 = vmatpush1.msra.mxu0 %v23
  %78 = vmatprep.subr.mxu0 0.0
  %79 = vmatpush1.msra.mxu0 %v22
  %80 = vmatprep.subr.mxu0 0.0
  %81 = vmatpush1.msra.mxu0 %v21
  %82 = vmatprep.subr.mxu0 0.0
  %83 = vmatpush2.msra.mxu0 0.0
  %84 = vmatprep.subr.mxu0 0.0
  %85 = vmatpush2.msra.mxu0 0.0
  %86 = vmatprep.subr.mxu0 0.0
  %87 = vmatpush2.msra.mxu0 0.0
  %88 = vmatprep.subr.mxu0 0.0
  %89 = vmatpush2.msra.mxu0 0.0
  %90 = vmatprep.subr.mxu0 0.0
  %91 = vmatpush2.msra.mxu0 0.0
  %92 = vmatprep.subr.mxu0 0.0
  %93 = vmatpush2.msra.mxu0 0.0
  %94 = vmatprep.subr.mxu0 0.0
  %95 = vmatpush2.msra.mxu0 0.0
  %96 = vmatprep.subr.mxu0 0.0
  %97 = vmatpush2.msra.mxu0 0.0
  %98 = vmatprep.subr.mxu0 0.0
  %99 = vmatpush2.msra.mxu0 0.0
  %100 = vmatprep.subr.mxu0 0.0
  %101 = vmatpush2.msra.mxu0 0.0
  %102 = vmatprep.subr.mxu0 0.0
  %103 = vmatpush2.msra.mxu0 0.0
  %104 = vmatprep.subr.mxu0 0.0
  %105 = vmatpush2.msra.mxu0 0.0
  %106 = vmatprep.subr.mxu0 0.0
  %107 = vmatpush2.msra.mxu0 0.0
  %108 = vmatprep.subr.mxu0 0.0
  %109 = vmatpush2.msra.mxu0 0.0
  %110 = vmatprep.subr.mxu0 0.0
  %111 = vmatpush2.msra.mxu0 0.0
  %112 = vmatprep.subr.mxu0 0.0
  %113 = vmatpush2.msra.mxu0 0.0
  %114 = vmatprep.mubr.f32.mxu0 0.0
  %115 = vmatmul.mubr.f32.gmra.mxu0 %v27
  %v116 = vpop.f32.mrf.mxu0
  %v117 = vadd.f32 0.0, %v116
  %v118 = vpop.f32.mrf.mxu0
  %119 = vmatprep.mubr.f32.mxu0 0.0
  %120 = vmatmul.mubr.f32.gmra.mxu0 %v30
  %v121 = vpop.f32.mrf.mxu0
  %v122 = vadd.f32 0.0, %v121
  %v123 = vpop.f32.mrf.mxu0
  %124 = vmatprep.mubr.f32.mxu0 0.0
  %125 = vmatmul.mubr.f32.gmra.mxu0 %v33
  %v126 = vpop.f32.mrf.mxu0
  %v127 = vadd.f32 0.0, %v126
  %v128 = vpop.f32.mrf.mxu0
  %129 = vmatprep.mubr.f32.mxu0 0.0
  %130 = vmatmul.mubr.f32.gmra.mxu0 %v36
  %v131 = vpop.f32.mrf.mxu0
  %v132 = vadd.f32 0.0, %v131
  %v133 = vpop.f32.mrf.mxu0
  %134 = vmatprep.mubr.f32.mxu0 0.0
  %135 = vmatmul.mubr.f32.gmra.mxu0 %v39
  %v136 = vpop.f32.mrf.mxu0
  %v137 = vadd.f32 0.0, %v136
  %v138 = vpop.f32.mrf.mxu0
  %139 = vmatprep.mubr.f32.mxu0 0.0
  %140 = vmatmul.mubr.f32.gmra.mxu0 %v42
  %v141 = vpop.f32.mrf.mxu0
  %v142 = vadd.f32 0.0, %v141
  %v143 = vpop.f32.mrf.mxu0
  %144 = vmatprep.mubr.f32.mxu0 0.0
  %145 = vmatmul.mubr.f32.gmra.mxu0 %v45
  %v146 = vpop.f32.mrf.mxu0
  %v147 = vadd.f32 0.0, %v146
  %v148 = vpop.f32.mrf.mxu0
  %149 = vmatprep.mubr.f32.mxu0 0.0
  %150 = vmatmul.mubr.f32.gmra.mxu0 %v48
  %v151 = vpop.f32.mrf.mxu0
  %v152 = vadd.f32 0.0, %v151
  %v153 = vpop.f32.mrf.mxu0
  %154 = vdwg.mxu0
  %v155 = vmax.f32 %v117, 0.0
  %v156 = vmax.f32 %v122, 0.0
  %v157 = vmax.f32 %v127, 0.0
  %v158 = vmax.f32 %v132, 0.0
  %v159 = vmax.f32 %v137, 0.0
  %v160 = vmax.f32 %v142, 0.0
  %v161 = vmax.f32 %v147, 0.0
  %v162 = vmax.f32 %v152, 0.0
  %171 = vrot.lane.b32.xlu0 %v155, 127
  %v172 = vpop.permute.xlu0 %171
  %173 = vrot.lane.b32.xlu0 %v156, 127
  %v174 = vpop.permute.xlu0 %173
  %175 = vrot.lane.b32.xlu0 %v157, 127
  %v176 = vpop.permute.xlu0 %175
  %177 = vrot.lane.b32.xlu0 %v158, 127
  %v178 = vpop.permute.xlu0 %177
  %179 = vrot.lane.b32.xlu0 %v159, 127
  %v180 = vpop.permute.xlu0 %179
  %181 = vrot.lane.b32.xlu0 %v160, 127
  %v182 = vpop.permute.xlu0 %181
  %183 = vrot.lane.b32.xlu0 %v161, 127
  %v184 = vpop.permute.xlu0 %183
  %185 = vrot.lane.b32.xlu0 %v162, 127
  %v186 = vpop.permute.xlu0 %185
  %195 = vrot.lane.b32.xlu0 %v155, 126
  %v196 = vpop.permute.xlu0 %195
  %197 = vrot.lane.b32.xlu0 %v156, 126
  %v198 = vpop.permute.xlu0 %197
  %199 = vrot.lane.b32.xlu0 %v157, 126
  %v200 = vpop.permute.xlu0 %199
  %201 = vrot.lane.b32.xlu0 %v158, 126
  %v202 = vpop.permute.xlu0 %201
  %203 = vrot.lane.b32.xlu0 %v159, 126
  %v204 = vpop.permute.xlu0 %203
  %205 = vrot.lane.b32.xlu0 %v160, 126
  %v206 = vpop.permute.xlu0 %205
  %207 = vrot.lane.b32.xlu0 %v161, 126
  %v208 = vpop.permute.xlu0 %207
  %209 = vrot.lane.b32.xlu0 %v162, 126
  %v210 = vpop.permute.xlu0 %209
  %219 = vrot.lane.b32.xlu0 %v155, 125
  %v220 = vpop.permute.xlu0 %219
  %221 = vrot.lane.b32.xlu0 %v156, 125
  %v222 = vpop.permute.xlu0 %221
  %223 = vrot.lane.b32.xlu0 %v157, 125
  %v224 = vpop.permute.xlu0 %223
  %225 = vrot.lane.b32.xlu0 %v158, 125
  %v226 = vpop.permute.xlu0 %225
  %227 = vrot.lane.b32.xlu0 %v159, 125
  %v228 = vpop.permute.xlu0 %227
  %229 = vrot.lane.b32.xlu0 %v160, 125
  %v230 = vpop.permute.xlu0 %229
  %231 = vrot.lane.b32.xlu0 %v161, 125
  %v232 = vpop.permute.xlu0 %231
  %233 = vrot.lane.b32.xlu0 %v162, 125
  %v234 = vpop.permute.xlu0 %233
  %243 = vrot.lane.b32.xlu0 %v155, 124
  %v244 = vpop.permute.xlu0 %243
  %245 = vrot.lane.b32.xlu0 %v156, 124
  %v246 = vpop.permute.xlu0 %245
  %247 = vrot.lane.b32.xlu0 %v157, 124
  %v248 = vpop.permute.xlu0 %247
  %249 = vrot.lane.b32.xlu0 %v158, 124
  %v250 = vpop.permute.xlu0 %249
  %251 = vrot.lane.b32.xlu0 %v159, 124
  %v252 = vpop.permute.xlu0 %251
  %253 = vrot.lane.b32.xlu0 %v160, 124
  %v254 = vpop.permute.xlu0 %253
  %255 = vrot.lane.b32.xlu0 %v161, 124
  %v256 = vpop.permute.xlu0 %255
  %257 = vrot.lane.b32.xlu0 %v162, 124
  %v258 = vpop.permute.xlu0 %257
  %v267 = vld [vmem:[%s1 + $0xc0] sm:$0xff]
  %v268 = vld [vmem:[%s1 + $0xc8] sm:$0xff]
  %v269 = vld [vmem:[%s1 + $0xd0] sm:$0xff]
  %v270 = vld [vmem:[%s1 + $0xd8] sm:$0xff]
  %v271 = vld [vmem:[%s1 + $0xe0] sm:$0xff]
  %v272 = vld [vmem:[%s1 + $0xe8] sm:$0xff]
  %v273 = vld [vmem:[%s1 + $0xf0] sm:$0xff]
  %v274 = vld [vmem:[%s1 + $0xf8] sm:$0xff]
  %v275 = vld [vmem:[%s1 + $0x100] sm:$0xff]
  %v276 = vld [vmem:[%s1 + $0x108] sm:$0xff]
  %v277 = vld [vmem:[%s1 + $0x110] sm:$0xff]
  %v278 = vld [vmem:[%s1 + $0x118] sm:$0xff]
  %vm279 = vcmask 588800
  %v281 = vsel %vm279, %v269, 0
  %v284 = vsel %vm279, %v272, 0
  %v287 = vsel %vm279, %v275, 0
  %v290 = vsel %vm279, %v278, 0
  %292 = vmatprep.subr.mxu0 0.0
  %293 = vmatpush1.msra.mxu0 %v186
  %294 = vmatprep.subr.mxu0 0.0
  %295 = vmatpush1.msra.mxu0 %v184
  %296 = vmatprep.subr.mxu0 0.0
  %297 = vmatpush1.msra.mxu0 %v182
  %298 = vmatprep.subr.mxu0 0.0
  %299 = vmatpush1.msra.mxu0 %v180
  %300 = vmatprep.subr.mxu0 0.0
  %301 = vmatpush1.msra.mxu0 %v178
  %302 = vmatprep.subr.mxu0 0.0
  %303 = vmatpush1.msra.mxu0 %v176
  %304 = vmatprep.subr.mxu0 0.0
  %305 = vmatpush1.msra.mxu0 %v174
  %306 = vmatprep.subr.mxu0 0.0
  %307 = vmatpush1.msra.mxu0 %v172
  %308 = vmatprep.subr.mxu0 0.0
  %309 = vmatpush1.msra.mxu0 %v162
  %310 = vmatprep.subr.mxu0 0.0
  %311 = vmatpush1.msra.mxu0 %v161
  %312 = vmatprep.subr.mxu0 0.0
  %313 = vmatpush1.msra.mxu0 %v160
  %314 = vmatprep.subr.mxu0 0.0
  %315 = vmatpush1.msra.mxu0 %v159
  %316 = vmatprep.subr.mxu0 0.0
  %317 = vmatpush1.msra.mxu0 %v158
  %318 = vmatprep.subr.mxu0 0.0
  %319 = vmatpush1.msra.mxu0 %v157
  %320 = vmatprep.subr.mxu0 0.0
  %321 = vmatpush1.msra.mxu0 %v156
  %322 = vmatprep.subr.mxu0 0.0
  %323 = vmatpush1.msra.mxu0 %v155
  %324 = vmatprep.subr.mxu0 0.0
  %325 = vmatpush2.msra.mxu0 %v234
  %326 = vmatprep.subr.mxu0 0.0
  %327 = vmatpush2.msra.mxu0 %v232
  %328 = vmatprep.subr.mxu0 0.0
  %329 = vmatpush2.msra.mxu0 %v230
  %330 = vmatprep.subr.mxu0 0.0
  %331 = vmatpush2.msra.mxu0 %v228
  %332 = vmatprep.subr.mxu0 0.0
  %333 = vmatpush2.msra.mxu0 %v226
  %334 = vmatprep.subr.mxu0 0.0
  %335 = vmatpush2.msra.mxu0 %v224
  %336 = vmatprep.subr.mxu0 0.0
  %337 = vmatpush2.msra.mxu0 %v222
  %338 = vmatprep.subr.mxu0 0.0
  %339 = vmatpush2.msra.mxu0 %v220
  %340 = vmatprep.subr.mxu0 0.0
  %341 = vmatpush2.msra.mxu0 %v210
  %342 = vmatprep.subr.mxu0 0.0
  %343 = vmatpush2.msra.mxu0 %v208
  %344 = vmatprep.subr.mxu0 0.0
  %345 = vmatpush2.msra.mxu0 %v206
  %346 = vmatprep.subr.mxu0 0.0
  %347 = vmatpush2.msra.mxu0 %v204
  %348 = vmatprep.subr.mxu0 0.0
  %349 = vmatpush2.msra.mxu0 %v202
  %350 = vmatprep.subr.mxu0 0.0
  %351 = vmatpush2.msra.mxu0 %v200
  %352 = vmatprep.subr.mxu0 0.0
  %353 = vmatpush2.msra.mxu0 %v198
  %354 = vmatprep.subr.mxu0 0.0
  %355 = vmatpush2.msra.mxu0 %v196
  %356 = vmatprep.mubr.f32.mxu0 %v268
  %357 = vmatmul.mubr.f32.gmra.mxu0 %v267
  %v358 = vpop.f32.mrf.mxu0
  %v359 = vadd.f32 0.0, %v358
  %v360 = vpop.f32.mrf.mxu0
  %361 = vmatprep.mubr.f32.mxu0 %v271
  %362 = vmatmul.mubr.f32.gmra.mxu0 %v270
  %v363 = vpop.f32.mrf.mxu0
  %v364 = vadd.f32 0.0, %v363
  %v365 = vpop.f32.mrf.mxu0
  %366 = vmatprep.mubr.f32.mxu0 %v274
  %367 = vmatmul.mubr.f32.gmra.mxu0 %v273
  %v368 = vpop.f32.mrf.mxu0
  %v369 = vadd.f32 0.0, %v368
  %v370 = vpop.f32.mrf.mxu0
  %371 = vmatprep.mubr.f32.mxu0 %v277
  %372 = vmatmul.mubr.f32.gmra.mxu0 %v276
  %v373 = vpop.f32.mrf.mxu0
  %v374 = vadd.f32 0.0, %v373
  %v375 = vpop.f32.mrf.mxu0
  %376 = vdwg.mxu0
  %377 = vmatprep.subr.mxu0 0.0
  %378 = vmatpush1.msra.mxu0 0.0
  %379 = vmatprep.subr.mxu0 0.0
  %380 = vmatpush1.msra.mxu0 0.0
  %381 = vmatprep.subr.mxu0 0.0
  %382 = vmatpush1.msra.mxu0 0.0
  %383 = vmatprep.subr.mxu0 0.0
  %384 = vmatpush1.msra.mxu0 0.0
  %385 = vmatprep.subr.mxu0 0.0
  %386 = vmatpush1.msra.mxu0 0.0
  %387 = vmatprep.subr.mxu0 0.0
  %388 = vmatpush1.msra.mxu0 0.0
  %389 = vmatprep.subr.mxu0 0.0
  %390 = vmatpush1.msra.mxu0 0.0
  %391 = vmatprep.subr.mxu0 0.0
  %392 = vmatpush1.msra.mxu0 %v12
  %393 = vmatprep.subr.mxu0 0.0
  %394 = vmatpush1.msra.mxu0 %v258
  %395 = vmatprep.subr.mxu0 0.0
  %396 = vmatpush1.msra.mxu0 %v256
  %397 = vmatprep.subr.mxu0 0.0
  %398 = vmatpush1.msra.mxu0 %v254
  %399 = vmatprep.subr.mxu0 0.0
  %400 = vmatpush1.msra.mxu0 %v252
  %401 = vmatprep.subr.mxu0 0.0
  %402 = vmatpush1.msra.mxu0 %v250
  %403 = vmatprep.subr.mxu0 0.0
  %404 = vmatpush1.msra.mxu0 %v248
  %405 = vmatprep.subr.mxu0 0.0
  %406 = vmatpush1.msra.mxu0 %v246
  %407 = vmatprep.subr.mxu0 0.0
  %408 = vmatpush1.msra.mxu0 %v244
  %409 = vmatprep.subr.mxu0 0.0
  %410 = vmatpush2.msra.mxu0 0.0
  %411 = vmatprep.subr.mxu0 0.0
  %412 = vmatpush2.msra.mxu0 0.0
  %413 = vmatprep.subr.mxu0 0.0
  %414 = vmatpush2.msra.mxu0 0.0
  %415 = vmatprep.subr.mxu0 0.0
  %416 = vmatpush2.msra.mxu0 0.0
  %417 = vmatprep.subr.mxu0 0.0
  %418 = vmatpush2.msra.mxu0 0.0
  %419 = vmatprep.subr.mxu0 0.0
  %420 = vmatpush2.msra.mxu0 0.0
  %421 = vmatprep.subr.mxu0 0.0
  %422 = vmatpush2.msra.mxu0 0.0
  %423 = vmatprep.subr.mxu0 0.0
  %424 = vmatpush2.msra.mxu0 0.0
  %425 = vmatprep.subr.mxu0 0.0
  %426 = vmatpush2.msra.mxu0 0.0
  %427 = vmatprep.subr.mxu0 0.0
  %428 = vmatpush2.msra.mxu0 0.0
  %429 = vmatprep.subr.mxu0 0.0
  %430 = vmatpush2.msra.mxu0 0.0
  %431 = vmatprep.subr.mxu0 0.0
  %432 = vmatpush2.msra.mxu0 0.0
  %433 = vmatprep.subr.mxu0 0.0
  %434 = vmatpush2.msra.mxu0 0.0
  %435 = vmatprep.subr.mxu0 0.0
  %436 = vmatpush2.msra.mxu0 0.0
  %437 = vmatprep.subr.mxu0 0.0
  %438 = vmatpush2.msra.mxu0 0.0
  %439 = vmatprep.subr.mxu0 0.0
  %440 = vmatpush2.msra.mxu0 0.0
  %441 = vmatprep.mubr.f32.mxu0 0.0
  %442 = vmatmul.mubr.f32.gmra.mxu0 %v281
  %v443 = vpop.f32.mrf.mxu0
  %v444 = vadd.f32 %v359, %v443
  %v445 = vpop.f32.mrf.mxu0
  %446 = vmatprep.mubr.f32.mxu0 0.0
  %447 = vmatmul.mubr.f32.gmra.mxu0 %v284
  %v448 = vpop.f32.mrf.mxu0
  %v449 = vadd.f32 %v364, %v448
  %v450 = vpop.f32.mrf.mxu0
  %451 = vmatprep.mubr.f32.mxu0 0.0
  %452 = vmatmul.mubr.f32.gmra.mxu0 %v287
  %v453 = vpop.f32.mrf.mxu0
  %v454 = vadd.f32 %v369, %v453
  %v455 = vpop.f32.mrf.mxu0
  %456 = vmatprep.mubr.f32.mxu0 0.0
  %457 = vmatmul.mubr.f32.gmra.mxu0 %v290
  %v458 = vpop.f32.mrf.mxu0
  %v459 = vadd.f32 %v374, %v458
  %v460 = vpop.f32.mrf.mxu0
  %461 = vdwg.mxu0
  %v462 = vmax.f32 %v444, 0.0
  %v463 = vmax.f32 %v449, 0.0
  %v464 = vmax.f32 %v454, 0.0
  %v465 = vmax.f32 %v459, 0.0
  %470 = vrot.lane.b32.xlu0 %v462, 127
  %v471 = vpop.permute.xlu0 %470
  %472 = vrot.lane.b32.xlu0 %v463, 127
  %v473 = vpop.permute.xlu0 %472
  %474 = vrot.lane.b32.xlu0 %v464, 127
  %v475 = vpop.permute.xlu0 %474
  %476 = vrot.lane.b32.xlu0 %v465, 127
  %v477 = vpop.permute.xlu0 %476
  %482 = vrot.lane.b32.xlu0 %v462, 126
  %v483 = vpop.permute.xlu0 %482
  %484 = vrot.lane.b32.xlu0 %v463, 126
  %v485 = vpop.permute.xlu0 %484
  %486 = vrot.lane.b32.xlu0 %v464, 126
  %v487 = vpop.permute.xlu0 %486
  %488 = vrot.lane.b32.xlu0 %v465, 126
  %v489 = vpop.permute.xlu0 %488
  %494 = vrot.lane.b32.xlu0 %v462, 125
  %v495 = vpop.permute.xlu0 %494
  %496 = vrot.lane.b32.xlu0 %v463, 125
  %v497 = vpop.permute.xlu0 %496
  %498 = vrot.lane.b32.xlu0 %v464, 125
  %v499 = vpop.permute.xlu0 %498
  %500 = vrot.lane.b32.xlu0 %v465, 125
  %v501 = vpop.permute.xlu0 %500
  %506 = vrot.lane.b32.xlu0 %v462, 124
  %v507 = vpop.permute.xlu0 %506
  %508 = vrot.lane.b32.xlu0 %v463, 124
  %v509 = vpop.permute.xlu0 %508
  %510 = vrot.lane.b32.xlu0 %v464, 124
  %v511 = vpop.permute.xlu0 %510
  %512 = vrot.lane.b32.xlu0 %v465, 124
  %v513 = vpop.permute.xlu0 %512
  %518 = vrot.lane.b32.xlu0 %v462, 123
  %v519 = vpop.permute.xlu0 %518
  %520 = vrot.lane.b32.xlu0 %v463, 123
  %v521 = vpop.permute.xlu0 %520
  %522 = vrot.lane.b32.xlu0 %v464, 123
  %v523 = vpop.permute.xlu0 %522
  %524 = vrot.lane.b32.xlu0 %v465, 123
  %v525 = vpop.permute.xlu0 %524
  %530 = vrot.lane.b32.xlu0 %v462, 122
  %v531 = vpop.permute.xlu0 %530
  %532 = vrot.lane.b32.xlu0 %v463, 122
  %v533 = vpop.permute.xlu0 %532
  %534 = vrot.lane.b32.xlu0 %v464, 122
  %v535 = vpop.permute.xlu0 %534
  %536 = vrot.lane.b32.xlu0 %v465, 122
  %v537 = vpop.permute.xlu0 %536
  %v542 = vld [vmem:[%s1 + $0x120] sm:$0xff]
  %v543 = vld [vmem:[%s1 + $0x128] sm:$0xff]
  %v544 = vld [vmem:[%s1 + $0x138] sm:$0xff]
  %v545 = vld [vmem:[%s1 + $0x140] sm:$0xff]
  %vm546 = vcmask 850944
  %v548 = vsel %vm546, %v543, 0
  %v551 = vsel %vm546, %v545, 0
  %553 = vmatprep.subr.mxu0 0.0
  %554 = vmatpush1.msra.mxu0 %v501
  %555 = vmatprep.subr.mxu0 0.0
  %556 = vmatpush1.msra.mxu0 %v499
  %557 = vmatprep.subr.mxu0 0.0
  %558 = vmatpush1.msra.mxu0 %v497
  %559 = vmatprep.subr.mxu0 0.0
  %560 = vmatpush1.msra.mxu0 %v495
  %561 = vmatprep.subr.mxu0 0.0
  %562 = vmatpush1.msra.mxu0 %v489
  %563 = vmatprep.subr.mxu0 0.0
  %564 = vmatpush1.msra.mxu0 %v487
  %565 = vmatprep.subr.mxu0 0.0
  %566 = vmatpush1.msra.mxu0 %v485
  %567 = vmatprep.subr.mxu0 0.0
  %568 = vmatpush1.msra.mxu0 %v483
  %569 = vmatprep.subr.mxu0 0.0
  %570 = vmatpush1.msra.mxu0 %v477
  %571 = vmatprep.subr.mxu0 0.0
  %572 = vmatpush1.msra.mxu0 %v475
  %573 = vmatprep.subr.mxu0 0.0
  %574 = vmatpush1.msra.mxu0 %v473
  %575 = vmatprep.subr.mxu0 0.0
  %576 = vmatpush1.msra.mxu0 %v471
  %577 = vmatprep.subr.mxu0 0.0
  %578 = vmatpush1.msra.mxu0 %v465
  %579 = vmatprep.subr.mxu0 0.0
  %580 = vmatpush1.msra.mxu0 %v464
  %581 = vmatprep.subr.mxu0 0.0
  %582 = vmatpush1.msra.mxu0 %v463
  %583 = vmatprep.subr.mxu0 0.0
  %584 = vmatpush1.msra.mxu0 %v462
  %585 = vmatprep.subr.mxu0 0.0
  %586 = vmatpush2.msra.mxu0 0.0
  %587 = vmatprep.subr.mxu0 0.0
  %588 = vmatpush2.msra.mxu0 0.0
  %589 = vmatprep.subr.mxu0 0.0
  %590 = vmatpush2.msra.mxu0 0.0
  %591 = vmatprep.subr.mxu0 0.0
  %592 = vmatpush2.msra.mxu0 %v12
  %593 = vmatprep.subr.mxu0 0.0
  %594 = vmatpush2.msra.mxu0 %v537
  %595 = vmatprep.subr.mxu0 0.0
  %596 = vmatpush2.msra.mxu0 %v535
  %597 = vmatprep.subr.mxu0 0.0
  %598 = vmatpush2.msra.mxu0 %v533
  %599 = vmatprep.subr.mxu0 0.0
  %600 = vmatpush2.msra.mxu0 %v531
  %601 = vmatprep.subr.mxu0 0.0
  %602 = vmatpush2.msra.mxu0 %v525
  %603 = vmatprep.subr.mxu0 0.0
  %604 = vmatpush2.msra.mxu0 %v523
  %605 = vmatprep.subr.mxu0 0.0
  %606 = vmatpush2.msra.mxu0 %v521
  %607 = vmatprep.subr.mxu0 0.0
  %608 = vmatpush2.msra.mxu0 %v519
  %609 = vmatprep.subr.mxu0 0.0
  %610 = vmatpush2.msra.mxu0 %v513
  %611 = vmatprep.subr.mxu0 0.0
  %612 = vmatpush2.msra.mxu0 %v511
  %613 = vmatprep.subr.mxu0 0.0
  %614 = vmatpush2.msra.mxu0 %v509
  %615 = vmatprep.subr.mxu0 0.0
  %616 = vmatpush2.msra.mxu0 %v507
  %617 = vmatprep.mubr.f32.mxu0 %v548
  %618 = vmatmul.mubr.f32.gmra.mxu0 %v542
  %v619 = vpop.f32.mrf.mxu0
  %v620 = vadd.f32 0.0, %v619
  %v621 = vpop.f32.mrf.mxu0
  %622 = vmatprep.mubr.f32.mxu0 %v551
  %623 = vmatmul.mubr.f32.gmra.mxu0 %v544
  %v624 = vpop.f32.mrf.mxu0
  %v625 = vadd.f32 0.0, %v624
  %v626 = vpop.f32.mrf.mxu0
  %627 = vdwg.mxu0
  %v628 = vmax.f32 %v620, 0.0
  %v629 = vmax.f32 %v625, 0.0
  %v631 = vrot.slane %v628, 2
  %632 = vrot.lane.b32.xlu0 %v631, 20
  %v633 = vpop.permute.xlu0 %632
  %v635 = vrot.slane %v628, 4
  %636 = vrot.lane.b32.xlu0 %v635, 40
  %v637 = vpop.permute.xlu0 %636
  %v639 = vrot.slane %v628, 6
  %640 = vrot.lane.b32.xlu0 %v639, 60
  %v641 = vpop.permute.xlu0 %640
  %644 = vrot.lane.b32.xlu0 %v629, 80
  %v645 = vpop.permute.xlu0 %644
  %v647 = vrot.slane %v629, 2
  %648 = vrot.lane.b32.xlu0 %v647, 100
  %v649 = vpop.permute.xlu0 %648
  %v651 = vrot.slane %v629, 4
  %652 = vrot.lane.b32.xlu0 %v651, 120
  %v653 = vpop.permute.xlu0 %652
  %v655 = vrot.slane %v629, 6
  %656 = vrot.lane.b32.xlu0 %v655, 12
  %v657 = vpop.permute.xlu0 %656
  %vm659 = vcmask 162816
  %v660 = vsel %vm659, %v628, %v633
  %vm661 = vcmask 326656
  %v662 = vsel %vm661, %v660, %v637
  %vm663 = vcmask 490496
  %v664 = vsel %vm663, %v662, %v641
  %vm665 = vcmask 654336
  %v666 = vsel %vm665, %v664, %v645
  %vm667 = vcmask 818176
  %v668 = vsel %vm667, %v666, %v649
  %vm669 = vcmask 982016
  %v670 = vsel %vm669, %v668, %v653
  %vm671 = vcmask 97280
  %v672 = vsel %vm671, %v653, %v657
  %v673 = vld [vmem:[%s0 + $0x18] sm:$0x3]
  %v674 = vld [vmem:[%s1 + $0x540] sm:$0xff]
  %v675 = vld [vmem:[%s1 + $0x548] sm:$0xff]
  %v676 = vld [vmem:[%s1 + $0x288] sm:$0xff]
  %v677 = vld [vmem:[%s1 + $0x2a0] sm:$0xff]
  %v678 = vld [vmem:[%s1 + $0x2b8] sm:$0xff]
  %v679 = vld [vmem:[%s1 + $0x2d0] sm:$0xff]
  %v680 = vld [vmem:[%s1 + $0x2e8] sm:$0xff]
  %v681 = vld [vmem:[%s1 + $0x300] sm:$0xff]
  %v682 = vld [vmem:[%s1 + $0x318] sm:$0xff]
  %v683 = vld [vmem:[%s1 + $0x330] sm:$0xff]
  %v684 = vld [vmem:[%s1 + $0x348] sm:$0xff]
  %v685 = vld [vmem:[%s1 + $0x360] sm:$0xff]
  %v686 = vld [vmem:[%s1 + $0x378] sm:$0xff]
  %v687 = vld [vmem:[%s1 + $0x390] sm:$0xff]
  %v688 = vld [vmem:[%s1 + $0x3a8] sm:$0xff]
  %v689 = vld [vmem:[%s1 + $0x3c0] sm:$0xff]
  %v690 = vld [vmem:[%s1 + $0x3d8] sm:$0xff]
  %v691 = vld [vmem:[%s1 + $0x3f0] sm:$0xff]
  %v692 = vld [vmem:[%s1 + $0x408] sm:$0xff]
  %v693 = vld [vmem:[%s1 + $0x420] sm:$0xff]
  %v694 = vld [vmem:[%s1 + $0x438] sm:$0xff]
  %v695 = vld [vmem:[%s1 + $0x450] sm:$0xff]
  %697 = vset.pattern.permute.xlu0 0
  %698 = vperm.xlu0 %697, %v673
  %v699 = vpop.permute.xlu0 %698
  %v701 = vlaneseq
  %v702 = vshrl.u32 %v701, 7
  %v703 = vsub.s32 1, %v702
  %v704 = vrot.slane %v674, %v703
  %v705 = vmul.f32 %v699, %v704
  %v707 = vsel %vm25, %v672, 0
  %709 = vmatprep.subr.mxu0 0.0
  %710 = vmatpush1.msra.mxu0 %v691
  %711 = vmatprep.subr.mxu0 0.0
  %712 = vmatpush1.msra.mxu0 %v690
  %713 = vmatprep.subr.mxu0 0.0
  %714 = vmatpush1.msra.mxu0 %v689
  %715 = vmatprep.subr.mxu0 0.0
  %716 = vmatpush1.msra.mxu0 %v688
  %717 = vmatprep.subr.mxu0 0.0
  %718 = vmatpush1.msra.mxu0 %v687
  %719 = vmatprep.subr.mxu0 0.0
  %720 = vmatpush1.msra.mxu0 %v686
  %721 = vmatprep.subr.mxu0 0.0
  %722 = vmatpush1.msra.mxu0 %v685
  %723 = vmatprep.subr.mxu0 0.0
  %724 = vmatpush1.msra.mxu0 %v684
  %725 = vmatprep.subr.mxu0 0.0
  %726 = vmatpush1.msra.mxu0 %v683
  %727 = vmatprep.subr.mxu0 0.0
  %728 = vmatpush1.msra.mxu0 %v682
  %729 = vmatprep.subr.mxu0 0.0
  %730 = vmatpush1.msra.mxu0 %v681
  %731 = vmatprep.subr.mxu0 0.0
  %732 = vmatpush1.msra.mxu0 %v680
  %733 = vmatprep.subr.mxu0 0.0
  %734 = vmatpush1.msra.mxu0 %v679
  %735 = vmatprep.subr.mxu0 0.0
  %736 = vmatpush1.msra.mxu0 %v678
  %737 = vmatprep.subr.mxu0 0.0
  %738 = vmatpush1.msra.mxu0 %v677
  %739 = vmatprep.subr.mxu0 0.0
  %740 = vmatpush1.msra.mxu0 %v676
  %741 = vmatprep.subr.mxu0 0.0
  %742 = vmatpush2.msra.mxu0 0.0
  %743 = vmatprep.subr.mxu0 0.0
  %744 = vmatpush2.msra.mxu0 0.0
  %745 = vmatprep.subr.mxu0 0.0
  %746 = vmatpush2.msra.mxu0 0.0
  %747 = vmatprep.subr.mxu0 0.0
  %748 = vmatpush2.msra.mxu0 0.0
  %749 = vmatprep.subr.mxu0 0.0
  %750 = vmatpush2.msra.mxu0 0.0
  %751 = vmatprep.subr.mxu0 0.0
  %752 = vmatpush2.msra.mxu0 0.0
  %753 = vmatprep.subr.mxu0 0.0
  %754 = vmatpush2.msra.mxu0 0.0
  %755 = vmatprep.subr.mxu0 0.0
  %756 = vmatpush2.msra.mxu0 0.0
  %757 = vmatprep.subr.mxu0 0.0
  %758 = vmatpush2.msra.mxu0 0.0
  %759 = vmatprep.subr.mxu0 0.0
  %760 = vmatpush2.msra.mxu0 0.0
  %761 = vmatprep.subr.mxu0 0.0
  %762 = vmatpush2.msra.mxu0 0.0
  %763 = vmatprep.subr.mxu0 0.0
  %764 = vmatpush2.msra.mxu0 0.0
  %765 = vmatprep.subr.mxu0 0.0
  %766 = vmatpush2.msra.mxu0 %v695
  %767 = vmatprep.subr.mxu0 0.0
  %768 = vmatpush2.msra.mxu0 %v694
  %769 = vmatprep.subr.mxu0 0.0
  %770 = vmatpush2.msra.mxu0 %v693
  %771 = vmatprep.subr.mxu0 0.0
  %772 = vmatpush2.msra.mxu0 %v692
  %773 = vmatprep.mubr.f32.mxu0 %v707
  %774 = vmatmul.mubr.f32.gmra.mxu0 %v670
  %v775 = vpop.f32.mrf.mxu0
  %v776 = vadd.f32 %v705, %v775
  %v777 = vpop.f32.mrf.mxu0
  %778 = vdwg.mxu0
  %v779 = vlaneseq
  %v780 = vshrl.u32 %v779, 7
  %v781 = vsub.s32 0, %v780
  %v782 = vrot.slane %v674, %v781
  %v783 = vadd.f32 %v776, %v782
  %v784 = vmax.f32 %v783, 0.0
  %v785 = vld [vmem:[%s1 + $0x468] sm:$0xff]
  %v786 = vld [vmem:[%s1 + $0x480] sm:$0xff]
  %v787 = vld [vmem:[%s1 + $0x498] sm:$0xff]
  %v788 = vld [vmem:[%s1 + $0x4b0] sm:$0xff]
  %v789 = vlaneseq
  %v790 = vshrl.u32 %v789, 7
  %v791 = vsub.s32 2, %v790
  %v792 = vrot.slane %v674, %v791
  %v794 = vsel %vm25, %v784, 0
  %796 = vmatprep.subr.mxu0 0.0
  %797 = vmatpush1.msra.mxu0 0.0
  %798 = vmatprep.subr.mxu0 0.0
  %799 = vmatpush1.msra.mxu0 0.0
  %800 = vmatprep.subr.mxu0 0.0
  %801 = vmatpush1.msra.mxu0 0.0
  %802 = vmatprep.subr.mxu0 0.0
  %803 = vmatpush1.msra.mxu0 0.0
  %804 = vmatprep.subr.mxu0 0.0
  %805 = vmatpush1.msra.mxu0 0.0
  %806 = vmatprep.subr.mxu0 0.0
  %807 = vmatpush1.msra.mxu0 0.0
  %808 = vmatprep.subr.mxu0 0.0
  %809 = vmatpush1.msra.mxu0 0.0
  %810 = vmatprep.subr.mxu0 0.0
  %811 = vmatpush1.msra.mxu0 0.0
  %812 = vmatprep.subr.mxu0 0.0
  %813 = vmatpush1.msra.mxu0 0.0
  %814 = vmatprep.subr.mxu0 0.0
  %815 = vmatpush1.msra.mxu0 0.0
  %816 = vmatprep.subr.mxu0 0.0
  %817 = vmatpush1.msra.mxu0 0.0
  %818 = vmatprep.subr.mxu0 0.0
  %819 = vmatpush1.msra.mxu0 0.0
  %820 = vmatprep.subr.mxu0 0.0
  %821 = vmatpush1.msra.mxu0 %v788
  %822 = vmatprep.subr.mxu0 0.0
  %823 = vmatpush1.msra.mxu0 %v787
  %824 = vmatprep.subr.mxu0 0.0
  %825 = vmatpush1.msra.mxu0 %v786
  %826 = vmatprep.subr.mxu0 0.0
  %827 = vmatpush1.msra.mxu0 %v785
  %828 = vmatprep.subr.mxu0 0.0
  %829 = vmatpush2.msra.mxu0 0.0
  %830 = vmatprep.subr.mxu0 0.0
  %831 = vmatpush2.msra.mxu0 0.0
  %832 = vmatprep.subr.mxu0 0.0
  %833 = vmatpush2.msra.mxu0 0.0
  %834 = vmatprep.subr.mxu0 0.0
  %835 = vmatpush2.msra.mxu0 0.0
  %836 = vmatprep.subr.mxu0 0.0
  %837 = vmatpush2.msra.mxu0 0.0
  %838 = vmatprep.subr.mxu0 0.0
  %839 = vmatpush2.msra.mxu0 0.0
  %840 = vmatprep.subr.mxu0 0.0
  %841 = vmatpush2.msra.mxu0 0.0
  %842 = vmatprep.subr.mxu0 0.0
  %843 = vmatpush2.msra.mxu0 0.0
  %844 = vmatprep.subr.mxu0 0.0
  %845 = vmatpush2.msra.mxu0 0.0
  %846 = vmatprep.subr.mxu0 0.0
  %847 = vmatpush2.msra.mxu0 0.0
  %848 = vmatprep.subr.mxu0 0.0
  %849 = vmatpush2.msra.mxu0 0.0
  %850 = vmatprep.subr.mxu0 0.0
  %851 = vmatpush2.msra.mxu0 0.0
  %852 = vmatprep.subr.mxu0 0.0
  %853 = vmatpush2.msra.mxu0 0.0
  %854 = vmatprep.subr.mxu0 0.0
  %855 = vmatpush2.msra.mxu0 0.0
  %856 = vmatprep.subr.mxu0 0.0
  %857 = vmatpush2.msra.mxu0 0.0
  %858 = vmatprep.subr.mxu0 0.0
  %859 = vmatpush2.msra.mxu0 0.0
  %860 = vmatprep.mubr.f32.mxu0 0.0
  %861 = vmatmul.mubr.f32.gmra.mxu0 %v794
  %v862 = vpop.f32.mrf.mxu0
  %v863 = vadd.f32 %v792, %v862
  %v864 = vpop.f32.mrf.mxu0
  %865 = vdwg.mxu0
  %v866 = vmul.f32 %v863, 0.5
  %v867 = vmul.f32 %v866, 1.442695
  %v868 = vpow.pop %v867
  %870 = vrot.lane.b32.xlu0 %v868, 121
  %v871 = vpop.permute.xlu0 %870
  %v873 = vmul.f32 %v673, %v871
  %875 = vrot.lane.b32.xlu0 %v873, 127
  %v876 = vpop.permute.xlu0 %875
  %v878 = vadd.f32 %v863, %v876
  %880 = vrot.lane.b32.xlu0 %v878, 32
  %v881 = vpop.permute.xlu0 %880
  %v883 = vsel %vm25, 0.0, %v881
  %v884 = vsel %vm661, %v883, 0.0
  %v885 = vld [vmem:[%s1 + $0x558] sm:$0xff]
  %v886 = vlaneseq
  %v887 = vshrl.u32 %v886, 7
  %v888 = vsub.s32 0, %v887
  %v889 = vrot.slane %v885, %v888
  %v890 = vmul.f32 %v889, %v884
  %v891 = vlaneseq
  %v892 = vshrl.u32 %v891, 7
  %v893 = vsub.s32 3, %v892
  %v894 = vrot.slane %v885, %v893
  %v895 = vadd.f32 %v894, %v890
  %896 = vrot.lane.b32.xlu0 %v884, 127
  %v897 = vpop.permute.xlu0 %896
  %v898 = vlaneseq
  %v899 = vshrl.u32 %v898, 7
  %v900 = vsub.s32 1, %v899
  %v901 = vrot.slane %v885, %v900
  %v902 = vmul.f32 %v901, %v897
  %v903 = vadd.f32 %v895, %v902
  %904 = vrot.lane.b32.xlu0 %v884, 126
  %v905 = vpop.permute.xlu0 %904
  %v906 = vlaneseq
  %v907 = vshrl.u32 %v906, 7
  %v908 = vsub.s32 2, %v907
  %v909 = vrot.slane %v885, %v908
  %v910 = vmul.f32 %v909, %v905
  %v911 = vadd.f32 %v903, %v910
  %vm912 = vcmp.ge.f32.partialorder %v911, 0.0
  %v913 = vmul.f32 %v911, 0.01
  %v914 = vsel %vm912, %v911, %v913
  %v915 = vlaneseq
  %v916 = vshrl.u32 %v915, 7
  %v917 = vsub.s32 4, %v916
  %v918 = vrot.slane %v885, %v917
  %v919 = vmul.f32 %v918, %v914
  %v920 = vadd.f32 %v884, %v919
  %v921 = vld [vmem:[%s1 + $0x570] sm:$0xff]
  %v922 = vlaneseq
  %v923 = vshrl.u32 %v922, 7
  %v924 = vsub.s32 0, %v923
  %v925 = vrot.slane %v921, %v924
  %v926 = vmul.f32 %v925, %v920
  %v927 = vlaneseq
  %v928 = vshrl.u32 %v927, 7
  %v929 = vsub.s32 3, %v928
  %v930 = vrot.slane %v921, %v929
  %v931 = vadd.f32 %v930, %v926
  %932 = vrot.lane.b32.xlu0 %v920, 126
  %v933 = vpop.permute.xlu0 %932
  %v934 = vlaneseq
  %v935 = vshrl.u32 %v934, 7
  %v936 = vsub.s32 1, %v935
  %v937 = vrot.slane %v921, %v936
  %v938 = vmul.f32 %v937, %v933
  %v939 = vadd.f32 %v931, %v938
  %940 = vrot.lane.b32.xlu0 %v920, 124
  %v941 = vpop.permute.xlu0 %940
  %v942 = vlaneseq
  %v943 = vshrl.u32 %v942, 7
  %v944 = vsub.s32 2, %v943
  %v945 = vrot.slane %v921, %v944
  %v946 = vmul.f32 %v945, %v941
  %v947 = vadd.f32 %v939, %v946
  %vm948 = vcmp.ge.f32.partialorder %v947, 0.0
  %v949 = vmul.f32 %v947, 0.01
  %v950 = vsel %vm948, %v947, %v949
  %v951 = vlaneseq
  %v952 = vshrl.u32 %v951, 7
  %v953 = vsub.s32 4, %v952
  %v954 = vrot.slane %v921, %v953
  %v955 = vmul.f32 %v954, %v950
  %v956 = vadd.f32 %v920, %v955
  %v957 = vld [vmem:[%s1 + $0x588] sm:$0xff]
  %v958 = vlaneseq
  %v959 = vshrl.u32 %v958, 7
  %v960 = vsub.s32 0, %v959
  %v961 = vrot.slane %v957, %v960
  %v962 = vmul.f32 %v961, %v956
  %v963 = vlaneseq
  %v964 = vshrl.u32 %v963, 7
  %v965 = vsub.s32 3, %v964
  %v966 = vrot.slane %v957, %v965
  %v967 = vadd.f32 %v966, %v962
  %968 = vrot.lane.b32.xlu0 %v956, 124
  %v969 = vpop.permute.xlu0 %968
  %v970 = vlaneseq
  %v971 = vshrl.u32 %v970, 7
  %v972 = vsub.s32 1, %v971
  %v973 = vrot.slane %v957, %v972
  %v974 = vmul.f32 %v973, %v969
  %v975 = vadd.f32 %v967, %v974
  %976 = vrot.lane.b32.xlu0 %v956, 120
  %v977 = vpop.permute.xlu0 %976
  %v978 = vlaneseq
  %v979 = vshrl.u32 %v978, 7
  %v980 = vsub.s32 2, %v979
  %v981 = vrot.slane %v957, %v980
  %v982 = vmul.f32 %v981, %v977
  %v983 = vadd.f32 %v975, %v982
  %vm984 = vcmp.ge.f32.partialorder %v983, 0.0
  %v985 = vmul.f32 %v983, 0.01
  %v986 = vsel %vm984, %v983, %v985
  %v987 = vlaneseq
  %v988 = vshrl.u32 %v987, 7
  %v989 = vsub.s32 4, %v988
  %v990 = vrot.slane %v957, %v989
  %v991 = vmul.f32 %v990, %v986
  %v992 = vadd.f32 %v956, %v991
  %v993 = vld [vmem:[%s1 + $0x5a0] sm:$0xff]
  %v994 = vlaneseq
  %v995 = vshrl.u32 %v994, 7
  %v996 = vsub.s32 0, %v995
  %v997 = vrot.slane %v993, %v996
  %v998 = vmul.f32 %v997, %v992
  %v999 = vlaneseq
  %v1000 = vshrl.u32 %v999, 7
  %v1001 = vsub.s32 3, %v1000
  %v1002 = vrot.slane %v993, %v1001
  %v1003 = vadd.f32 %v1002, %v998
  %1004 = vrot.lane.b32.xlu0 %v992, 120
  %v1005 = vpop.permute.xlu0 %1004
  %v1006 = vlaneseq
  %v1007 = vshrl.u32 %v1006, 7
  %v1008 = vsub.s32 1, %v1007
  %v1009 = vrot.slane %v993, %v1008
  %v1010 = vmul.f32 %v1009, %v1005
  %v1011 = vadd.f32 %v1003, %v1010
  %1012 = vrot.lane.b32.xlu0 %v992, 112
  %v1013 = vpop.permute.xlu0 %1012
  %v1014 = vlaneseq
  %v1015 = vshrl.u32 %v1014, 7
  %v1016 = vsub.s32 2, %v1015
  %v1017 = vrot.slane %v993, %v1016
  %v1018 = vmul.f32 %v1017, %v1013
  %v1019 = vadd.f32 %v1011, %v1018
  %vm1020 = vcmp.ge.f32.partialorder %v1019, 0.0
  %v1021 = vmul.f32 %v1019, 0.01
  %v1022 = vsel %vm1020, %v1019, %v1021
  %v1023 = vlaneseq
  %v1024 = vshrl.u32 %v1023, 7
  %v1025 = vsub.s32 4, %v1024
  %v1026 = vrot.slane %v993, %v1025
  %v1027 = vmul.f32 %v1026, %v1022
  %v1028 = vadd.f32 %v992, %v1027
  %v1029 = vld [vmem:[%s1 + $0x5b8] sm:$0xff]
  %v1030 = vlaneseq
  %v1031 = vshrl.u32 %v1030, 7
  %v1032 = vsub.s32 0, %v1031
  %v1033 = vrot.slane %v1029, %v1032
  %v1034 = vmul.f32 %v1033, %v1028
  %v1035 = vlaneseq
  %v1036 = vshrl.u32 %v1035, 7
  %v1037 = vsub.s32 3, %v1036
  %v1038 = vrot.slane %v1029, %v1037
  %v1039 = vadd.f32 %v1038, %v1034
  %1040 = vrot.lane.b32.xlu0 %v1028, 1
  %v1041 = vpop.permute.xlu0 %1040
  %v1042 = vlaneseq
  %v1043 = vshrl.u32 %v1042, 7
  %v1044 = vsub.s32 1, %v1043
  %v1045 = vrot.slane %v1029, %v1044
  %v1046 = vmul.f32 %v1045, %v1041
  %v1047 = vadd.f32 %v1039, %v1046
  %1048 = vrot.lane.b32.xlu0 %v1028, 2
  %v1049 = vpop.permute.xlu0 %1048
  %v1050 = vlaneseq
  %v1051 = vshrl.u32 %v1050, 7
  %v1052 = vsub.s32 2, %v1051
  %v1053 = vrot.slane %v1029, %v1052
  %v1054 = vmul.f32 %v1053, %v1049
  %v1055 = vadd.f32 %v1047, %v1054
  %vm1056 = vcmp.ge.f32.partialorder %v1055, 0.0
  %v1057 = vmul.f32 %v1055, 0.01
  %v1058 = vsel %vm1056, %v1055, %v1057
  %v1059 = vlaneseq
  %v1060 = vshrl.u32 %v1059, 7
  %v1061 = vsub.s32 4, %v1060
  %v1062 = vrot.slane %v1029, %v1061
  %v1063 = vmul.f32 %v1062, %v1058
  %v1064 = vadd.f32 %v1028, %v1063
  %v1065 = vld [vmem:[%s1 + $0x5d0] sm:$0xff]
  %v1066 = vlaneseq
  %v1067 = vshrl.u32 %v1066, 7
  %v1068 = vsub.s32 0, %v1067
  %v1069 = vrot.slane %v1065, %v1068
  %v1070 = vmul.f32 %v1069, %v1064
  %v1071 = vlaneseq
  %v1072 = vshrl.u32 %v1071, 7
  %v1073 = vsub.s32 3, %v1072
  %v1074 = vrot.slane %v1065, %v1073
  %v1075 = vadd.f32 %v1074, %v1070
  %1076 = vrot.lane.b32.xlu0 %v1064, 2
  %v1077 = vpop.permute.xlu0 %1076
  %v1078 = vlaneseq
  %v1079 = vshrl.u32 %v1078, 7
  %v1080 = vsub.s32 1, %v1079
  %v1081 = vrot.slane %v1065, %v1080
  %v1082 = vmul.f32 %v1081, %v1077
  %v1083 = vadd.f32 %v1075, %v1082
  %1084 = vrot.lane.b32.xlu0 %v1064, 4
  %v1085 = vpop.permute.xlu0 %1084
  %v1086 = vlaneseq
  %v1087 = vshrl.u32 %v1086, 7
  %v1088 = vsub.s32 2, %v1087
  %v1089 = vrot.slane %v1065, %v1088
  %v1090 = vmul.f32 %v1089, %v1085
  %v1091 = vadd.f32 %v1083, %v1090
  %vm1092 = vcmp.ge.f32.partialorder %v1091, 0.0
  %v1093 = vmul.f32 %v1091, 0.01
  %v1094 = vsel %vm1092, %v1091, %v1093
  %v1095 = vlaneseq
  %v1096 = vshrl.u32 %v1095, 7
  %v1097 = vsub.s32 4, %v1096
  %v1098 = vrot.slane %v1065, %v1097
  %v1099 = vmul.f32 %v1098, %v1094
  %v1100 = vadd.f32 %v1064, %v1099
  %v1101 = vld [vmem:[%s1 + $0x5e8] sm:$0xff]
  %v1102 = vlaneseq
  %v1103 = vshrl.u32 %v1102, 7
  %v1104 = vsub.s32 0, %v1103
  %v1105 = vrot.slane %v1101, %v1104
  %v1106 = vmul.f32 %v1105, %v1100
  %v1107 = vlaneseq
  %v1108 = vshrl.u32 %v1107, 7
  %v1109 = vsub.s32 3, %v1108
  %v1110 = vrot.slane %v1101, %v1109
  %v1111 = vadd.f32 %v1110, %v1106
  %1112 = vrot.lane.b32.xlu0 %v1100, 4
  %v1113 = vpop.permute.xlu0 %1112
  %v1114 = vlaneseq
  %v1115 = vshrl.u32 %v1114, 7
  %v1116 = vsub.s32 1, %v1115
  %v1117 = vrot.slane %v1101, %v1116
  %v1118 = vmul.f32 %v1117, %v1113
  %v1119 = vadd.f32 %v1111, %v1118
  %1120 = vrot.lane.b32.xlu0 %v1100, 8
  %v1121 = vpop.permute.xlu0 %1120
  %v1122 = vlaneseq
  %v1123 = vshrl.u32 %v1122, 7
  %v1124 = vsub.s32 2, %v1123
  %v1125 = vrot.slane %v1101, %v1124
  %v1126 = vmul.f32 %v1125, %v1121
  %v1127 = vadd.f32 %v1119, %v1126
  %vm1128 = vcmp.ge.f32.partialorder %v1127, 0.0
  %v1129 = vmul.f32 %v1127, 0.01
  %v1130 = vsel %vm1128, %v1127, %v1129
  %v1131 = vlaneseq
  %v1132 = vshrl.u32 %v1131, 7
  %v1133 = vsub.s32 4, %v1132
  %v1134 = vrot.slane %v1101, %v1133
  %v1135 = vmul.f32 %v1134, %v1130
  %v1136 = vadd.f32 %v1100, %v1135
  %v1137 = vld [vmem:[%s1 + $0x600] sm:$0xff]
  %v1138 = vlaneseq
  %v1139 = vshrl.u32 %v1138, 7
  %v1140 = vsub.s32 0, %v1139
  %v1141 = vrot.slane %v1137, %v1140
  %v1142 = vmul.f32 %v1141, %v1136
  %v1143 = vlaneseq
  %v1144 = vshrl.u32 %v1143, 7
  %v1145 = vsub.s32 3, %v1144
  %v1146 = vrot.slane %v1137, %v1145
  %v1147 = vadd.f32 %v1146, %v1142
  %1148 = vrot.lane.b32.xlu0 %v1136, 8
  %v1149 = vpop.permute.xlu0 %1148
  %v1150 = vlaneseq
  %v1151 = vshrl.u32 %v1150, 7
  %v1152 = vsub.s32 1, %v1151
  %v1153 = vrot.slane %v1137, %v1152
  %v1154 = vmul.f32 %v1153, %v1149
  %v1155 = vadd.f32 %v1147, %v1154
  %1156 = vrot.lane.b32.xlu0 %v1136, 16
  %v1157 = vpop.permute.xlu0 %1156
  %v1158 = vlaneseq
  %v1159 = vshrl.u32 %v1158, 7
  %v1160 = vsub.s32 2, %v1159
  %v1161 = vrot.slane %v1137, %v1160
  %v1162 = vmul.f32 %v1161, %v1157
  %v1163 = vadd.f32 %v1155, %v1162
  %vm1164 = vcmp.ge.f32.partialorder %v1163, 0.0
  %v1165 = vmul.f32 %v1163, 0.01
  %v1166 = vsel %vm1164, %v1163, %v1165
  %v1167 = vlaneseq
  %v1168 = vshrl.u32 %v1167, 7
  %v1169 = vsub.s32 4, %v1168
  %v1170 = vrot.slane %v1137, %v1169
  %v1171 = vmul.f32 %v1170, %v1166
  %v1172 = vadd.f32 %v1136, %v1171
  %v1173 = vld [vmem:[%s1 + $0x618] sm:$0xff]
  %v1174 = vlaneseq
  %v1175 = vshrl.u32 %v1174, 7
  %v1176 = vsub.s32 0, %v1175
  %v1177 = vrot.slane %v1173, %v1176
  %v1178 = vmul.f32 %v1177, %v1172
  %v1179 = vlaneseq
  %v1180 = vshrl.u32 %v1179, 7
  %v1181 = vsub.s32 3, %v1180
  %v1182 = vrot.slane %v1173, %v1181
  %v1183 = vadd.f32 %v1182, %v1178
  %1184 = vrot.lane.b32.xlu0 %v1172, 127
  %v1185 = vpop.permute.xlu0 %1184
  %v1186 = vlaneseq
  %v1187 = vshrl.u32 %v1186, 7
  %v1188 = vsub.s32 1, %v1187
  %v1189 = vrot.slane %v1173, %v1188
  %v1190 = vmul.f32 %v1189, %v1185
  %v1191 = vadd.f32 %v1183, %v1190
  %1192 = vrot.lane.b32.xlu0 %v1172, 126
  %v1193 = vpop.permute.xlu0 %1192
  %v1194 = vlaneseq
  %v1195 = vshrl.u32 %v1194, 7
  %v1196 = vsub.s32 2, %v1195
  %v1197 = vrot.slane %v1173, %v1196
  %v1198 = vmul.f32 %v1197, %v1193
  %v1199 = vadd.f32 %v1191, %v1198
  %vm1200 = vcmp.ge.f32.partialorder %v1199, 0.0
  %v1201 = vmul.f32 %v1199, 0.01
  %v1202 = vsel %vm1200, %v1199, %v1201
  %v1203 = vlaneseq
  %v1204 = vshrl.u32 %v1203, 7
  %v1205 = vsub.s32 4, %v1204
  %v1206 = vrot.slane %v1173, %v1205
  %v1207 = vmul.f32 %v1206, %v1202
  %v1208 = vadd.f32 %v1172, %v1207
  %v1209 = vld [vmem:[%s1 + $0x630] sm:$0xff]
  %v1210 = vlaneseq
  %v1211 = vshrl.u32 %v1210, 7
  %v1212 = vsub.s32 0, %v1211
  %v1213 = vrot.slane %v1209, %v1212
  %v1214 = vmul.f32 %v1213, %v1208
  %v1215 = vlaneseq
  %v1216 = vshrl.u32 %v1215, 7
  %v1217 = vsub.s32 3, %v1216
  %v1218 = vrot.slane %v1209, %v1217
  %v1219 = vadd.f32 %v1218, %v1214
  %1220 = vrot.lane.b32.xlu0 %v1208, 126
  %v1221 = vpop.permute.xlu0 %1220
  %v1222 = vlaneseq
  %v1223 = vshrl.u32 %v1222, 7
  %v1224 = vsub.s32 1, %v1223
  %v1225 = vrot.slane %v1209, %v1224
  %v1226 = vmul.f32 %v1225, %v1221
  %v1227 = vadd.f32 %v1219, %v1226
  %1228 = vrot.lane.b32.xlu0 %v1208, 124
  %v1229 = vpop.permute.xlu0 %1228
  %v1230 = vlaneseq
  %v1231 = vshrl.u32 %v1230, 7
  %v1232 = vsub.s32 2, %v1231
  %v1233 = vrot.slane %v1209, %v1232
  %v1234 = vmul.f32 %v1233, %v1229
  %v1235 = vadd.f32 %v1227, %v1234
  %vm1236 = vcmp.ge.f32.partialorder %v1235, 0.0
  %v1237 = vmul.f32 %v1235, 0.01
  %v1238 = vsel %vm1236, %v1235, %v1237
  %v1239 = vlaneseq
  %v1240 = vshrl.u32 %v1239, 7
  %v1241 = vsub.s32 4, %v1240
  %v1242 = vrot.slane %v1209, %v1241
  %v1243 = vmul.f32 %v1242, %v1238
  %v1244 = vadd.f32 %v1208, %v1243
  %v1245 = vld [vmem:[%s1 + $0x648] sm:$0xff]
  %v1246 = vlaneseq
  %v1247 = vshrl.u32 %v1246, 7
  %v1248 = vsub.s32 0, %v1247
  %v1249 = vrot.slane %v1245, %v1248
  %v1250 = vmul.f32 %v1249, %v1244
  %v1251 = vlaneseq
  %v1252 = vshrl.u32 %v1251, 7
  %v1253 = vsub.s32 3, %v1252
  %v1254 = vrot.slane %v1245, %v1253
  %v1255 = vadd.f32 %v1254, %v1250
  %1256 = vrot.lane.b32.xlu0 %v1244, 124
  %v1257 = vpop.permute.xlu0 %1256
  %v1258 = vlaneseq
  %v1259 = vshrl.u32 %v1258, 7
  %v1260 = vsub.s32 1, %v1259
  %v1261 = vrot.slane %v1245, %v1260
  %v1262 = vmul.f32 %v1261, %v1257
  %v1263 = vadd.f32 %v1255, %v1262
  %1264 = vrot.lane.b32.xlu0 %v1244, 120
  %v1265 = vpop.permute.xlu0 %1264
  %v1266 = vlaneseq
  %v1267 = vshrl.u32 %v1266, 7
  %v1268 = vsub.s32 2, %v1267
  %v1269 = vrot.slane %v1245, %v1268
  %v1270 = vmul.f32 %v1269, %v1265
  %v1271 = vadd.f32 %v1263, %v1270
  %vm1272 = vcmp.ge.f32.partialorder %v1271, 0.0
  %v1273 = vmul.f32 %v1271, 0.01
  %v1274 = vsel %vm1272, %v1271, %v1273
  %v1275 = vlaneseq
  %v1276 = vshrl.u32 %v1275, 7
  %v1277 = vsub.s32 4, %v1276
  %v1278 = vrot.slane %v1245, %v1277
  %v1279 = vmul.f32 %v1278, %v1274
  %v1280 = vadd.f32 %v1244, %v1279
  %v1281 = vld [vmem:[%s1 + $0x660] sm:$0xff]
  %v1282 = vlaneseq
  %v1283 = vshrl.u32 %v1282, 7
  %v1284 = vsub.s32 0, %v1283
  %v1285 = vrot.slane %v1281, %v1284
  %v1286 = vmul.f32 %v1285, %v1280
  %v1287 = vlaneseq
  %v1288 = vshrl.u32 %v1287, 7
  %v1289 = vsub.s32 3, %v1288
  %v1290 = vrot.slane %v1281, %v1289
  %v1291 = vadd.f32 %v1290, %v1286
  %1292 = vrot.lane.b32.xlu0 %v1280, 120
  %v1293 = vpop.permute.xlu0 %1292
  %v1294 = vlaneseq
  %v1295 = vshrl.u32 %v1294, 7
  %v1296 = vsub.s32 1, %v1295
  %v1297 = vrot.slane %v1281, %v1296
  %v1298 = vmul.f32 %v1297, %v1293
  %v1299 = vadd.f32 %v1291, %v1298
  %1300 = vrot.lane.b32.xlu0 %v1280, 112
  %v1301 = vpop.permute.xlu0 %1300
  %v1302 = vlaneseq
  %v1303 = vshrl.u32 %v1302, 7
  %v1304 = vsub.s32 2, %v1303
  %v1305 = vrot.slane %v1281, %v1304
  %v1306 = vmul.f32 %v1305, %v1301
  %v1307 = vadd.f32 %v1299, %v1306
  %vm1308 = vcmp.ge.f32.partialorder %v1307, 0.0
  %v1309 = vmul.f32 %v1307, 0.01
  %v1310 = vsel %vm1308, %v1307, %v1309
  %v1311 = vlaneseq
  %v1312 = vshrl.u32 %v1311, 7
  %v1313 = vsub.s32 4, %v1312
  %v1314 = vrot.slane %v1281, %v1313
  %v1315 = vmul.f32 %v1314, %v1310
  %v1316 = vadd.f32 %v1280, %v1315
  %v1317 = vld [vmem:[%s1 + $0x678] sm:$0xff]
  %v1318 = vlaneseq
  %v1319 = vshrl.u32 %v1318, 7
  %v1320 = vsub.s32 0, %v1319
  %v1321 = vrot.slane %v1317, %v1320
  %v1322 = vmul.f32 %v1321, %v1316
  %v1323 = vlaneseq
  %v1324 = vshrl.u32 %v1323, 7
  %v1325 = vsub.s32 3, %v1324
  %v1326 = vrot.slane %v1317, %v1325
  %v1327 = vadd.f32 %v1326, %v1322
  %1328 = vrot.lane.b32.xlu0 %v1316, 1
  %v1329 = vpop.permute.xlu0 %1328
  %v1330 = vlaneseq
  %v1331 = vshrl.u32 %v1330, 7
  %v1332 = vsub.s32 1, %v1331
  %v1333 = vrot.slane %v1317, %v1332
  %v1334 = vmul.f32 %v1333, %v1329
  %v1335 = vadd.f32 %v1327, %v1334
  %1336 = vrot.lane.b32.xlu0 %v1316, 2
  %v1337 = vpop.permute.xlu0 %1336
  %v1338 = vlaneseq
  %v1339 = vshrl.u32 %v1338, 7
  %v1340 = vsub.s32 2, %v1339
  %v1341 = vrot.slane %v1317, %v1340
  %v1342 = vmul.f32 %v1341, %v1337
  %v1343 = vadd.f32 %v1335, %v1342
  %vm1344 = vcmp.ge.f32.partialorder %v1343, 0.0
  %v1345 = vmul.f32 %v1343, 0.01
  %v1346 = vsel %vm1344, %v1343, %v1345
  %v1347 = vlaneseq
  %v1348 = vshrl.u32 %v1347, 7
  %v1349 = vsub.s32 4, %v1348
  %v1350 = vrot.slane %v1317, %v1349
  %v1351 = vmul.f32 %v1350, %v1346
  %v1352 = vadd.f32 %v1316, %v1351
  %v1353 = vld [vmem:[%s1 + $0x690] sm:$0xff]
  %v1354 = vlaneseq
  %v1355 = vshrl.u32 %v1354, 7
  %v1356 = vsub.s32 0, %v1355
  %v1357 = vrot.slane %v1353, %v1356
  %v1358 = vmul.f32 %v1357, %v1352
  %v1359 = vlaneseq
  %v1360 = vshrl.u32 %v1359, 7
  %v1361 = vsub.s32 3, %v1360
  %v1362 = vrot.slane %v1353, %v1361
  %v1363 = vadd.f32 %v1362, %v1358
  %1364 = vrot.lane.b32.xlu0 %v1352, 2
  %v1365 = vpop.permute.xlu0 %1364
  %v1366 = vlaneseq
  %v1367 = vshrl.u32 %v1366, 7
  %v1368 = vsub.s32 1, %v1367
  %v1369 = vrot.slane %v1353, %v1368
  %v1370 = vmul.f32 %v1369, %v1365
  %v1371 = vadd.f32 %v1363, %v1370
  %1372 = vrot.lane.b32.xlu0 %v1352, 4
  %v1373 = vpop.permute.xlu0 %1372
  %v1374 = vlaneseq
  %v1375 = vshrl.u32 %v1374, 7
  %v1376 = vsub.s32 2, %v1375
  %v1377 = vrot.slane %v1353, %v1376
  %v1378 = vmul.f32 %v1377, %v1373
  %v1379 = vadd.f32 %v1371, %v1378
  %vm1380 = vcmp.ge.f32.partialorder %v1379, 0.0
  %v1381 = vmul.f32 %v1379, 0.01
  %v1382 = vsel %vm1380, %v1379, %v1381
  %v1383 = vlaneseq
  %v1384 = vshrl.u32 %v1383, 7
  %v1385 = vsub.s32 4, %v1384
  %v1386 = vrot.slane %v1353, %v1385
  %v1387 = vmul.f32 %v1386, %v1382
  %v1388 = vadd.f32 %v1352, %v1387
  %v1389 = vld [vmem:[%s1 + $0x6a8] sm:$0xff]
  %v1390 = vlaneseq
  %v1391 = vshrl.u32 %v1390, 7
  %v1392 = vsub.s32 0, %v1391
  %v1393 = vrot.slane %v1389, %v1392
  %v1394 = vmul.f32 %v1393, %v1388
  %v1395 = vlaneseq
  %v1396 = vshrl.u32 %v1395, 7
  %v1397 = vsub.s32 3, %v1396
  %v1398 = vrot.slane %v1389, %v1397
  %v1399 = vadd.f32 %v1398, %v1394
  %1400 = vrot.lane.b32.xlu0 %v1388, 4
  %v1401 = vpop.permute.xlu0 %1400
  %v1402 = vlaneseq
  %v1403 = vshrl.u32 %v1402, 7
  %v1404 = vsub.s32 1, %v1403
  %v1405 = vrot.slane %v1389, %v1404
  %v1406 = vmul.f32 %v1405, %v1401
  %v1407 = vadd.f32 %v1399, %v1406
  %1408 = vrot.lane.b32.xlu0 %v1388, 8
  %v1409 = vpop.permute.xlu0 %1408
  %v1410 = vlaneseq
  %v1411 = vshrl.u32 %v1410, 7
  %v1412 = vsub.s32 2, %v1411
  %v1413 = vrot.slane %v1389, %v1412
  %v1414 = vmul.f32 %v1413, %v1409
  %v1415 = vadd.f32 %v1407, %v1414
  %vm1416 = vcmp.ge.f32.partialorder %v1415, 0.0
  %v1417 = vmul.f32 %v1415, 0.01
  %v1418 = vsel %vm1416, %v1415, %v1417
  %v1419 = vlaneseq
  %v1420 = vshrl.u32 %v1419, 7
  %v1421 = vsub.s32 4, %v1420
  %v1422 = vrot.slane %v1389, %v1421
  %v1423 = vmul.f32 %v1422, %v1418
  %v1424 = vadd.f32 %v1388, %v1423
  %v1425 = vld [vmem:[%s1 + $0x6c0] sm:$0xff]
  %v1426 = vlaneseq
  %v1427 = vshrl.u32 %v1426, 7
  %v1428 = vsub.s32 0, %v1427
  %v1429 = vrot.slane %v1425, %v1428
  %v1430 = vmul.f32 %v1429, %v1424
  %v1431 = vlaneseq
  %v1432 = vshrl.u32 %v1431, 7
  %v1433 = vsub.s32 3, %v1432
  %v1434 = vrot.slane %v1425, %v1433
  %v1435 = vadd.f32 %v1434, %v1430
  %1436 = vrot.lane.b32.xlu0 %v1424, 8
  %v1437 = vpop.permute.xlu0 %1436
  %v1438 = vlaneseq
  %v1439 = vshrl.u32 %v1438, 7
  %v1440 = vsub.s32 1, %v1439
  %v1441 = vrot.slane %v1425, %v1440
  %v1442 = vmul.f32 %v1441, %v1437
  %v1443 = vadd.f32 %v1435, %v1442
  %1444 = vrot.lane.b32.xlu0 %v1424, 16
  %v1445 = vpop.permute.xlu0 %1444
  %v1446 = vlaneseq
  %v1447 = vshrl.u32 %v1446, 7
  %v1448 = vsub.s32 2, %v1447
  %v1449 = vrot.slane %v1425, %v1448
  %v1450 = vmul.f32 %v1449, %v1445
  %v1451 = vadd.f32 %v1443, %v1450
  %vm1452 = vcmp.ge.f32.partialorder %v1451, 0.0
  %v1453 = vmul.f32 %v1451, 0.01
  %v1454 = vsel %vm1452, %v1451, %v1453
  %v1455 = vlaneseq
  %v1456 = vshrl.u32 %v1455, 7
  %v1457 = vsub.s32 4, %v1456
  %v1458 = vrot.slane %v1425, %v1457
  %v1459 = vmul.f32 %v1458, %v1454
  %v1460 = vadd.f32 %v1424, %v1459
  %v1461 = vld [vmem:[%s1 + $0x4c8] sm:$0xff]
  %v1462 = vlaneseq
  %v1463 = vshrl.u32 %v1462, 7
  %v1464 = vsub.s32 3, %v1463
  %v1465 = vrot.slane %v674, %v1464
  %1467 = vrot.lane.b32.xlu0 %v1460, 96
  %v1468 = vpop.permute.xlu0 %1467
  %vm1469 = vcmask 64512
  %v1470 = vsel %vm1469, %v1468, 0
  %1472 = vmatprep.subr.mxu0 0.0
  %1473 = vmatpush1.msra.mxu0 0.0
  %1474 = vmatprep.subr.mxu0 0.0
  %1475 = vmatpush1.msra.mxu0 0.0
  %1476 = vmatprep.subr.mxu0 0.0
  %1477 = vmatpush1.msra.mxu0 0.0
  %1478 = vmatprep.subr.mxu0 0.0
  %1479 = vmatpush1.msra.mxu0 0.0
  %1480 = vmatprep.subr.mxu0 0.0
  %1481 = vmatpush1.msra.mxu0 0.0
  %1482 = vmatprep.subr.mxu0 0.0
  %1483 = vmatpush1.msra.mxu0 0.0
  %1484 = vmatprep.subr.mxu0 0.0
  %1485 = vmatpush1.msra.mxu0 0.0
  %1486 = vmatprep.subr.mxu0 0.0
  %1487 = vmatpush1.msra.mxu0 0.0
  %1488 = vmatprep.subr.mxu0 0.0
  %1489 = vmatpush1.msra.mxu0 0.0
  %1490 = vmatprep.subr.mxu0 0.0
  %1491 = vmatpush1.msra.mxu0 0.0
  %1492 = vmatprep.subr.mxu0 0.0
  %1493 = vmatpush1.msra.mxu0 0.0
  %1494 = vmatprep.subr.mxu0 0.0
  %1495 = vmatpush1.msra.mxu0 0.0
  %1496 = vmatprep.subr.mxu0 0.0
  %1497 = vmatpush1.msra.mxu0 0.0
  %1498 = vmatprep.subr.mxu0 0.0
  %1499 = vmatpush1.msra.mxu0 0.0
  %1500 = vmatprep.subr.mxu0 0.0
  %1501 = vmatpush1.msra.mxu0 0.0
  %1502 = vmatprep.subr.mxu0 0.0
  %1503 = vmatpush1.msra.mxu0 %v1461
  %1504 = vmatprep.subr.mxu0 0.0
  %1505 = vmatpush2.msra.mxu0 0.0
  %1506 = vmatprep.subr.mxu0 0.0
  %1507 = vmatpush2.msra.mxu0 0.0
  %1508 = vmatprep.subr.mxu0 0.0
  %1509 = vmatpush2.msra.mxu0 0.0
  %1510 = vmatprep.subr.mxu0 0.0
  %1511 = vmatpush2.msra.mxu0 0.0
  %1512 = vmatprep.subr.mxu0 0.0
  %1513 = vmatpush2.msra.mxu0 0.0
  %1514 = vmatprep.subr.mxu0 0.0
  %1515 = vmatpush2.msra.mxu0 0.0
  %1516 = vmatprep.subr.mxu0 0.0
  %1517 = vmatpush2.msra.mxu0 0.0
  %1518 = vmatprep.subr.mxu0 0.0
  %1519 = vmatpush2.msra.mxu0 0.0
  %1520 = vmatprep.subr.mxu0 0.0
  %1521 = vmatpush2.msra.mxu0 0.0
  %1522 = vmatprep.subr.mxu0 0.0
  %1523 = vmatpush2.msra.mxu0 0.0
  %1524 = vmatprep.subr.mxu0 0.0
  %1525 = vmatpush2.msra.mxu0 0.0
  %1526 = vmatprep.subr.mxu0 0.0
  %1527 = vmatpush2.msra.mxu0 0.0
  %1528 = vmatprep.subr.mxu0 0.0
  %1529 = vmatpush2.msra.mxu0 0.0
  %1530 = vmatprep.subr.mxu0 0.0
  %1531 = vmatpush2.msra.mxu0 0.0
  %1532 = vmatprep.subr.mxu0 0.0
  %1533 = vmatpush2.msra.mxu0 0.0
  %1534 = vmatprep.subr.mxu0 0.0
  %1535 = vmatpush2.msra.mxu0 0.0
  %1536 = vmatprep.mubr.f32.mxu0 0.0
  %1537 = vmatmul.mubr.f32.gmra.mxu0 %v1470
  %v1538 = vpop.f32.mrf.mxu0
  %v1539 = vadd.f32 %v1465, %v1538
  %v1540 = vpop.f32.mrf.mxu0
  %1541 = vdwg.mxu0
  %v1542 = vmax.f32 %v1539, 0.0
  %v1543 = vld [vmem:[%s1 + $0x4e0] sm:$0xff]
  %v1544 = vld [vmem:[%s1 + $0x4e8] sm:$0xff]
  %v1545 = vld [vmem:[%s1 + $0x4f8] sm:$0xff]
  %v1546 = vld [vmem:[%s1 + $0x500] sm:$0xff]
  %v1547 = vld [vmem:[%s1 + $0x510] sm:$0xff]
  %v1548 = vld [vmem:[%s1 + $0x518] sm:$0xff]
  %v1549 = vld [vmem:[%s1 + $0x528] sm:$0xff]
  %v1550 = vld [vmem:[%s1 + $0x530] sm:$0xff]
  %v1551 = vlaneseq
  %v1552 = vshrl.u32 %v1551, 7
  %v1553 = vsub.s32 4, %v1552
  %v1554 = vrot.slane %v674, %v1553
  %v1555 = vlaneseq
  %v1556 = vshrl.u32 %v1555, 7
  %v1557 = vsub.s32 4, %v1556
  %v1558 = vrot.slane %v675, %v1557
  %v1560 = vsel %vm25, %v1542, 0
  %1562 = vmatprep.subr.mxu0 0.0
  %1563 = vmatpush1.msra.mxu0 0.0
  %1564 = vmatprep.subr.mxu0 0.0
  %1565 = vmatpush1.msra.mxu0 0.0
  %1566 = vmatprep.subr.mxu0 0.0
  %1567 = vmatpush1.msra.mxu0 0.0
  %1568 = vmatprep.subr.mxu0 0.0
  %1569 = vmatpush1.msra.mxu0 0.0
  %1570 = vmatprep.subr.mxu0 0.0
  %1571 = vmatpush1.msra.mxu0 0.0
  %1572 = vmatprep.subr.mxu0 0.0
  %1573 = vmatpush1.msra.mxu0 0.0
  %1574 = vmatprep.subr.mxu0 0.0
  %1575 = vmatpush1.msra.mxu0 0.0
  %1576 = vmatprep.subr.mxu0 0.0
  %1577 = vmatpush1.msra.mxu0 0.0
  %1578 = vmatprep.subr.mxu0 0.0
  %1579 = vmatpush1.msra.mxu0 0.0
  %1580 = vmatprep.subr.mxu0 0.0
  %1581 = vmatpush1.msra.mxu0 0.0
  %1582 = vmatprep.subr.mxu0 0.0
  %1583 = vmatpush1.msra.mxu0 0.0
  %1584 = vmatprep.subr.mxu0 0.0
  %1585 = vmatpush1.msra.mxu0 0.0
  %1586 = vmatprep.subr.mxu0 %v1550
  %1587 = vmatpush1.msra.mxu0 %v1549
  %1588 = vmatprep.subr.mxu0 %v1548
  %1589 = vmatpush1.msra.mxu0 %v1547
  %1590 = vmatprep.subr.mxu0 %v1546
  %1591 = vmatpush1.msra.mxu0 %v1545
  %1592 = vmatprep.subr.mxu0 %v1544
  %1593 = vmatpush1.msra.mxu0 %v1543
  %1594 = vmatprep.subr.mxu0 0.0
  %1595 = vmatpush2.msra.mxu0 0.0
  %1596 = vmatprep.subr.mxu0 0.0
  %1597 = vmatpush2.msra.mxu0 0.0
  %1598 = vmatprep.subr.mxu0 0.0
  %1599 = vmatpush2.msra.mxu0 0.0
  %1600 = vmatprep.subr.mxu0 0.0
  %1601 = vmatpush2.msra.mxu0 0.0
  %1602 = vmatprep.subr.mxu0 0.0
  %1603 = vmatpush2.msra.mxu0 0.0
  %1604 = vmatprep.subr.mxu0 0.0
  %1605 = vmatpush2.msra.mxu0 0.0
  %1606 = vmatprep.subr.mxu0 0.0
  %1607 = vmatpush2.msra.mxu0 0.0
  %1608 = vmatprep.subr.mxu0 0.0
  %1609 = vmatpush2.msra.mxu0 0.0
  %1610 = vmatprep.subr.mxu0 0.0
  %1611 = vmatpush2.msra.mxu0 0.0
  %1612 = vmatprep.subr.mxu0 0.0
  %1613 = vmatpush2.msra.mxu0 0.0
  %1614 = vmatprep.subr.mxu0 0.0
  %1615 = vmatpush2.msra.mxu0 0.0
  %1616 = vmatprep.subr.mxu0 0.0
  %1617 = vmatpush2.msra.mxu0 0.0
  %1618 = vmatprep.subr.mxu0 0.0
  %1619 = vmatpush2.msra.mxu0 0.0
  %1620 = vmatprep.subr.mxu0 0.0
  %1621 = vmatpush2.msra.mxu0 0.0
  %1622 = vmatprep.subr.mxu0 0.0
  %1623 = vmatpush2.msra.mxu0 0.0
  %1624 = vmatprep.subr.mxu0 0.0
  %1625 = vmatpush2.msra.mxu0 0.0
  %1626 = vmatprep.mubr.f32.mxu0 0.0
  %1627 = vmatmul.mubr.f32.gmra.mxu0 %v1560
  %v1628 = vpop.f32.mrf.mxu0
  %v1629 = vadd.f32 %v1554, %v1628
  %v1630 = vpop.f32.mrf.mxu0
  %v1631 = vadd.f32 %v1558, %v1630
  %1632 = vdwg.mxu0
  %v1633 = vmax.f32 %v1629, 0.0
  %v1634 = vmax.f32 %v1631, 0.0
  %v1636 = vrot.slane %v1633, 6
  %1637 = vrot.lane.b32.xlu0 %v1636, 108
  %v1638 = vpop.permute.xlu0 %1637
  %v1640 = vrot.slane %v1633, 4
  %1641 = vrot.lane.b32.xlu0 %v1640, 88
  %v1642 = vpop.permute.xlu0 %1641
  %v1644 = vrot.slane %v1633, 2
  %1645 = vrot.lane.b32.xlu0 %v1644, 68
  %v1646 = vpop.permute.xlu0 %1645
  %1648 = vrot.lane.b32.xlu0 %v1633, 48
  %v1649 = vpop.permute.xlu0 %1648
  %1651 = vrot.lane.b32.xlu0 %v1636, 28
  %v1652 = vpop.permute.xlu0 %1651
  %v1655 = vrot.slane %v1634, 4
  %1656 = vrot.lane.b32.xlu0 %v1640, 8
  %v1657 = vpop.permute.xlu0 %1656
  %1658 = vrot.lane.b32.xlu0 %v1655, 8
  %v1659 = vpop.permute.xlu0 %1658
  %v1660 = vsel %vm1469, %v1657, %v1659
  %v1662 = vrot.slane %v1634, 2
  %1663 = vrot.lane.b32.xlu0 %v1662, 116
  %v1664 = vpop.permute.xlu0 %1663
  %vm1666 = vcmask 1041408
  %v1667 = vsel %vm1666, %v1633, %v1638
  %vm1668 = vcmask 1043456
  %v1669 = vsel %vm1668, %v1667, %v1642
  %vm1670 = vcmask 1045504
  %v1671 = vsel %vm1670, %v1669, %v1646
  %v1672 = vsel %vm1666, %v1649, %v1652
  %v1673 = vsel %vm1668, %v1672, %v1660
  %v1674 = vsel %vm1670, %v1673, %v1664
  %1677 = vrot.lane.b32.xlu0 %v1671, 6
  %v1678 = vpop.permute.xlu0 %1677
  %1679 = vrot.lane.b32.xlu0 %v1674, 6
  %v1680 = vpop.permute.xlu0 %1679
  %vm1683 = vcmask 48128
  %v1684 = vsel %vm1683, 0.0, %v1678
  %v1685 = vsel %vm1683, 0.0, %v1680
  %vm1686 = vcmask 211968
  %v1687 = vsel %vm1686, %v1684, 0.0
  %v1688 = vsel %vm1686, %v1685, 0.0
  %1691 = vrot.lane.b32.xlu0 %v1687, 127
  %v1692 = vpop.permute.xlu0 %1691
  %1693 = vrot.lane.b32.xlu0 %v1688, 127
  %v1694 = vpop.permute.xlu0 %1693
  %1697 = vrot.lane.b32.xlu0 %v1687, 126
  %v1698 = vpop.permute.xlu0 %1697
  %1699 = vrot.lane.b32.xlu0 %v1688, 126
  %v1700 = vpop.permute.xlu0 %1699
  %1703 = vrot.lane.b32.xlu0 %v1687, 125
  %v1704 = vpop.permute.xlu0 %1703
  %1705 = vrot.lane.b32.xlu0 %v1688, 125
  %v1706 = vpop.permute.xlu0 %1705
  %1709 = vrot.lane.b32.xlu0 %v1687, 124
  %v1710 = vpop.permute.xlu0 %1709
  %1711 = vrot.lane.b32.xlu0 %v1688, 124
  %v1712 = vpop.permute.xlu0 %1711
  %1715 = vrot.lane.b32.xlu0 %v1687, 123
  %v1716 = vpop.permute.xlu0 %1715
  %1717 = vrot.lane.b32.xlu0 %v1688, 123
  %v1718 = vpop.permute.xlu0 %1717
  %1721 = vrot.lane.b32.xlu0 %v1687, 122
  %v1722 = vpop.permute.xlu0 %1721
  %1723 = vrot.lane.b32.xlu0 %v1688, 122
  %v1724 = vpop.permute.xlu0 %1723
  %v1727 = vld [vmem:[%s1 + $0x150] sm:$0xff]
  %v1728 = vld [vmem:[%s1 + $0x168] sm:$0xff]
  %v1729 = vld [vmem:[%s1 + $0x180] sm:$0xff]
  %v1730 = vld [vmem:[%s1 + $0x198] sm:$0xff]
  %v1732 = vsel %vm669, %v1727, 0
  %v1735 = vsel %vm669, %v1728, 0
  %v1738 = vsel %vm669, %v1729, 0
  %v1741 = vsel %vm669, %v1730, 0
  %1743 = vmatprep.subr.mxu0 0.0
  %1744 = vmatpush1.msra.mxu0 0.0
  %1745 = vmatprep.subr.mxu0 0.0
  %1746 = vmatpush1.msra.mxu0 %v12
  %1747 = vmatprep.subr.mxu0 0.0
  %1748 = vmatpush1.msra.mxu0 %v1724
  %1749 = vmatprep.subr.mxu0 0.0
  %1750 = vmatpush1.msra.mxu0 %v1722
  %1751 = vmatprep.subr.mxu0 0.0
  %1752 = vmatpush1.msra.mxu0 %v1718
  %1753 = vmatprep.subr.mxu0 0.0
  %1754 = vmatpush1.msra.mxu0 %v1716
  %1755 = vmatprep.subr.mxu0 0.0
  %1756 = vmatpush1.msra.mxu0 %v1712
  %1757 = vmatprep.subr.mxu0 0.0
  %1758 = vmatpush1.msra.mxu0 %v1710
  %1759 = vmatprep.subr.mxu0 0.0
  %1760 = vmatpush1.msra.mxu0 %v1706
  %1761 = vmatprep.subr.mxu0 0.0
  %1762 = vmatpush1.msra.mxu0 %v1704
  %1763 = vmatprep.subr.mxu0 0.0
  %1764 = vmatpush1.msra.mxu0 %v1700
  %1765 = vmatprep.subr.mxu0 0.0
  %1766 = vmatpush1.msra.mxu0 %v1698
  %1767 = vmatprep.subr.mxu0 0.0
  %1768 = vmatpush1.msra.mxu0 %v1694
  %1769 = vmatprep.subr.mxu0 0.0
  %1770 = vmatpush1.msra.mxu0 %v1692
  %1771 = vmatprep.subr.mxu0 0.0
  %1772 = vmatpush1.msra.mxu0 %v1688
  %1773 = vmatprep.subr.mxu0 0.0
  %1774 = vmatpush1.msra.mxu0 %v1687
  %1775 = vmatprep.subr.mxu0 0.0
  %1776 = vmatpush2.msra.mxu0 0.0
  %1777 = vmatprep.subr.mxu0 0.0
  %1778 = vmatpush2.msra.mxu0 0.0
  %1779 = vmatprep.subr.mxu0 0.0
  %1780 = vmatpush2.msra.mxu0 0.0
  %1781 = vmatprep.subr.mxu0 0.0
  %1782 = vmatpush2.msra.mxu0 0.0
  %1783 = vmatprep.subr.mxu0 0.0
  %1784 = vmatpush2.msra.mxu0 0.0
  %1785 = vmatprep.subr.mxu0 0.0
  %1786 = vmatpush2.msra.mxu0 0.0
  %1787 = vmatprep.subr.mxu0 0.0
  %1788 = vmatpush2.msra.mxu0 0.0
  %1789 = vmatprep.subr.mxu0 0.0
  %1790 = vmatpush2.msra.mxu0 0.0
  %1791 = vmatprep.subr.mxu0 0.0
  %1792 = vmatpush2.msra.mxu0 0.0
  %1793 = vmatprep.subr.mxu0 0.0
  %1794 = vmatpush2.msra.mxu0 0.0
  %1795 = vmatprep.subr.mxu0 0.0
  %1796 = vmatpush2.msra.mxu0 0.0
  %1797 = vmatprep.subr.mxu0 0.0
  %1798 = vmatpush2.msra.mxu0 0.0
  %1799 = vmatprep.subr.mxu0 0.0
  %1800 = vmatpush2.msra.mxu0 0.0
  %1801 = vmatprep.subr.mxu0 0.0
  %1802 = vmatpush2.msra.mxu0 0.0
  %1803 = vmatprep.subr.mxu0 0.0
  %1804 = vmatpush2.msra.mxu0 0.0
  %1805 = vmatprep.subr.mxu0 0.0
  %1806 = vmatpush2.msra.mxu0 0.0
  %1807 = vmatprep.mubr.f32.mxu0 0.0
  %1808 = vmatmul.mubr.f32.gmra.mxu0 %v1732
  %v1809 = vpop.f32.mrf.mxu0
  %v1810 = vadd.f32 0.0, %v1809
  %v1811 = vpop.f32.mrf.mxu0
  %1812 = vmatprep.mubr.f32.mxu0 0.0
  %1813 = vmatmul.mubr.f32.gmra.mxu0 %v1735
  %v1814 = vpop.f32.mrf.mxu0
  %v1815 = vadd.f32 0.0, %v1814
  %v1816 = vpop.f32.mrf.mxu0
  %1817 = vmatprep.mubr.f32.mxu0 0.0
  %1818 = vmatmul.mubr.f32.gmra.mxu0 %v1738
  %v1819 = vpop.f32.mrf.mxu0
  %v1820 = vadd.f32 0.0, %v1819
  %v1821 = vpop.f32.mrf.mxu0
  %1822 = vmatprep.mubr.f32.mxu0 0.0
  %1823 = vmatmul.mubr.f32.gmra.mxu0 %v1741
  %v1824 = vpop.f32.mrf.mxu0
  %v1825 = vadd.f32 0.0, %v1824
  %v1826 = vpop.f32.mrf.mxu0
  %1827 = vdwg.mxu0
  %v1828 = vmax.f32 %v1810, 0.0
  %v1829 = vmax.f32 %v1815, 0.0
  %v1830 = vmax.f32 %v1820, 0.0
  %v1831 = vmax.f32 %v1825, 0.0
  %1836 = vrot.lane.b32.xlu0 %v1828, 4
  %v1837 = vpop.permute.xlu0 %1836
  %1838 = vrot.lane.b32.xlu0 %v1829, 4
  %v1839 = vpop.permute.xlu0 %1838
  %1840 = vrot.lane.b32.xlu0 %v1830, 4
  %v1841 = vpop.permute.xlu0 %1840
  %1842 = vrot.lane.b32.xlu0 %v1831, 4
  %v1843 = vpop.permute.xlu0 %1842
  %vm1848 = vcmask 31744
  %v1849 = vsel %vm1848, 0.0, %v1837
  %v1850 = vsel %vm1848, 0.0, %v1839
  %v1851 = vsel %vm1848, 0.0, %v1841
  %v1852 = vsel %vm1848, 0.0, %v1843
  %vm1853 = vcmask 244736
  %v1854 = vsel %vm1853, %v1849, 0.0
  %v1855 = vsel %vm1853, %v1850, 0.0
  %v1856 = vsel %vm1853, %v1851, 0.0
  %v1857 = vsel %vm1853, %v1852, 0.0
  %1862 = vrot.lane.b32.xlu0 %v1854, 127
  %v1863 = vpop.permute.xlu0 %1862
  %1864 = vrot.lane.b32.xlu0 %v1855, 127
  %v1865 = vpop.permute.xlu0 %1864
  %1866 = vrot.lane.b32.xlu0 %v1856, 127
  %v1867 = vpop.permute.xlu0 %1866
  %1868 = vrot.lane.b32.xlu0 %v1857, 127
  %v1869 = vpop.permute.xlu0 %1868
  %1874 = vrot.lane.b32.xlu0 %v1854, 126
  %v1875 = vpop.permute.xlu0 %1874
  %1876 = vrot.lane.b32.xlu0 %v1855, 126
  %v1877 = vpop.permute.xlu0 %1876
  %1878 = vrot.lane.b32.xlu0 %v1856, 126
  %v1879 = vpop.permute.xlu0 %1878
  %1880 = vrot.lane.b32.xlu0 %v1857, 126
  %v1881 = vpop.permute.xlu0 %1880
  %1886 = vrot.lane.b32.xlu0 %v1854, 125
  %v1887 = vpop.permute.xlu0 %1886
  %1888 = vrot.lane.b32.xlu0 %v1855, 125
  %v1889 = vpop.permute.xlu0 %1888
  %1890 = vrot.lane.b32.xlu0 %v1856, 125
  %v1891 = vpop.permute.xlu0 %1890
  %1892 = vrot.lane.b32.xlu0 %v1857, 125
  %v1893 = vpop.permute.xlu0 %1892
  %1898 = vrot.lane.b32.xlu0 %v1854, 124
  %v1899 = vpop.permute.xlu0 %1898
  %1900 = vrot.lane.b32.xlu0 %v1855, 124
  %v1901 = vpop.permute.xlu0 %1900
  %1902 = vrot.lane.b32.xlu0 %v1856, 124
  %v1903 = vpop.permute.xlu0 %1902
  %1904 = vrot.lane.b32.xlu0 %v1857, 124
  %v1905 = vpop.permute.xlu0 %1904
  %v1910 = vld [vmem:[%s1 + $0x1b0] sm:$0xff]
  %v1911 = vld [vmem:[%s1 + $0x1b8] sm:$0xff]
  %v1912 = vld [vmem:[%s1 + $0x1c8] sm:$0xff]
  %v1913 = vld [vmem:[%s1 + $0x1d0] sm:$0xff]
  %v1914 = vld [vmem:[%s1 + $0x1e0] sm:$0xff]
  %v1915 = vld [vmem:[%s1 + $0x1e8] sm:$0xff]
  %v1916 = vld [vmem:[%s1 + $0x1f8] sm:$0xff]
  %v1917 = vld [vmem:[%s1 + $0x200] sm:$0xff]
  %v1918 = vld [vmem:[%s1 + $0x210] sm:$0xff]
  %v1919 = vld [vmem:[%s1 + $0x218] sm:$0xff]
  %v1920 = vld [vmem:[%s1 + $0x228] sm:$0xff]
  %v1921 = vld [vmem:[%s1 + $0x230] sm:$0xff]
  %v1922 = vld [vmem:[%s1 + $0x240] sm:$0xff]
  %v1923 = vld [vmem:[%s1 + $0x248] sm:$0xff]
  %v1924 = vld [vmem:[%s1 + $0x258] sm:$0xff]
  %v1925 = vld [vmem:[%s1 + $0x260] sm:$0xff]
  %v1927 = vsel %vm661, %v1911, 0
  %v1930 = vsel %vm661, %v1913, 0
  %v1933 = vsel %vm661, %v1915, 0
  %v1936 = vsel %vm661, %v1917, 0
  %v1939 = vsel %vm661, %v1919, 0
  %v1942 = vsel %vm661, %v1921, 0
  %v1945 = vsel %vm661, %v1923, 0
  %v1948 = vsel %vm661, %v1925, 0
  %1950 = vmatprep.subr.mxu0 0.0
  %1951 = vmatpush1.msra.mxu0 %v1893
  %1952 = vmatprep.subr.mxu0 0.0
  %1953 = vmatpush1.msra.mxu0 %v1891
  %1954 = vmatprep.subr.mxu0 0.0
  %1955 = vmatpush1.msra.mxu0 %v1889
  %1956 = vmatprep.subr.mxu0 0.0
  %1957 = vmatpush1.msra.mxu0 %v1887
  %1958 = vmatprep.subr.mxu0 0.0
  %1959 = vmatpush1.msra.mxu0 %v1881
  %1960 = vmatprep.subr.mxu0 0.0
  %1961 = vmatpush1.msra.mxu0 %v1879
  %1962 = vmatprep.subr.mxu0 0.0
  %1963 = vmatpush1.msra.mxu0 %v1877
  %1964 = vmatprep.subr.mxu0 0.0
  %1965 = vmatpush1.msra.mxu0 %v1875
  %1966 = vmatprep.subr.mxu0 0.0
  %1967 = vmatpush1.msra.mxu0 %v1869
  %1968 = vmatprep.subr.mxu0 0.0
  %1969 = vmatpush1.msra.mxu0 %v1867
  %1970 = vmatprep.subr.mxu0 0.0
  %1971 = vmatpush1.msra.mxu0 %v1865
  %1972 = vmatprep.subr.mxu0 0.0
  %1973 = vmatpush1.msra.mxu0 %v1863
  %1974 = vmatprep.subr.mxu0 0.0
  %1975 = vmatpush1.msra.mxu0 %v1857
  %1976 = vmatprep.subr.mxu0 0.0
  %1977 = vmatpush1.msra.mxu0 %v1856
  %1978 = vmatprep.subr.mxu0 0.0
  %1979 = vmatpush1.msra.mxu0 %v1855
  %1980 = vmatprep.subr.mxu0 0.0
  %1981 = vmatpush1.msra.mxu0 %v1854
  %1982 = vmatprep.subr.mxu0 0.0
  %1983 = vmatpush2.msra.mxu0 0.0
  %1984 = vmatprep.subr.mxu0 0.0
  %1985 = vmatpush2.msra.mxu0 0.0
  %1986 = vmatprep.subr.mxu0 0.0
  %1987 = vmatpush2.msra.mxu0 0.0
  %1988 = vmatprep.subr.mxu0 0.0
  %1989 = vmatpush2.msra.mxu0 0.0
  %1990 = vmatprep.subr.mxu0 0.0
  %1991 = vmatpush2.msra.mxu0 0.0
  %1992 = vmatprep.subr.mxu0 0.0
  %1993 = vmatpush2.msra.mxu0 0.0
  %1994 = vmatprep.subr.mxu0 0.0
  %1995 = vmatpush2.msra.mxu0 0.0
  %1996 = vmatprep.subr.mxu0 0.0
  %1997 = vmatpush2.msra.mxu0 0.0
  %1998 = vmatprep.subr.mxu0 0.0
  %1999 = vmatpush2.msra.mxu0 0.0
  %2000 = vmatprep.subr.mxu0 0.0
  %2001 = vmatpush2.msra.mxu0 0.0
  %2002 = vmatprep.subr.mxu0 0.0
  %2003 = vmatpush2.msra.mxu0 0.0
  %2004 = vmatprep.subr.mxu0 0.0
  %2005 = vmatpush2.msra.mxu0 %v12
  %2006 = vmatprep.subr.mxu0 0.0
  %2007 = vmatpush2.msra.mxu0 %v1905
  %2008 = vmatprep.subr.mxu0 0.0
  %2009 = vmatpush2.msra.mxu0 %v1903
  %2010 = vmatprep.subr.mxu0 0.0
  %2011 = vmatpush2.msra.mxu0 %v1901
  %2012 = vmatprep.subr.mxu0 0.0
  %2013 = vmatpush2.msra.mxu0 %v1899
  %2014 = vmatprep.mubr.f32.mxu0 %v1927
  %2015 = vmatmul.mubr.f32.gmra.mxu0 %v1910
  %v2016 = vpop.f32.mrf.mxu0
  %v2017 = vadd.f32 0.0, %v2016
  %v2018 = vpop.f32.mrf.mxu0
  %2019 = vmatprep.mubr.f32.mxu0 %v1930
  %2020 = vmatmul.mubr.f32.gmra.mxu0 %v1912
  %v2021 = vpop.f32.mrf.mxu0
  %v2022 = vadd.f32 0.0, %v2021
  %v2023 = vpop.f32.mrf.mxu0
  %2024 = vmatprep.mubr.f32.mxu0 %v1933
  %2025 = vmatmul.mubr.f32.gmra.mxu0 %v1914
  %v2026 = vpop.f32.mrf.mxu0
  %v2027 = vadd.f32 0.0, %v2026
  %v2028 = vpop.f32.mrf.mxu0
  %2029 = vmatprep.mubr.f32.mxu0 %v1936
  %2030 = vmatmul.mubr.f32.gmra.mxu0 %v1916
  %v2031 = vpop.f32.mrf.mxu0
  %v2032 = vadd.f32 0.0, %v2031
  %v2033 = vpop.f32.mrf.mxu0
  %2034 = vmatprep.mubr.f32.mxu0 %v1939
  %2035 = vmatmul.mubr.f32.gmra.mxu0 %v1918
  %v2036 = vpop.f32.mrf.mxu0
  %v2037 = vadd.f32 0.0, %v2036
  %v2038 = vpop.f32.mrf.mxu0
  %2039 = vmatprep.mubr.f32.mxu0 %v1942
  %2040 = vmatmul.mubr.f32.gmra.mxu0 %v1920
  %v2041 = vpop.f32.mrf.mxu0
  %v2042 = vadd.f32 0.0, %v2041
  %v2043 = vpop.f32.mrf.mxu0
  %2044 = vmatprep.mubr.f32.mxu0 %v1945
  %2045 = vmatmul.mubr.f32.gmra.mxu0 %v1922
  %v2046 = vpop.f32.mrf.mxu0
  %v2047 = vadd.f32 0.0, %v2046
  %v2048 = vpop.f32.mrf.mxu0
  %2049 = vmatprep.mubr.f32.mxu0 %v1948
  %2050 = vmatmul.mubr.f32.gmra.mxu0 %v1924
  %v2051 = vpop.f32.mrf.mxu0
  %v2052 = vadd.f32 0.0, %v2051
  %v2053 = vpop.f32.mrf.mxu0
  %2054 = vdwg.mxu0
  %v2055 = vmax.f32 %v2017, 0.0
  %v2056 = vmax.f32 %v2022, 0.0
  %v2057 = vmax.f32 %v2027, 0.0
  %v2058 = vmax.f32 %v2032, 0.0
  %v2059 = vmax.f32 %v2037, 0.0
  %v2060 = vmax.f32 %v2042, 0.0
  %v2061 = vmax.f32 %v2047, 0.0
  %v2062 = vmax.f32 %v2052, 0.0
  %2071 = vrot.lane.b32.xlu0 %v2055, 2
  %v2072 = vpop.permute.xlu0 %2071
  %2073 = vrot.lane.b32.xlu0 %v2056, 2
  %v2074 = vpop.permute.xlu0 %2073
  %2075 = vrot.lane.b32.xlu0 %v2057, 2
  %v2076 = vpop.permute.xlu0 %2075
  %2077 = vrot.lane.b32.xlu0 %v2058, 2
  %v2078 = vpop.permute.xlu0 %2077
  %2079 = vrot.lane.b32.xlu0 %v2059, 2
  %v2080 = vpop.permute.xlu0 %2079
  %2081 = vrot.lane.b32.xlu0 %v2060, 2
  %v2082 = vpop.permute.xlu0 %2081
  %2083 = vrot.lane.b32.xlu0 %v2061, 2
  %v2084 = vpop.permute.xlu0 %2083
  %2085 = vrot.lane.b32.xlu0 %v2062, 2
  %v2086 = vpop.permute.xlu0 %2085
  %vm2095 = vcmask 15360
  %v2096 = vsel %vm2095, 0.0, %v2072
  %v2097 = vsel %vm2095, 0.0, %v2074
  %v2098 = vsel %vm2095, 0.0, %v2076
  %v2099 = vsel %vm2095, 0.0, %v2078
  %v2100 = vsel %vm2095, 0.0, %v2080
  %v2101 = vsel %vm2095, 0.0, %v2082
  %v2102 = vsel %vm2095, 0.0, %v2084
  %v2103 = vsel %vm2095, 0.0, %v2086
  %v2104 = vsel %vm25, %v2096, 0.0
  %v2105 = vsel %vm25, %v2097, 0.0
  %v2106 = vsel %vm25, %v2098, 0.0
  %v2107 = vsel %vm25, %v2099, 0.0
  %v2108 = vsel %vm25, %v2100, 0.0
  %v2109 = vsel %vm25, %v2101, 0.0
  %v2110 = vsel %vm25, %v2102, 0.0
  %v2111 = vsel %vm25, %v2103, 0.0
  %2120 = vrot.lane.b32.xlu0 %v2104, 127
  %v2121 = vpop.permute.xlu0 %2120
  %2122 = vrot.lane.b32.xlu0 %v2105, 127
  %v2123 = vpop.permute.xlu0 %2122
  %2124 = vrot.lane.b32.xlu0 %v2106, 127
  %v2125 = vpop.permute.xlu0 %2124
  %2126 = vrot.lane.b32.xlu0 %v2107, 127
  %v2127 = vpop.permute.xlu0 %2126
  %2128 = vrot.lane.b32.xlu0 %v2108, 127
  %v2129 = vpop.permute.xlu0 %2128
  %2130 = vrot.lane.b32.xlu0 %v2109, 127
  %v2131 = vpop.permute.xlu0 %2130
  %2132 = vrot.lane.b32.xlu0 %v2110, 127
  %v2133 = vpop.permute.xlu0 %2132
  %2134 = vrot.lane.b32.xlu0 %v2111, 127
  %v2135 = vpop.permute.xlu0 %2134
  %2144 = vrot.lane.b32.xlu0 %v2104, 126
  %v2145 = vpop.permute.xlu0 %2144
  %2146 = vrot.lane.b32.xlu0 %v2105, 126
  %v2147 = vpop.permute.xlu0 %2146
  %2148 = vrot.lane.b32.xlu0 %v2106, 126
  %v2149 = vpop.permute.xlu0 %2148
  %2150 = vrot.lane.b32.xlu0 %v2107, 126
  %v2151 = vpop.permute.xlu0 %2150
  %2152 = vrot.lane.b32.xlu0 %v2108, 126
  %v2153 = vpop.permute.xlu0 %2152
  %2154 = vrot.lane.b32.xlu0 %v2109, 126
  %v2155 = vpop.permute.xlu0 %2154
  %2156 = vrot.lane.b32.xlu0 %v2110, 126
  %v2157 = vpop.permute.xlu0 %2156
  %2158 = vrot.lane.b32.xlu0 %v2111, 126
  %v2159 = vpop.permute.xlu0 %2158
  %v2168 = vld [vmem:[%s1 + $0x270] sm:$0xff]
  %v2169 = vld [vmem:[%s1 + $0x278] sm:$0xff]
  %v2171 = vsel %vm279, %v2169, 0
  %2173 = vmatprep.subr.mxu0 0.0
  %2174 = vmatpush1.msra.mxu0 %v2135
  %2175 = vmatprep.subr.mxu0 0.0
  %2176 = vmatpush1.msra.mxu0 %v2133
  %2177 = vmatprep.subr.mxu0 0.0
  %2178 = vmatpush1.msra.mxu0 %v2131
  %2179 = vmatprep.subr.mxu0 0.0
  %2180 = vmatpush1.msra.mxu0 %v2129
  %2181 = vmatprep.subr.mxu0 0.0
  %2182 = vmatpush1.msra.mxu0 %v2127
  %2183 = vmatprep.subr.mxu0 0.0
  %2184 = vmatpush1.msra.mxu0 %v2125
  %2185 = vmatprep.subr.mxu0 0.0
  %2186 = vmatpush1.msra.mxu0 %v2123
  %2187 = vmatprep.subr.mxu0 0.0
  %2188 = vmatpush1.msra.mxu0 %v2121
  %2189 = vmatprep.subr.mxu0 0.0
  %2190 = vmatpush1.msra.mxu0 %v2111
  %2191 = vmatprep.subr.mxu0 0.0
  %2192 = vmatpush1.msra.mxu0 %v2110
  %2193 = vmatprep.subr.mxu0 0.0
  %2194 = vmatpush1.msra.mxu0 %v2109
  %2195 = vmatprep.subr.mxu0 0.0
  %2196 = vmatpush1.msra.mxu0 %v2108
  %2197 = vmatprep.subr.mxu0 0.0
  %2198 = vmatpush1.msra.mxu0 %v2107
  %2199 = vmatprep.subr.mxu0 0.0
  %2200 = vmatpush1.msra.mxu0 %v2106
  %2201 = vmatprep.subr.mxu0 0.0
  %2202 = vmatpush1.msra.mxu0 %v2105
  %2203 = vmatprep.subr.mxu0 0.0
  %2204 = vmatpush1.msra.mxu0 %v2104
  %2205 = vmatprep.subr.mxu0 0.0
  %2206 = vmatpush2.msra.mxu0 0.0
  %2207 = vmatprep.subr.mxu0 0.0
  %2208 = vmatpush2.msra.mxu0 0.0
  %2209 = vmatprep.subr.mxu0 0.0
  %2210 = vmatpush2.msra.mxu0 0.0
  %2211 = vmatprep.subr.mxu0 0.0
  %2212 = vmatpush2.msra.mxu0 0.0
  %2213 = vmatprep.subr.mxu0 0.0
  %2214 = vmatpush2.msra.mxu0 0.0
  %2215 = vmatprep.subr.mxu0 0.0
  %2216 = vmatpush2.msra.mxu0 0.0
  %2217 = vmatprep.subr.mxu0 0.0
  %2218 = vmatpush2.msra.mxu0 0.0
  %2219 = vmatprep.subr.mxu0 0.0
  %2220 = vmatpush2.msra.mxu0 %v12
  %2221 = vmatprep.subr.mxu0 0.0
  %2222 = vmatpush2.msra.mxu0 %v2159
  %2223 = vmatprep.subr.mxu0 0.0
  %2224 = vmatpush2.msra.mxu0 %v2157
  %2225 = vmatprep.subr.mxu0 0.0
  %2226 = vmatpush2.msra.mxu0 %v2155
  %2227 = vmatprep.subr.mxu0 0.0
  %2228 = vmatpush2.msra.mxu0 %v2153
  %2229 = vmatprep.subr.mxu0 0.0
  %2230 = vmatpush2.msra.mxu0 %v2151
  %2231 = vmatprep.subr.mxu0 0.0
  %2232 = vmatpush2.msra.mxu0 %v2149
  %2233 = vmatprep.subr.mxu0 0.0
  %2234 = vmatpush2.msra.mxu0 %v2147
  %2235 = vmatprep.subr.mxu0 0.0
  %2236 = vmatpush2.msra.mxu0 %v2145
  %2237 = vmatprep.mubr.f32.mxu0 %v2171
  %2238 = vmatmul.mubr.f32.gmra.mxu0 %v2168
  %v2239 = vpop.f32.mrf.mxu0
  %v2240 = vadd.f32 0.0, %v2239
  %v2241 = vpop.f32.mrf.mxu0
  %2242 = vdwg.mxu0
  %2243 = vrot.lane.b32.xlu0 %v878, 16
  %v2244 = vpop.permute.xlu0 %2243
  %2246 = vrot.lane.b32.xlu0 %v1460, 120
  %v2247 = vpop.permute.xlu0 %2246
  %vm2249 = vcmask 130048
  %v2250 = vsel %vm2249, %v863, %v2244
  %vm2251 = vcmask 195584
  %v2252 = vsel %vm2251, %v2250, %v2247
  %v2253 = vsel %vm1666, %v2252, 0.0
  %2255 = vrot.lane.b32.xlu0 %v2253, 32
  %v2256 = vpop.permute.xlu0 %2255
  %v2258 = vsel %vm25, %v2240, %v2256
  %vm2259 = vcmask 523264
  %v2260 = vsel %vm2259, %v2258, 0.0
  %2261 = vst [vmem:[%s2] sm:$0xff] %v2260
  // Predicated region
  $region10: #{conv_flow_vae_forward.1} parent=0 // pred_check
    _
  $region11: #{conv_flow_vae_forward.1} parent=0 // pred_check_branch
    %2263 = sbr.rel (0) target = $region13
  $region12: #{conv_flow_vae_forward.1} parent=0 // pred_region
    _
  $region13: #{conv_flow_vae_forward.1} parent=0 // pred_fallthru
    _
  // Predicated region
  $region14: #{conv_flow_vae_forward.1} parent=0 // pred_check
    _
  $region15: #{conv_flow_vae_forward.1} parent=0 // pred_check_branch
    %2265 = sbr.rel (0) target = $region17
  $region16: #{conv_flow_vae_forward.1} parent=0 // pred_region
    _
  $region17: #{conv_flow_vae_forward.1} parent=0 // pred_fallthru
    _

</llo_original>
